<compile_context>
chip_gen: v5e
topology: v5e:2x2
jax: 0.10.0
libtpu: 0.0.40
codegen_flags: <defaults>
</compile_context>

<pallas_src>
import numpy as np
import jax
import jax.numpy as jnp
from jax.experimental import pallas as pl
from jax.experimental.pallas import tpu as pltpu


# ----------------------------------------------------------------------------
# Pallas kernel.   grid = (batch, token_tile)   -- both axes "parallel".
# ----------------------------------------------------------------------------
def _patch_sensor_kernel(img_ref, wx_ref, wy_ref, wp_ref, ln_ref, o_ref,
                         feat_ref):
    # img_ref  : (1, C*H, W)        image, native NCHW flattened over (C,H), bf16
    # wx_ref   : (1, W, P2*nt)      column (x) interp factors, col = p*nt + t, bf16
    # wy_ref   : (1, P2, H, nt)     row (y) interp factors, f32
    # wp_ref   : (P2*C*H, D)        projection weight with the H-sum folded in, bf16
    # ln_ref   : (3, D)             [bias; gamma; beta], f32
    # o_ref    : (1, nt, D)         output tokens for this (batch, token tile)
    # feat_ref : (P2*C*H, nt) bf16  VMEM staging buffer for the projection LHS
    p2 = wy_ref.shape[1]
    h = wy_ref.shape[2]
    nt = wy_ref.shape[3]
    c = img_ref.shape[1] // h
    ch = c * h

    # (1) x-interpolation: one wide MXU matmul over ALL P2 sample points.
    img = img_ref[0]                                       # [C*H, W]      bf16
    wx = wx_ref[0]                                         # [W, P2*nt]    bf16
    colmix = jnp.dot(img, wx,
                     preferred_element_type=jnp.float32)   # [C*H, P2*nt]  f32

    # (2) y-interpolation factor, applied per sample point.  The sum over H is
    #     deferred into the projection matmul (wp is replicated over H), so
    #     this unrolled loop is pure VPU multiply + bf16 cast + aligned stores.
    #     All slices are lane-tile aligned; all reshapes are leading-dim
    #     splits/merges (layout-free since H % 8 == 0 and C*H % 16 == 0).
    for p in range(p2):                                    # P2 is small & static
        blk = colmix[:, p * nt:(p + 1) * nt]               # [C*H, nt] f32
        wyp = wy_ref[0, p]                                 # [H, nt]   f32
        weighted = (blk.reshape(c, h, nt) * wyp).reshape(ch, nt)
        feat_ref[pl.ds(p * ch, ch), :] = weighted.astype(jnp.bfloat16)

    # (3) single projection matmul: contract K = P2*C*H, bf16 x bf16 -> f32.
    proj = jax.lax.dot_general(
        feat_ref[...], wp_ref[...],
        dimension_numbers=(((0,), (0,)), ((), ())),        # contract rows
        preferred_element_type=jnp.float32)                # [nt, D]

    # (4) bias + LayerNorm (all f32) + store (lane-dense, D = 128).
    lnp = ln_ref[...]                                      # [3, D]
    pre = proj + lnp[0:1, :]
    mean = jnp.mean(pre, axis=-1, keepdims=True)
    cent = pre - mean
    var = jnp.mean(cent * cent, axis=-1, keepdims=True)
    normed = cent * jax.lax.rsqrt(var + 1e-5)
    o_ref[0] = (normed * lnp[1:2, :] + lnp[2:3, :]).astype(o_ref.dtype)


# ----------------------------------------------------------------------------
# Module wrapper (parameter construction + glue).
# ----------------------------------------------------------------------------
class PatchSensorPallas:
    def __init__(self, tessellation, patch_size, in_channels, out_channels,
                 patch_scaling=0.5, key=None):
        tess = np.asarray(tessellation, dtype=np.float64)            # [N, 2]
        n_patches = tess.shape[0]

        # KDTree(tess).query(tess, k=3)[0][:, 1:3].mean(-1) via brute force.
        pd = np.sqrt(((tess[:, None, :] - tess[None, :, :]) ** 2).sum(-1))
        dists = np.sort(pd, axis=1)[:, 1:3].mean(axis=1)             # [N]

        xs = np.linspace(-1.0, 1.0, patch_size)
        gx, gy = np.meshgrid(xs, xs, indexing="xy")
        grid = np.stack([gx, gy], axis=-1)                           # [ps, ps, 2]
        scaled = dists[:, None, None, None] * grid[None] * patch_scaling
        shifted = scaled + tess[:, None, None, :]                    # [N, ps, ps, 2]
        # rearrange 'patches h w coord -> (h w) patches coord'
        skern = shifted.transpose(1, 2, 0, 3).reshape(patch_size * patch_size,
                                                      n_patches, 2)
        self.sampling_kernels = jnp.asarray(skern, dtype=jnp.float32)  # [P2, N, 2]

        # deterministic synthetic parameters (nn.Linear / nn.LayerNorm shapes)
        if key is None:
            key = jax.random.PRNGKey(42)
        kw, kb = jax.random.split(key)
        fan_in = in_channels * patch_size ** 2
        bound = 1.0 / np.sqrt(fan_in)
        self.w = jax.random.uniform(kw, (out_channels, fan_in), jnp.float32,
                                    -bound, bound)                   # [D, C*P2]
        self.b = jax.random.uniform(kb, (out_channels,), jnp.float32,
                                    -bound, bound)                   # [D]
        self.gamma = jnp.ones((out_channels,), jnp.float32)
        self.beta = jnp.zeros((out_channels,), jnp.float32)

        self.patch_size = patch_size
        self.in_channels = in_channels
        self.out_channels = out_channels
        self.n_patches = n_patches

    # Separable bilinear factors (exact grid_sample(bilinear, zeros,
    # align_corners=False) semantics; out-of-range corners contribute zero).
    def _separable_factors(self, batch, h, w, fixations):
        p2, n = self.sampling_kernels.shape[:2]
        coords = jnp.broadcast_to(self.sampling_kernels[None],
                                  (batch, p2, n, 2))                 # [B, P2, N, 2]
        if fixations is not None:
            coords = coords + fixations[:, None, None, :].astype(jnp.float32)
        gx = coords[..., 0]
        gy = coords[..., 1]
        ix = ((gx + 1.0) * w - 1.0) * 0.5                            # align_corners=False
        iy = ((gy + 1.0) * h - 1.0) * 0.5

        def one_axis_factor(pos, size):
            i0 = jnp.floor(pos)
            w1 = pos - i0
            w0 = 1.0 - w1
            i0 = i0.astype(jnp.int32)
            i1 = i0 + 1
            ar = jnp.arange(size, dtype=jnp.int32)[None, None, :, None]   # [1,1,size,1]
            return ((ar == i0[:, :, None, :]).astype(jnp.float32) * w0[:, :, None, :]
                    + (ar == i1[:, :, None, :]).astype(jnp.float32) * w1[:, :, None, :])

        wx_f = one_axis_factor(ix, w).astype(jnp.bfloat16)           # [B, P2, W, N] bf16 (MXU)
        wy_f = one_axis_factor(iy, h)                                # [B, P2, H, N] f32  (VPU)
        return wx_f, wy_f

    def __call__(self, x, fixations=None):
        # x: [B, C, H, W] (NCHW, same as the PyTorch module)
        b, c, h, w = x.shape
        assert c == self.in_channels
        assert h % 8 == 0, "H must be a multiple of 8 for layout-free reshapes"
        p2 = self.patch_size ** 2
        n = self.n_patches
        d = self.out_channels

        nt = 128                                   # lane-dense token tile
        n_pad = ((n + nt - 1) // nt) * nt          # pad tokens to a multiple of 128
        n_tiles = n_pad // nt

        img = x.reshape(b, c * h, w).astype(jnp.bfloat16)            # native NCHW

        wx_f, wy_f = self._separable_factors(b, h, w, fixations)
        if n_pad != n:
            wx_f = jnp.pad(wx_f, ((0, 0), (0, 0), (0, 0), (0, n_pad - n)))
            wy_f = jnp.pad(wy_f, ((0, 0), (0, 0), (0, 0), (0, n_pad - n)))

        # Wx laid out so each (batch, token-tile) block is one contiguous
        # last-dim slab with column index = p*nt + t_local.
        wx_all = jnp.transpose(
            wx_f.reshape(b, p2, w, n_tiles, nt), (0, 2, 3, 1, 4)
        ).reshape(b, w, n_tiles * p2 * nt)                           # [B, W, T*P2*nt] bf16

        # Projection weight with the row-interpolation (H) sum folded into K:
        #   wp_full[(p, c, hh), d] = w[d, c*P2 + p]   (replicated over hh).
        wt = self.w.T.reshape(c, p2, d)                              # [C, P2, D]
        wp_full = jnp.broadcast_to(
            jnp.transpose(wt, (1, 0, 2))[:, :, None, :], (p2, c, h, d)
        ).reshape(p2 * c * h, d).astype(jnp.bfloat16)                # [P2*C*H, D]

        ln = jnp.stack([self.b, self.gamma, self.beta], axis=0)      # [3, D] f32

        flops = (2 * b * (c * h) * w * (p2 * n_pad)            # x-interp matmul
                 + 2 * b * n_pad * (p2 * c * h) * d)           # projection matmul
        bytes_accessed = (img.size * 2 + wx_all.size * 2 + wy_f.size * 4
                          + wp_full.size * 2 + ln.size * 4 + b * n_pad * d * 4)

        # NOTE: img block index is constant per batch; at large images pin it
        # to a single buffer (pl.Buffered(1)) against the v7x 64 MiB VMEM.
        out = pl.pallas_call(
            _patch_sensor_kernel,
            out_shape=jax.ShapeDtypeStruct((b, n_pad, d), jnp.float32),
            grid=(b, n_tiles),
            in_specs=[
                pl.BlockSpec((1, c * h, w), lambda bi, ti: (bi, 0, 0)),
                pl.BlockSpec((1, w, p2 * nt), lambda bi, ti: (bi, 0, ti)),
                pl.BlockSpec((1, p2, h, nt), lambda bi, ti: (bi, 0, 0, ti)),
                pl.BlockSpec((p2 * c * h, d), lambda bi, ti: (0, 0)),
                pl.BlockSpec((3, d), lambda bi, ti: (0, 0)),
            ],
            out_specs=pl.BlockSpec((1, nt, d), lambda bi, ti: (bi, ti, 0)),
            scratch_shapes=[pltpu.VMEM((p2 * c * h, nt), jnp.bfloat16)],
            compiler_params=pltpu.CompilerParams(
                dimension_semantics=("parallel", "parallel"),
                vmem_limit_bytes=32 * 1024 * 1024),
            cost_estimate=pl.CostEstimate(flops=flops,
                                          transcendentals=b * n_pad,
                                          bytes_accessed=bytes_accessed),
        )(img, wx_all, wy_f, wp_full, ln)

        return out[:, :n, :] if n_pad != n else out


# ----------------------------------------------------------------------------
# Pure-JAX f32 reference (explicit bilinear gather) for a correctness check.
# ----------------------------------------------------------------------------
def reference_forward(mod, x, fixations=None):
    b, c, h, w = x.shape
    p2, n = mod.sampling_kernels.shape[:2]
    coords = jnp.broadcast_to(mod.sampling_kernels[None], (b, p2, n, 2))
    if fixations is not None:
        coords = coords + fixations[:, None, None, :]
    gx, gy = coords[..., 0], coords[..., 1]
    ix = ((gx + 1.0) * w - 1.0) * 0.5
    iy = ((gy + 1.0) * h - 1.0) * 0.5
    x0 = jnp.floor(ix); x1 = x0 + 1.0
    y0 = jnp.floor(iy); y1 = y0 + 1.0
    wx1 = ix - x0; wx0 = 1.0 - wx1
    wy1 = iy - y0; wy0 = 1.0 - wy1
    xf = x.reshape(b, c, h * w)
    out = jnp.zeros((b, c, p2, n), jnp.float32)
    for yy, xx, ww in ((y0, x0, wy0 * wx0), (y0, x1, wy0 * wx1),
                       (y1, x0, wy1 * wx0), (y1, x1, wy1 * wx1)):
        valid = ((xx >= 0) & (xx < w) & (yy >= 0) & (yy < h)).astype(jnp.float32)
        xi = jnp.clip(xx, 0, w - 1).astype(jnp.int32)
        yi = jnp.clip(yy, 0, h - 1).astype(jnp.int32)
        idx = yi * w + xi                                            # [B, P2, N]
        gathered = jax.vmap(lambda xb, ib: xb[:, ib])(xf, idx)       # [B, C, P2, N]
        out = out + gathered * (ww * valid)[:, None, :, :]
    # rearrange 'b c p2 n -> b n (c p2)'
    feat = jnp.transpose(out, (0, 3, 1, 2)).reshape(b, n, c * p2)
    pre = feat @ mod.w.T + mod.b
    mean = jnp.mean(pre, axis=-1, keepdims=True)
    var = jnp.mean((pre - mean) ** 2, axis=-1, keepdims=True)
    return (pre - mean) * jax.lax.rsqrt(var + 1e-5) * mod.gamma + mod.beta


if __name__ == "__main__":
    key = jax.random.PRNGKey(0)
    k_x, k_tess, k_param, k_fix = jax.random.split(key, 4)

    # Small but TPU-friendly shapes: 256 tokens (2 lane-dense token tiles of
    # 128), D = 128 so output stores are unmasked, H = W = 16 (H % 8 == 0).
    B, C, H, W = 2, 4, 16, 16
    N_PATCHES, PATCH_SIZE, OUT_CH = 256, 4, 128

    tessellation = np.asarray(
        jax.random.uniform(k_tess, (N_PATCHES, 2), jnp.float32, -0.7, 0.7))
    x = jax.random.normal(k_x, (B, C, H, W), jnp.float32)

    module = PatchSensorPallas(tessellation, PATCH_SIZE, C, OUT_CH,
                               patch_scaling=0.5, key=k_param)

    # fixations=None path (module default)
    out = jax.block_until_ready(module(x))
    ref = jax.block_until_ready(reference_forward(module, x))
    assert out.shape == (B, N_PATCHES, OUT_CH)
    assert np.all(np.isfinite(np.asarray(out)))
    # bf16 streamed operands vs full-f32 reference -> tolerance reflects bf16.
    assert np.allclose(np.asarray(out), np.asarray(ref), atol=5e-2, rtol=5e-2)

    # fixations path (patch translation + zeros-padding at the image border)
    fix = jax.random.uniform(k_fix, (B, 2), jnp.float32, -0.4, 0.4)
    out_f = jax.block_until_ready(module(x, fixations=fix))
    ref_f = jax.block_until_ready(reference_forward(module, x, fixations=fix))
    assert np.allclose(np.asarray(out_f), np.asarray(ref_f), atol=5e-2, rtol=5e-2)

    print("KERNEL_OK")
</pallas_src>

<mosaic_0001>
module attributes {stable_mosaic.version = 11 : i64} {
  func.func @_patch_sensor_kernel(%arg0: i32, %arg1: i32, %arg2: memref<1x64x16xbf16, #tpu.memory_space<vmem>>, %arg3: memref<1x16x2048xbf16, #tpu.memory_space<vmem>>, %arg4: memref<1x16x16x128xf32, #tpu.memory_space<vmem>>, %arg5: memref<1024x128xbf16, #tpu.memory_space<vmem>>, %arg6: memref<3x128xf32, #tpu.memory_space<vmem>>, %arg7: memref<1x128x128xf32, #tpu.memory_space<vmem>>, %arg8: memref<1024x128xbf16, #tpu.memory_space<vmem>>) attributes {dimension_semantics = [#tpu.dimension_semantics<parallel>, #tpu.dimension_semantics<parallel>], iteration_bounds = array<i64: 2, 2>, scalar_prefetch = 0 : i64, scratch_operands = 1 : i64, tpu.core_type = #tpu.core_type<tc>, window_params = [{transform_indices = @transform_0, window_bounds = array<i64: 1, 64, 16>}, {transform_indices = @transform_1, window_bounds = array<i64: 1, 16, 2048>}, {transform_indices = @transform_2, window_bounds = array<i64: 1, 16, 16, 128>}, {pipeline_mode = #tpu.pipeline_mode<synchronous>, transform_indices = @transform_3, window_bounds = array<i64: 1024, 128>}, {pipeline_mode = #tpu.pipeline_mode<synchronous>, transform_indices = @transform_4, window_bounds = array<i64: 3, 128>}, {transform_indices = @transform_5, window_bounds = array<i64: 1, 128, 128>}]} {
    %c0 = arith.constant 0 : index
    %c0_0 = arith.constant 0 : index
    %c0_1 = arith.constant 0 : index
    %0 = vector.load %arg2[%c0, %c0_0, %c0_1] : memref<1x64x16xbf16, #tpu.memory_space<vmem>>, vector<1x64x16xbf16>
    %1 = vector.shape_cast %0 : vector<1x64x16xbf16> to vector<64x16xbf16>
    %c0_2 = arith.constant 0 : index
    %c0_3 = arith.constant 0 : index
    %c0_4 = arith.constant 0 : index
    %2 = vector.load %arg3[%c0_2, %c0_3, %c0_4] : memref<1x16x2048xbf16, #tpu.memory_space<vmem>>, vector<1x16x2048xbf16>
    %3 = vector.shape_cast %2 : vector<1x16x2048xbf16> to vector<16x2048xbf16>
    %cst = arith.constant dense<0.000000e+00> : vector<64x2048xf32>
    %4 = tpu.matmul %1, %3, %cst {dimension_numbers = #tpu.dot_dimension_numbers<[1], [0], [0], [1], [0, 0, 1, 1], [], []>} : vector<64x16xbf16>, vector<16x2048xbf16>, vector<64x2048xf32> -> vector<64x2048xf32>
    %5 = vector.extract_strided_slice %4 {offsets = [0, 0], sizes = [64, 128], strides = [1, 1]} : vector<64x2048xf32> to vector<64x128xf32>
    %c0_5 = arith.constant 0 : index
    %c0_6 = arith.constant 0 : index
    %c0_7 = arith.constant 0 : index
    %c0_8 = arith.constant 0 : index
    %6 = vector.load %arg4[%c0_5, %c0_6, %c0_7, %c0_8] : memref<1x16x16x128xf32, #tpu.memory_space<vmem>>, vector<1x1x16x128xf32>
    %7 = vector.shape_cast %6 : vector<1x1x16x128xf32> to vector<16x128xf32>
    %8 = vector.shape_cast %5 : vector<64x128xf32> to vector<4x16x128xf32>
    %9 = vector.shape_cast %7 : vector<16x128xf32> to vector<1x16x128xf32>
    %10 = vector.broadcast %9 : vector<1x16x128xf32> to vector<4x16x128xf32>
    %11 = arith.mulf %8, %10 : vector<4x16x128xf32>
    %12 = vector.shape_cast %11 : vector<4x16x128xf32> to vector<64x128xf32>
    %13 = arith.truncf %12 : vector<64x128xf32> to vector<64x128xbf16>
    %c0_9 = arith.constant 0 : index
    %c0_10 = arith.constant 0 : index
    %14 = vector.load %arg8[%c0_9, %c0_10] : memref<1024x128xbf16, #tpu.memory_space<vmem>>, vector<64x128xbf16>
    tpu.vector_store %arg8[%c0_9, %c0_10], %13 {strides = array<i32>} : memref<1024x128xbf16, #tpu.memory_space<vmem>>, vector<64x128xbf16>,
    %15 = vector.extract_strided_slice %4 {offsets = [0, 128], sizes = [64, 128], strides = [1, 1]} : vector<64x2048xf32> to vector<64x128xf32>
    %c0_11 = arith.constant 0 : index
    %c1 = arith.constant 1 : index
    %c0_12 = arith.constant 0 : index
    %c0_13 = arith.constant 0 : index
    %16 = vector.load %arg4[%c0_11, %c1, %c0_12, %c0_13] : memref<1x16x16x128xf32, #tpu.memory_space<vmem>>, vector<1x1x16x128xf32>
    %17 = vector.shape_cast %16 : vector<1x1x16x128xf32> to vector<16x128xf32>
    %18 = vector.shape_cast %15 : vector<64x128xf32> to vector<4x16x128xf32>
    %19 = vector.shape_cast %17 : vector<16x128xf32> to vector<1x16x128xf32>
    %20 = vector.broadcast %19 : vector<1x16x128xf32> to vector<4x16x128xf32>
    %21 = arith.mulf %18, %20 : vector<4x16x128xf32>
    %22 = vector.shape_cast %21 : vector<4x16x128xf32> to vector<64x128xf32>
    %23 = arith.truncf %22 : vector<64x128xf32> to vector<64x128xbf16>
    %c64 = arith.constant 64 : index
    %c0_14 = arith.constant 0 : index
    %24 = vector.load %arg8[%c64, %c0_14] : memref<1024x128xbf16, #tpu.memory_space<vmem>>, vector<64x128xbf16>
    tpu.vector_store %arg8[%c64, %c0_14], %23 {strides = array<i32>} : memref<1024x128xbf16, #tpu.memory_space<vmem>>, vector<64x128xbf16>,
    %25 = vector.extract_strided_slice %4 {offsets = [0, 256], sizes = [64, 128], strides = [1, 1]} : vector<64x2048xf32> to vector<64x128xf32>
    %c0_15 = arith.constant 0 : index
    %c2 = arith.constant 2 : index
    %c0_16 = arith.constant 0 : index
    %c0_17 = arith.constant 0 : index
    %26 = vector.load %arg4[%c0_15, %c2, %c0_16, %c0_17] : memref<1x16x16x128xf32, #tpu.memory_space<vmem>>, vector<1x1x16x128xf32>
    %27 = vector.shape_cast %26 : vector<1x1x16x128xf32> to vector<16x128xf32>
    %28 = vector.shape_cast %25 : vector<64x128xf32> to vector<4x16x128xf32>
    %29 = vector.shape_cast %27 : vector<16x128xf32> to vector<1x16x128xf32>
    %30 = vector.broadcast %29 : vector<1x16x128xf32> to vector<4x16x128xf32>
    %31 = arith.mulf %28, %30 : vector<4x16x128xf32>
    %32 = vector.shape_cast %31 : vector<4x16x128xf32> to vector<64x128xf32>
    %33 = arith.truncf %32 : vector<64x128xf32> to vector<64x128xbf16>
    %c128 = arith.constant 128 : index
    %c0_18 = arith.constant 0 : index
    %34 = vector.load %arg8[%c128, %c0_18] : memref<1024x128xbf16, #tpu.memory_space<vmem>>, vector<64x128xbf16>
    tpu.vector_store %arg8[%c128, %c0_18], %33 {strides = array<i32>} : memref<1024x128xbf16, #tpu.memory_space<vmem>>, vector<64x128xbf16>,
    %35 = vector.extract_strided_slice %4 {offsets = [0, 384], sizes = [64, 128], strides = [1, 1]} : vector<64x2048xf32> to vector<64x128xf32>
    %c0_19 = arith.constant 0 : index
    %c3 = arith.constant 3 : index
    %c0_20 = arith.constant 0 : index
    %c0_21 = arith.constant 0 : index
    %36 = vector.load %arg4[%c0_19, %c3, %c0_20, %c0_21] : memref<1x16x16x128xf32, #tpu.memory_space<vmem>>, vector<1x1x16x128xf32>
    %37 = vector.shape_cast %36 : vector<1x1x16x128xf32> to vector<16x128xf32>
    %38 = vector.shape_cast %35 : vector<64x128xf32> to vector<4x16x128xf32>
    %39 = vector.shape_cast %37 : vector<16x128xf32> to vector<1x16x128xf32>
    %40 = vector.broadcast %39 : vector<1x16x128xf32> to vector<4x16x128xf32>
    %41 = arith.mulf %38, %40 : vector<4x16x128xf32>
    %42 = vector.shape_cast %41 : vector<4x16x128xf32> to vector<64x128xf32>
    %43 = arith.truncf %42 : vector<64x128xf32> to vector<64x128xbf16>
    %c192 = arith.constant 192 : index
    %c0_22 = arith.constant 0 : index
    %44 = vector.load %arg8[%c192, %c0_22] : memref<1024x128xbf16, #tpu.memory_space<vmem>>, vector<64x128xbf16>
    tpu.vector_store %arg8[%c192, %c0_22], %43 {strides = array<i32>} : memref<1024x128xbf16, #tpu.memory_space<vmem>>, vector<64x128xbf16>,
    %45 = vector.extract_strided_slice %4 {offsets = [0, 512], sizes = [64, 128], strides = [1, 1]} : vector<64x2048xf32> to vector<64x128xf32>
    %c0_23 = arith.constant 0 : index
    %c4 = arith.constant 4 : index
    %c0_24 = arith.constant 0 : index
    %c0_25 = arith.constant 0 : index
    %46 = vector.load %arg4[%c0_23, %c4, %c0_24, %c0_25] : memref<1x16x16x128xf32, #tpu.memory_space<vmem>>, vector<1x1x16x128xf32>
    %47 = vector.shape_cast %46 : vector<1x1x16x128xf32> to vector<16x128xf32>
    %48 = vector.shape_cast %45 : vector<64x128xf32> to vector<4x16x128xf32>
    %49 = vector.shape_cast %47 : vector<16x128xf32> to vector<1x16x128xf32>
    %50 = vector.broadcast %49 : vector<1x16x128xf32> to vector<4x16x128xf32>
    %51 = arith.mulf %48, %50 : vector<4x16x128xf32>
    %52 = vector.shape_cast %51 : vector<4x16x128xf32> to vector<64x128xf32>
    %53 = arith.truncf %52 : vector<64x128xf32> to vector<64x128xbf16>
    %c256 = arith.constant 256 : index
    %c0_26 = arith.constant 0 : index
    %54 = vector.load %arg8[%c256, %c0_26] : memref<1024x128xbf16, #tpu.memory_space<vmem>>, vector<64x128xbf16>
    tpu.vector_store %arg8[%c256, %c0_26], %53 {strides = array<i32>} : memref<1024x128xbf16, #tpu.memory_space<vmem>>, vector<64x128xbf16>,
    %55 = vector.extract_strided_slice %4 {offsets = [0, 640], sizes = [64, 128], strides = [1, 1]} : vector<64x2048xf32> to vector<64x128xf32>
    %c0_27 = arith.constant 0 : index
    %c5 = arith.constant 5 : index
    %c0_28 = arith.constant 0 : index
    %c0_29 = arith.constant 0 : index
    %56 = vector.load %arg4[%c0_27, %c5, %c0_28, %c0_29] : memref<1x16x16x128xf32, #tpu.memory_space<vmem>>, vector<1x1x16x128xf32>
    %57 = vector.shape_cast %56 : vector<1x1x16x128xf32> to vector<16x128xf32>
    %58 = vector.shape_cast %55 : vector<64x128xf32> to vector<4x16x128xf32>
    %59 = vector.shape_cast %57 : vector<16x128xf32> to vector<1x16x128xf32>
    %60 = vector.broadcast %59 : vector<1x16x128xf32> to vector<4x16x128xf32>
    %61 = arith.mulf %58, %60 : vector<4x16x128xf32>
    %62 = vector.shape_cast %61 : vector<4x16x128xf32> to vector<64x128xf32>
    %63 = arith.truncf %62 : vector<64x128xf32> to vector<64x128xbf16>
    %c320 = arith.constant 320 : index
    %c0_30 = arith.constant 0 : index
    %64 = vector.load %arg8[%c320, %c0_30] : memref<1024x128xbf16, #tpu.memory_space<vmem>>, vector<64x128xbf16>
    tpu.vector_store %arg8[%c320, %c0_30], %63 {strides = array<i32>} : memref<1024x128xbf16, #tpu.memory_space<vmem>>, vector<64x128xbf16>,
    %65 = vector.extract_strided_slice %4 {offsets = [0, 768], sizes = [64, 128], strides = [1, 1]} : vector<64x2048xf32> to vector<64x128xf32>
    %c0_31 = arith.constant 0 : index
    %c6 = arith.constant 6 : index
    %c0_32 = arith.constant 0 : index
    %c0_33 = arith.constant 0 : index
    %66 = vector.load %arg4[%c0_31, %c6, %c0_32, %c0_33] : memref<1x16x16x128xf32, #tpu.memory_space<vmem>>, vector<1x1x16x128xf32>
    %67 = vector.shape_cast %66 : vector<1x1x16x128xf32> to vector<16x128xf32>
    %68 = vector.shape_cast %65 : vector<64x128xf32> to vector<4x16x128xf32>
    %69 = vector.shape_cast %67 : vector<16x128xf32> to vector<1x16x128xf32>
    %70 = vector.broadcast %69 : vector<1x16x128xf32> to vector<4x16x128xf32>
    %71 = arith.mulf %68, %70 : vector<4x16x128xf32>
    %72 = vector.shape_cast %71 : vector<4x16x128xf32> to vector<64x128xf32>
    %73 = arith.truncf %72 : vector<64x128xf32> to vector<64x128xbf16>
    %c384 = arith.constant 384 : index
    %c0_34 = arith.constant 0 : index
    %74 = vector.load %arg8[%c384, %c0_34] : memref<1024x128xbf16, #tpu.memory_space<vmem>>, vector<64x128xbf16>
    tpu.vector_store %arg8[%c384, %c0_34], %73 {strides = array<i32>} : memref<1024x128xbf16, #tpu.memory_space<vmem>>, vector<64x128xbf16>,
    %75 = vector.extract_strided_slice %4 {offsets = [0, 896], sizes = [64, 128], strides = [1, 1]} : vector<64x2048xf32> to vector<64x128xf32>
    %c0_35 = arith.constant 0 : index
    %c7 = arith.constant 7 : index
    %c0_36 = arith.constant 0 : index
    %c0_37 = arith.constant 0 : index
    %76 = vector.load %arg4[%c0_35, %c7, %c0_36, %c0_37] : memref<1x16x16x128xf32, #tpu.memory_space<vmem>>, vector<1x1x16x128xf32>
    %77 = vector.shape_cast %76 : vector<1x1x16x128xf32> to vector<16x128xf32>
    %78 = vector.shape_cast %75 : vector<64x128xf32> to vector<4x16x128xf32>
    %79 = vector.shape_cast %77 : vector<16x128xf32> to vector<1x16x128xf32>
    %80 = vector.broadcast %79 : vector<1x16x128xf32> to vector<4x16x128xf32>
    %81 = arith.mulf %78, %80 : vector<4x16x128xf32>
    %82 = vector.shape_cast %81 : vector<4x16x128xf32> to vector<64x128xf32>
    %83 = arith.truncf %82 : vector<64x128xf32> to vector<64x128xbf16>
    %c448 = arith.constant 448 : index
    %c0_38 = arith.constant 0 : index
    %84 = vector.load %arg8[%c448, %c0_38] : memref<1024x128xbf16, #tpu.memory_space<vmem>>, vector<64x128xbf16>
    tpu.vector_store %arg8[%c448, %c0_38], %83 {strides = array<i32>} : memref<1024x128xbf16, #tpu.memory_space<vmem>>, vector<64x128xbf16>,
    %85 = vector.extract_strided_slice %4 {offsets = [0, 1024], sizes = [64, 128], strides = [1, 1]} : vector<64x2048xf32> to vector<64x128xf32>
    %c0_39 = arith.constant 0 : index
    %c8 = arith.constant 8 : index
    %c0_40 = arith.constant 0 : index
    %c0_41 = arith.constant 0 : index
    %86 = vector.load %arg4[%c0_39, %c8, %c0_40, %c0_41] : memref<1x16x16x128xf32, #tpu.memory_space<vmem>>, vector<1x1x16x128xf32>
    %87 = vector.shape_cast %86 : vector<1x1x16x128xf32> to vector<16x128xf32>
    %88 = vector.shape_cast %85 : vector<64x128xf32> to vector<4x16x128xf32>
    %89 = vector.shape_cast %87 : vector<16x128xf32> to vector<1x16x128xf32>
    %90 = vector.broadcast %89 : vector<1x16x128xf32> to vector<4x16x128xf32>
    %91 = arith.mulf %88, %90 : vector<4x16x128xf32>
    %92 = vector.shape_cast %91 : vector<4x16x128xf32> to vector<64x128xf32>
    %93 = arith.truncf %92 : vector<64x128xf32> to vector<64x128xbf16>
    %c512 = arith.constant 512 : index
    %c0_42 = arith.constant 0 : index
    %94 = vector.load %arg8[%c512, %c0_42] : memref<1024x128xbf16, #tpu.memory_space<vmem>>, vector<64x128xbf16>
    tpu.vector_store %arg8[%c512, %c0_42], %93 {strides = array<i32>} : memref<1024x128xbf16, #tpu.memory_space<vmem>>, vector<64x128xbf16>,
    %95 = vector.extract_strided_slice %4 {offsets = [0, 1152], sizes = [64, 128], strides = [1, 1]} : vector<64x2048xf32> to vector<64x128xf32>
    %c0_43 = arith.constant 0 : index
    %c9 = arith.constant 9 : index
    %c0_44 = arith.constant 0 : index
    %c0_45 = arith.constant 0 : index
    %96 = vector.load %arg4[%c0_43, %c9, %c0_44, %c0_45] : memref<1x16x16x128xf32, #tpu.memory_space<vmem>>, vector<1x1x16x128xf32>
    %97 = vector.shape_cast %96 : vector<1x1x16x128xf32> to vector<16x128xf32>
    %98 = vector.shape_cast %95 : vector<64x128xf32> to vector<4x16x128xf32>
    %99 = vector.shape_cast %97 : vector<16x128xf32> to vector<1x16x128xf32>
    %100 = vector.broadcast %99 : vector<1x16x128xf32> to vector<4x16x128xf32>
    %101 = arith.mulf %98, %100 : vector<4x16x128xf32>
    %102 = vector.shape_cast %101 : vector<4x16x128xf32> to vector<64x128xf32>
    %103 = arith.truncf %102 : vector<64x128xf32> to vector<64x128xbf16>
    %c576 = arith.constant 576 : index
    %c0_46 = arith.constant 0 : index
    %104 = vector.load %arg8[%c576, %c0_46] : memref<1024x128xbf16, #tpu.memory_space<vmem>>, vector<64x128xbf16>
    tpu.vector_store %arg8[%c576, %c0_46], %103 {strides = array<i32>} : memref<1024x128xbf16, #tpu.memory_space<vmem>>, vector<64x128xbf16>,
    %105 = vector.extract_strided_slice %4 {offsets = [0, 1280], sizes = [64, 128], strides = [1, 1]} : vector<64x2048xf32> to vector<64x128xf32>
    %c0_47 = arith.constant 0 : index
    %c10 = arith.constant 10 : index
    %c0_48 = arith.constant 0 : index
    %c0_49 = arith.constant 0 : index
    %106 = vector.load %arg4[%c0_47, %c10, %c0_48, %c0_49] : memref<1x16x16x128xf32, #tpu.memory_space<vmem>>, vector<1x1x16x128xf32>
    %107 = vector.shape_cast %106 : vector<1x1x16x128xf32> to vector<16x128xf32>
    %108 = vector.shape_cast %105 : vector<64x128xf32> to vector<4x16x128xf32>
    %109 = vector.shape_cast %107 : vector<16x128xf32> to vector<1x16x128xf32>
    %110 = vector.broadcast %109 : vector<1x16x128xf32> to vector<4x16x128xf32>
    %111 = arith.mulf %108, %110 : vector<4x16x128xf32>
    %112 = vector.shape_cast %111 : vector<4x16x128xf32> to vector<64x128xf32>
    %113 = arith.truncf %112 : vector<64x128xf32> to vector<64x128xbf16>
    %c640 = arith.constant 640 : index
    %c0_50 = arith.constant 0 : index
    %114 = vector.load %arg8[%c640, %c0_50] : memref<1024x128xbf16, #tpu.memory_space<vmem>>, vector<64x128xbf16>
    tpu.vector_store %arg8[%c640, %c0_50], %113 {strides = array<i32>} : memref<1024x128xbf16, #tpu.memory_space<vmem>>, vector<64x128xbf16>,
    %115 = vector.extract_strided_slice %4 {offsets = [0, 1408], sizes = [64, 128], strides = [1, 1]} : vector<64x2048xf32> to vector<64x128xf32>
    %c0_51 = arith.constant 0 : index
    %c11 = arith.constant 11 : index
    %c0_52 = arith.constant 0 : index
    %c0_53 = arith.constant 0 : index
    %116 = vector.load %arg4[%c0_51, %c11, %c0_52, %c0_53] : memref<1x16x16x128xf32, #tpu.memory_space<vmem>>, vector<1x1x16x128xf32>
    %117 = vector.shape_cast %116 : vector<1x1x16x128xf32> to vector<16x128xf32>
    %118 = vector.shape_cast %115 : vector<64x128xf32> to vector<4x16x128xf32>
    %119 = vector.shape_cast %117 : vector<16x128xf32> to vector<1x16x128xf32>
    %120 = vector.broadcast %119 : vector<1x16x128xf32> to vector<4x16x128xf32>
    %121 = arith.mulf %118, %120 : vector<4x16x128xf32>
    %122 = vector.shape_cast %121 : vector<4x16x128xf32> to vector<64x128xf32>
    %123 = arith.truncf %122 : vector<64x128xf32> to vector<64x128xbf16>
    %c704 = arith.constant 704 : index
    %c0_54 = arith.constant 0 : index
    %124 = vector.load %arg8[%c704, %c0_54] : memref<1024x128xbf16, #tpu.memory_space<vmem>>, vector<64x128xbf16>
    tpu.vector_store %arg8[%c704, %c0_54], %123 {strides = array<i32>} : memref<1024x128xbf16, #tpu.memory_space<vmem>>, vector<64x128xbf16>,
    %125 = vector.extract_strided_slice %4 {offsets = [0, 1536], sizes = [64, 128], strides = [1, 1]} : vector<64x2048xf32> to vector<64x128xf32>
    %c0_55 = arith.constant 0 : index
    %c12 = arith.constant 12 : index
    %c0_56 = arith.constant 0 : index
    %c0_57 = arith.constant 0 : index
    %126 = vector.load %arg4[%c0_55, %c12, %c0_56, %c0_57] : memref<1x16x16x128xf32, #tpu.memory_space<vmem>>, vector<1x1x16x128xf32>
    %127 = vector.shape_cast %126 : vector<1x1x16x128xf32> to vector<16x128xf32>
    %128 = vector.shape_cast %125 : vector<64x128xf32> to vector<4x16x128xf32>
    %129 = vector.shape_cast %127 : vector<16x128xf32> to vector<1x16x128xf32>
    %130 = vector.broadcast %129 : vector<1x16x128xf32> to vector<4x16x128xf32>
    %131 = arith.mulf %128, %130 : vector<4x16x128xf32>
    %132 = vector.shape_cast %131 : vector<4x16x128xf32> to vector<64x128xf32>
    %133 = arith.truncf %132 : vector<64x128xf32> to vector<64x128xbf16>
    %c768 = arith.constant 768 : index
    %c0_58 = arith.constant 0 : index
    %134 = vector.load %arg8[%c768, %c0_58] : memref<1024x128xbf16, #tpu.memory_space<vmem>>, vector<64x128xbf16>
    tpu.vector_store %arg8[%c768, %c0_58], %133 {strides = array<i32>} : memref<1024x128xbf16, #tpu.memory_space<vmem>>, vector<64x128xbf16>,
    %135 = vector.extract_strided_slice %4 {offsets = [0, 1664], sizes = [64, 128], strides = [1, 1]} : vector<64x2048xf32> to vector<64x128xf32>
    %c0_59 = arith.constant 0 : index
    %c13 = arith.constant 13 : index
    %c0_60 = arith.constant 0 : index
    %c0_61 = arith.constant 0 : index
    %136 = vector.load %arg4[%c0_59, %c13, %c0_60, %c0_61] : memref<1x16x16x128xf32, #tpu.memory_space<vmem>>, vector<1x1x16x128xf32>
    %137 = vector.shape_cast %136 : vector<1x1x16x128xf32> to vector<16x128xf32>
    %138 = vector.shape_cast %135 : vector<64x128xf32> to vector<4x16x128xf32>
    %139 = vector.shape_cast %137 : vector<16x128xf32> to vector<1x16x128xf32>
    %140 = vector.broadcast %139 : vector<1x16x128xf32> to vector<4x16x128xf32>
    %141 = arith.mulf %138, %140 : vector<4x16x128xf32>
    %142 = vector.shape_cast %141 : vector<4x16x128xf32> to vector<64x128xf32>
    %143 = arith.truncf %142 : vector<64x128xf32> to vector<64x128xbf16>
    %c832 = arith.constant 832 : index
    %c0_62 = arith.constant 0 : index
    %144 = vector.load %arg8[%c832, %c0_62] : memref<1024x128xbf16, #tpu.memory_space<vmem>>, vector<64x128xbf16>
    tpu.vector_store %arg8[%c832, %c0_62], %143 {strides = array<i32>} : memref<1024x128xbf16, #tpu.memory_space<vmem>>, vector<64x128xbf16>,
    %145 = vector.extract_strided_slice %4 {offsets = [0, 1792], sizes = [64, 128], strides = [1, 1]} : vector<64x2048xf32> to vector<64x128xf32>
    %c0_63 = arith.constant 0 : index
    %c14 = arith.constant 14 : index
    %c0_64 = arith.constant 0 : index
    %c0_65 = arith.constant 0 : index
    %146 = vector.load %arg4[%c0_63, %c14, %c0_64, %c0_65] : memref<1x16x16x128xf32, #tpu.memory_space<vmem>>, vector<1x1x16x128xf32>
    %147 = vector.shape_cast %146 : vector<1x1x16x128xf32> to vector<16x128xf32>
    %148 = vector.shape_cast %145 : vector<64x128xf32> to vector<4x16x128xf32>
    %149 = vector.shape_cast %147 : vector<16x128xf32> to vector<1x16x128xf32>
    %150 = vector.broadcast %149 : vector<1x16x128xf32> to vector<4x16x128xf32>
    %151 = arith.mulf %148, %150 : vector<4x16x128xf32>
    %152 = vector.shape_cast %151 : vector<4x16x128xf32> to vector<64x128xf32>
    %153 = arith.truncf %152 : vector<64x128xf32> to vector<64x128xbf16>
    %c896 = arith.constant 896 : index
    %c0_66 = arith.constant 0 : index
    %154 = vector.load %arg8[%c896, %c0_66] : memref<1024x128xbf16, #tpu.memory_space<vmem>>, vector<64x128xbf16>
    tpu.vector_store %arg8[%c896, %c0_66], %153 {strides = array<i32>} : memref<1024x128xbf16, #tpu.memory_space<vmem>>, vector<64x128xbf16>,
    %155 = vector.extract_strided_slice %4 {offsets = [0, 1920], sizes = [64, 128], strides = [1, 1]} : vector<64x2048xf32> to vector<64x128xf32>
    %c0_67 = arith.constant 0 : index
    %c15 = arith.constant 15 : index
    %c0_68 = arith.constant 0 : index
    %c0_69 = arith.constant 0 : index
    %156 = vector.load %arg4[%c0_67, %c15, %c0_68, %c0_69] : memref<1x16x16x128xf32, #tpu.memory_space<vmem>>, vector<1x1x16x128xf32>
    %157 = vector.shape_cast %156 : vector<1x1x16x128xf32> to vector<16x128xf32>
    %158 = vector.shape_cast %155 : vector<64x128xf32> to vector<4x16x128xf32>
    %159 = vector.shape_cast %157 : vector<16x128xf32> to vector<1x16x128xf32>
    %160 = vector.broadcast %159 : vector<1x16x128xf32> to vector<4x16x128xf32>
    %161 = arith.mulf %158, %160 : vector<4x16x128xf32>
    %162 = vector.shape_cast %161 : vector<4x16x128xf32> to vector<64x128xf32>
    %163 = arith.truncf %162 : vector<64x128xf32> to vector<64x128xbf16>
    %c960 = arith.constant 960 : index
    %c0_70 = arith.constant 0 : index
    %164 = vector.load %arg8[%c960, %c0_70] : memref<1024x128xbf16, #tpu.memory_space<vmem>>, vector<64x128xbf16>
    tpu.vector_store %arg8[%c960, %c0_70], %163 {strides = array<i32>} : memref<1024x128xbf16, #tpu.memory_space<vmem>>, vector<64x128xbf16>,
    %c0_71 = arith.constant 0 : index
    %c0_72 = arith.constant 0 : index
    %165 = vector.load %arg8[%c0_71, %c0_72] : memref<1024x128xbf16, #tpu.memory_space<vmem>>, vector<1024x128xbf16>
    %c0_73 = arith.constant 0 : index
    %c0_74 = arith.constant 0 : index
    %166 = vector.load %arg5[%c0_73, %c0_74] : memref<1024x128xbf16, #tpu.memory_space<vmem>>, vector<1024x128xbf16>
    %cst_75 = arith.constant dense<0.000000e+00> : vector<128x128xf32>
    %167 = tpu.matmul %165, %166, %cst_75 {dimension_numbers = #tpu.dot_dimension_numbers<[0], [0], [1], [1], [0, 1, 1, 1], [], []>} : vector<1024x128xbf16>, vector<1024x128xbf16>, vector<128x128xf32> -> vector<128x128xf32>
    %c0_76 = arith.constant 0 : index
    %c0_77 = arith.constant 0 : index
    %168 = vector.load %arg6[%c0_76, %c0_77] : memref<3x128xf32, #tpu.memory_space<vmem>>, vector<3x128xf32>
    %169 = vector.extract_strided_slice %168 {offsets = [0, 0], sizes = [1, 128], strides = [1, 1]} : vector<3x128xf32> to vector<1x128xf32>
    %170 = vector.broadcast %169 : vector<1x128xf32> to vector<128x128xf32>
    %171 = arith.addf %167, %170 : vector<128x128xf32>
    %cst_78 = arith.constant dense<0.000000e+00> : vector<128xf32>
    %172 = vector.multi_reduction <add>, %171, %cst_78 [1] : vector<128x128xf32> to vector<128xf32>
    %173 = vector.shape_cast %172 : vector<128xf32> to vector<128x1xf32>
    %cst_79 = arith.constant 1.280000e+02 : f32
    %174 = vector.broadcast %cst_79 : f32 to vector<128x1xf32>
    %175 = arith.divf %173, %174 : vector<128x1xf32>
    %176 = vector.broadcast %175 : vector<128x1xf32> to vector<128x128xf32>
    %177 = arith.subf %171, %176 : vector<128x128xf32>
    %178 = arith.mulf %177, %177 : vector<128x128xf32>
    %cst_80 = arith.constant dense<0.000000e+00> : vector<128xf32>
    %179 = vector.multi_reduction <add>, %178, %cst_80 [1] : vector<128x128xf32> to vector<128xf32>
    %180 = vector.shape_cast %179 : vector<128xf32> to vector<128x1xf32>
    %cst_81 = arith.constant 1.280000e+02 : f32
    %181 = vector.broadcast %cst_81 : f32 to vector<128x1xf32>
    %182 = arith.divf %180, %181 : vector<128x1xf32>
    %cst_82 = arith.constant 9.99999974E-6 : f32
    %183 = vector.broadcast %cst_82 : f32 to vector<128x1xf32>
    %184 = arith.addf %182, %183 : vector<128x1xf32>
    %185 = math.rsqrt %184 : vector<128x1xf32>
    %186 = vector.broadcast %185 : vector<128x1xf32> to vector<128x128xf32>
    %187 = arith.mulf %177, %186 : vector<128x128xf32>
    %188 = vector.extract_strided_slice %168 {offsets = [1, 0], sizes = [1, 128], strides = [1, 1]} : vector<3x128xf32> to vector<1x128xf32>
    %189 = vector.broadcast %188 : vector<1x128xf32> to vector<128x128xf32>
    %190 = arith.mulf %187, %189 : vector<128x128xf32>
    %191 = vector.extract_strided_slice %168 {offsets = [2, 0], sizes = [1, 128], strides = [1, 1]} : vector<3x128xf32> to vector<1x128xf32>
    %192 = vector.broadcast %191 : vector<1x128xf32> to vector<128x128xf32>
    %193 = arith.addf %190, %192 : vector<128x128xf32>
    %c0_83 = arith.constant 0 : index
    %c0_84 = arith.constant 0 : index
    %c0_85 = arith.constant 0 : index
    %194 = vector.load %arg7[%c0_83, %c0_84, %c0_85] : memref<1x128x128xf32, #tpu.memory_space<vmem>>, vector<1x128x128xf32>
    %195 = vector.shape_cast %194 : vector<1x128x128xf32> to vector<128x128xf32>
    %196 = vector.shape_cast %193 : vector<128x128xf32> to vector<1x128x128xf32>
    tpu.vector_store %arg7[%c0_83, %c0_84, %c0_85], %196 {strides = array<i32>} : memref<1x128x128xf32, #tpu.memory_space<vmem>>, vector<1x128x128xf32>,
    return
  }
  func.func @transform_0(%arg0: i32, %arg1: i32) -> (i32, i32, i32) {
    %c0_i32 = arith.constant 0 : i32
    %c0_i32_0 = arith.constant 0 : i32
    %c0_i32_1 = arith.constant 0 : i32
    return %arg0, %c0_i32, %c0_i32_0 : i32, i32, i32
  }
  func.func @transform_1(%arg0: i32, %arg1: i32) -> (i32, i32, i32) {
    %c0_i32 = arith.constant 0 : i32
    %c0_i32_0 = arith.constant 0 : i32
    return %arg0, %c0_i32, %arg1 : i32, i32, i32
  }
  func.func @transform_2(%arg0: i32, %arg1: i32) -> (i32, i32, i32, i32) {
    %c0_i32 = arith.constant 0 : i32
    %c0_i32_0 = arith.constant 0 : i32
    %c0_i32_1 = arith.constant 0 : i32
    return %arg0, %c0_i32, %c0_i32_0, %arg1 : i32, i32, i32, i32
  }
  func.func @transform_3(%arg0: i32, %arg1: i32) -> (i32, i32) {
    %c0_i32 = arith.constant 0 : i32
    %c0_i32_0 = arith.constant 0 : i32
    %c0_i32_1 = arith.constant 0 : i32
    return %c0_i32, %c0_i32_0 : i32, i32
  }
  func.func @transform_4(%arg0: i32, %arg1: i32) -> (i32, i32) {
    %c0_i32 = arith.constant 0 : i32
    %c0_i32_0 = arith.constant 0 : i32
    %c0_i32_1 = arith.constant 0 : i32
    return %c0_i32, %c0_i32_0 : i32, i32
  }
  func.func @transform_5(%arg0: i32, %arg1: i32) -> (i32, i32, i32) {
    %c0_i32 = arith.constant 0 : i32
    %c0_i32_0 = arith.constant 0 : i32
    return %arg0, %arg1, %c0_i32 : i32, i32, i32
  }
}

</mosaic_0001>

<llo_original>
// kernel: tpu_custom_call.1
$region0: #{tpu_custom_call.1}
  #allocation0 [shape = 'u32[]', space=smem, size = 0x4, offset = 0x4, fixed_abs, tag = 'smem constant byte address 0x4 - core index']
  #allocation1 [shape = 'u32[72,128]{1,0:T(1,128)}', space=vmem, size = 0x9000, scoped, tag = 'internal scratch']
  #allocation2 [shape = 'bf16[1024,128]{1,0:T(8,128)(2,1)}', space=vmem, size = 0x40000, scoped, tag = 'scratch operand']
  %s0 = inlined_call_operand.vmem [shape: bf16[2,64,16], index: 0, kind: input, shape index: {}]
  %s1 = inlined_call_operand.hbm [shape: bf16[2,16,4096], index: 1, kind: input, shape index: {}]
  %s2 = inlined_call_operand.hbm [shape: f32[2,16,16,256], index: 2, kind: input, shape index: {}]
  %s3 = inlined_call_operand.hbm [shape: bf16[1024,128], index: 3, kind: input, shape index: {}]
  %s4 = inlined_call_operand.vmem [shape: f32[3,128], index: 4, kind: input, shape index: {}]
  %s5 = inlined_call_operand.hbm [shape: f32[2,256,128], index: 5, kind: output, shape index: {}]
  %s6 = sld [smem:[#allocation0]]
  $region65: #{tpu_custom_call.1} parent=0
    _
  %s8 = ssub.s32 1, %s6
  %s9 = scalar_select 0, %s8, %s6
  $region1: #{tpu_custom_call.1} parent=0
    #allocation3 [shape = 'u8[131072]{0}', space=vmem, size = 0x20000, scoped, tag = 'input window, operand 1']
    #allocation4 [shape = 's32[2]{0}', space=sflag, size = 0x8, scoped, tag = 'scoped memory for tpu_custom_call.1']
    #allocation5 [shape = 's32[2]{0}', space=sflag, size = 0x8, scoped, tag = 'scoped memory for tpu_custom_call.1']
    #allocation6 [shape = 'u8[262144]{0}', space=vmem, size = 0x40000, scoped, tag = 'input window, operand 2']
    #allocation7 [shape = 's32[2]{0}', space=sflag, size = 0x8, scoped, tag = 'scoped memory for tpu_custom_call.1']
    #allocation8 [shape = 'u8[262144]{0}', space=vmem, size = 0x40000, scoped, tag = 'input window, operand 3, single buffered']
    #allocation9 [shape = 'u8[131072]{0}', space=vmem, size = 0x20000, scoped, tag = 'output window, operand 0']
    %10 = vsyncpa [#allocation4], 0
    %s11 = scalar_lea.sflag [#allocation4], 1
    %12 = vsyncpa %s11, 0
    %13 = vsyncpa [#allocation7], 0
    %s14 = scalar_lea.sflag [#allocation7], 1
    %15 = vsyncpa %s14, 0
    %16 = vsyncpa [#allocation5], 0
    %s17 = scalar_lea.sflag [#allocation5], 1
    %18 = vsyncpa %s17, 0
    loop: start=0, step=1, limit=6
    $region2: #{tpu_custom_call.1} parent=1 // loop_pre_header
      _
    $region3: #{tpu_custom_call.1} parent=1 // loop_header
      %s20 = sphi 0, %s24
      %p21 = scmp.ge.s32.totalorder %s20, 6
      %s27 = sphi 0, %s39
      %s28 = sphi 0, %s35
      %s29 = sphi 0, %s27
      %s30 = sphi 0, %s28
      %s31 = sphi 0, %s29
      %s32 = sphi 0, %s30
      %s42 = sphi 0, %s44
      %s45 = sphi 0, %s42
      %s46 = sphi 0, %s45
      %s62 = sphi 0, %s46
      %s70 = sphi 0, %s72
      %s73 = sphi 0, %s70
      %s74 = sphi 0, %s73
      %s90 = sphi 0, %s74
      %s98 = sphi 0, %s100
      %s101 = sphi 0, %s98
      %s102 = sphi 0, %s101
      %s118 = sphi 0, %s102
      %s122 = sphi 0, %s122
      %s124 = sphi 0, %s122
      %s125 = sphi 0, %s124
      %s139 = sphi 0, %s125
      %s143 = sphi 0, %s143
      %s145 = sphi 0, %s143
      %s146 = sphi 0, %s145
      %s160 = sphi 0, %s146
      %s168 = sphi 0, %s170
      %s171 = sphi 0, %s168
      %s172 = sphi 0, %s171
      %s188 = sphi 0, %s172
    $region4: #{tpu_custom_call.1} parent=1 // loop_header_branch
      %23 = sbr.rel (%p21) target = $region8
    $region5: #{tpu_custom_call.1} parent=1 // loop_body
      %s25 = ssub.s32 %s20, 1
      %s26 = ssub.s32 %s20, 2
      %s33 = sadd.s32 1, %s28
      %p34 = scmp.ge.s32.totalorder %s33, 2
      %s35 = scalar_select %p34, 0, %s33
      %s36 = sadd.s32 1, %s27
      %s37 = scalar_select %p34, %s36, %s27
      %p38 = scmp.ge.s32.totalorder %s37, 2
      %s39 = scalar_select %p38, 0, %s37
      %s40 = ssub.s32 %s27, %s39
      %p41 = scmp.eq.s32.totalorder %s40, 0
      %s43 = sadd.s32 %s42, 1
      %s44 = scalar_select %p41, %s42, %s43
      %p47 = pneg %p41
      %p48 = scmp.eq.s32.totalorder %s20, 3
      %p49 = por %p47, %p48
      %p50 = scmp.ne.s32.totalorder %s42, %s45
      %p51 = scmp.eq.s32.totalorder %s20, 0
      %p52 = por %p50, %p51
      %p53 = scmp.ne.s32.totalorder %s42, %s45
      %p54 = scmp.eq.s32.totalorder %s25, 3
      %p55 = por %p53, %p54
      %p56 = scmp.ne.s32.totalorder %s45, %s46
      %p57 = scmp.eq.s32.totalorder %s25, 0
      %p58 = por %p56, %p57
      %p59 = scmp.ne.s32.totalorder %s45, %s46
      %p60 = scmp.eq.s32.totalorder %s26, 3
      %p61 = por %p59, %p60
      %p63 = scmp.ne.s32.totalorder %s46, %s62
      %p64 = scmp.eq.s32.totalorder %s26, 0
      %p65 = por %p63, %p64
      %s66 = ssub.s32 %s27, %s39
      %s67 = ssub.s32 %s28, %s35
      %s68 = sor.u32 %s66, %s67
      %p69 = scmp.eq.s32.totalorder %s68, 0
      %s71 = sadd.s32 %s70, 1
      %s72 = scalar_select %p69, %s70, %s71
      %p75 = pneg %p69
      %p76 = scmp.eq.s32.totalorder %s20, 3
      %p77 = por %p75, %p76
      %p78 = scmp.ne.s32.totalorder %s70, %s73
      %p79 = scmp.eq.s32.totalorder %s20, 0
      %p80 = por %p78, %p79
      %p81 = scmp.ne.s32.totalorder %s70, %s73
      %p82 = scmp.eq.s32.totalorder %s25, 3
      %p83 = por %p81, %p82
      %p84 = scmp.ne.s32.totalorder %s73, %s74
      %p85 = scmp.eq.s32.totalorder %s25, 0
      %p86 = por %p84, %p85
      %p87 = scmp.ne.s32.totalorder %s73, %s74
      %p88 = scmp.eq.s32.totalorder %s26, 3
      %p89 = por %p87, %p88
      %p91 = scmp.ne.s32.totalorder %s74, %s90
      %p92 = scmp.eq.s32.totalorder %s26, 0
      %p93 = por %p91, %p92
      %s94 = ssub.s32 %s27, %s39
      %s95 = ssub.s32 %s28, %s35
      %s96 = sor.u32 %s94, %s95
      %p97 = scmp.eq.s32.totalorder %s96, 0
      %s99 = sadd.s32 %s98, 1
      %s100 = scalar_select %p97, %s98, %s99
      %p103 = pneg %p97
      %p104 = scmp.eq.s32.totalorder %s20, 3
      %p105 = por %p103, %p104
      %p106 = scmp.ne.s32.totalorder %s98, %s101
      %p107 = scmp.eq.s32.totalorder %s20, 0
      %p108 = por %p106, %p107
      %p109 = scmp.ne.s32.totalorder %s98, %s101
      %p110 = scmp.eq.s32.totalorder %s25, 3
      %p111 = por %p109, %p110
      %p112 = scmp.ne.s32.totalorder %s101, %s102
      %p113 = scmp.eq.s32.totalorder %s25, 0
      %p114 = por %p112, %p113
      %p115 = scmp.ne.s32.totalorder %s101, %s102
      %p116 = scmp.eq.s32.totalorder %s26, 3
      %p117 = por %p115, %p116
      %p119 = scmp.ne.s32.totalorder %s102, %s118
      %p120 = scmp.eq.s32.totalorder %s26, 0
      %p121 = por %p119, %p120
      %s123 = sadd.s32 %s122, 1
      %p126 = scmp.eq.s32.totalorder %s20, 3
      %p127 = scmp.ne.s32.totalorder %s122, %s124
      %p128 = scmp.eq.s32.totalorder %s20, 0
      %p129 = por %p127, %p128
      %p130 = scmp.ne.s32.totalorder %s122, %s124
      %p131 = scmp.eq.s32.totalorder %s25, 3
      %p132 = por %p130, %p131
      %p133 = scmp.ne.s32.totalorder %s124, %s125
      %p134 = scmp.eq.s32.totalorder %s25, 0
      %p135 = por %p133, %p134
      %p136 = scmp.ne.s32.totalorder %s124, %s125
      %p137 = scmp.eq.s32.totalorder %s26, 3
      %p138 = por %p136, %p137
      %p140 = scmp.ne.s32.totalorder %s125, %s139
      %p141 = scmp.eq.s32.totalorder %s26, 0
      %p142 = por %p140, %p141
      %s144 = sadd.s32 %s143, 1
      %p147 = scmp.eq.s32.totalorder %s20, 3
      %p148 = scmp.ne.s32.totalorder %s143, %s145
      %p149 = scmp.eq.s32.totalorder %s20, 0
      %p150 = por %p148, %p149
      %p151 = scmp.ne.s32.totalorder %s143, %s145
      %p152 = scmp.eq.s32.totalorder %s25, 3
      %p153 = por %p151, %p152
      %p154 = scmp.ne.s32.totalorder %s145, %s146
      %p155 = scmp.eq.s32.totalorder %s25, 0
      %p156 = por %p154, %p155
      %p157 = scmp.ne.s32.totalorder %s145, %s146
      %p158 = scmp.eq.s32.totalorder %s26, 3
      %p159 = por %p157, %p158
      %p161 = scmp.ne.s32.totalorder %s146, %s160
      %p162 = scmp.eq.s32.totalorder %s26, 0
      %p163 = por %p161, %p162
      %s164 = ssub.s32 %s27, %s39
      %s165 = ssub.s32 %s28, %s35
      %s166 = sor.u32 %s164, %s165
      %p167 = scmp.eq.s32.totalorder %s166, 0
      %s169 = sadd.s32 %s168, 1
      %s170 = scalar_select %p167, %s168, %s169
      %p173 = pneg %p167
      %p174 = scmp.eq.s32.totalorder %s20, 3
      %p175 = por %p173, %p174
      %p176 = scmp.ne.s32.totalorder %s168, %s171
      %p177 = scmp.eq.s32.totalorder %s20, 0
      %p178 = por %p176, %p177
      %p179 = scmp.ne.s32.totalorder %s168, %s171
      %p180 = scmp.eq.s32.totalorder %s25, 3
      %p181 = por %p179, %p180
      %p182 = scmp.ne.s32.totalorder %s171, %s172
      %p183 = scmp.eq.s32.totalorder %s25, 0
      %p184 = por %p182, %p183
      %p185 = scmp.ne.s32.totalorder %s171, %s172
      %p186 = scmp.eq.s32.totalorder %s26, 3
      %p187 = por %p185, %p186
      %p189 = scmp.ne.s32.totalorder %s172, %s188
      %p190 = scmp.eq.s32.totalorder %s26, 0
      %p191 = por %p189, %p190
      %p192 = scmp.le.s32.totalorder 1, %s20
      %p193 = scmp.lt.s32.totalorder %s20, 5
      %p194 = pnand %p192, %p193
      %p195 = pneg %p194
      // Predicated region
      $region9: #{tpu_custom_call.1} parent=5 // pred_check
        _
      $region10: #{tpu_custom_call.1} parent=5 // pred_check_branch
        %197 = sbr.rel (%p194) target = $region12
      $region11: #{tpu_custom_call.1} parent=5 // pred_region
        %s198 = ssub.s32 %s20, 1
        // Predicated region
        $region13: #{tpu_custom_call.1} parent=11 // pred_check
          %p199 = pneg %p135
        $region14: #{tpu_custom_call.1} parent=11 // pred_check_branch
          %201 = sbr.rel (%p199) target = $region16
        $region15: #{tpu_custom_call.1} parent=11 // pred_region
          %203 = vsyncadd [#allocation7], 0
          %s204 = sshll.u32 %s3, 4
          %s205 = int_to_ptr.hbm [resolvable:$true] %s204
          %s206 = sshll.u32 [#allocation8], 4
          %s207 = int_to_ptr.vmem [resolvable:$true] %s206
          %212 = dma.hbm_to_vmem [thread:$0]  %s205, 8192, %s207, [#allocation7], 64, 64, 4
        $region16: #{tpu_custom_call.1} parent=11 // pred_fallthru
          _
        // Predicated region
        $region17: #{tpu_custom_call.1} parent=11 // pred_check
          %p213 = pneg %p156
        $region18: #{tpu_custom_call.1} parent=11 // pred_check_branch
          %215 = sbr.rel (%p213) target = $region20
        $region19: #{tpu_custom_call.1} parent=11 // pred_region
          _
        $region20: #{tpu_custom_call.1} parent=11 // pred_fallthru
          _
      $region12: #{tpu_custom_call.1} parent=5 // pred_fallthru
        _
      %p216 = scmp.lt.s32.totalorder %s20, 4
      // Predicated region
      $region21: #{tpu_custom_call.1} parent=5 // pred_check
        %p217 = pneg %p216
      $region22: #{tpu_custom_call.1} parent=5 // pred_check_branch
        %219 = sbr.rel (%p217) target = $region24
      $region23: #{tpu_custom_call.1} parent=5 // pred_region
        // Predicated region
        $region25: #{tpu_custom_call.1} parent=23 // pred_check
          %p220 = pneg %p52
        $region26: #{tpu_custom_call.1} parent=23 // pred_check_branch
          %222 = sbr.rel (%p220) target = $region28
        $region27: #{tpu_custom_call.1} parent=23 // pred_region
          %p223 = scmp.lt.s32.totalorder %s27, 1
          %s224 = scalar_select %p223, %s27, 1
          %s225 = smul.addr %s224, 8
          %s226 = smul.addr %s225, 4
          %s227 = scalar_lea.vmem %s0, %s226
        $region28: #{tpu_custom_call.1} parent=23 // pred_fallthru
          _
        // Predicated region
        $region29: #{tpu_custom_call.1} parent=23 // pred_check
          %p228 = pneg %p80
        $region30: #{tpu_custom_call.1} parent=23 // pred_check_branch
          %230 = sbr.rel (%p228) target = $region32
        $region31: #{tpu_custom_call.1} parent=23 // pred_region
          %s231 = sand.u32 %s70, 1
          %s232 = scalar_lea.sflag [#allocation4], %s231
          %s233 = sand.u32 %s70, 1
          %s234 = smul.addr %s233, 128
          %s235 = scalar_lea.vmem [#allocation3], %s234
          %s236 = smul.u32 16, %s28
          %238 = vsyncadd %s232, 0
          %s239 = smul.addr %s27, 64
          %s240 = sadd.s32 %s236, %s239
          %s241 = smul.addr %s240, 4
          %s242 = scalar_lea.hbm %s1, %s241
          %s243 = sshll.u32 %s242, 4
          %s244 = int_to_ptr.hbm [resolvable:$true] %s243
          %s245 = sshll.u32 %s235, 4
          %s246 = int_to_ptr.vmem [resolvable:$true] %s245
          %251 = dma.hbm_to_vmem [thread:$0]  %s244, 2048, %s246, %s232, 2048, 1024, 64
        $region32: #{tpu_custom_call.1} parent=23 // pred_fallthru
          _
        // Predicated region
        $region33: #{tpu_custom_call.1} parent=23 // pred_check
          %p252 = pneg %p108
        $region34: #{tpu_custom_call.1} parent=23 // pred_check_branch
          %254 = sbr.rel (%p252) target = $region36
        $region35: #{tpu_custom_call.1} parent=23 // pred_region
          %s255 = sand.u32 %s20, 1
          %s256 = scalar_lea.sflag [#allocation7], %s255
          %s257 = sand.u32 %s98, 1
          %s258 = smul.addr %s257, 256
          %s259 = scalar_lea.vmem [#allocation6], %s258
          %261 = vsyncadd %s256, 0
          %s262 = smul.addr %s27, 64
          %s263 = sadd.s32 %s28, %s262
          %s264 = smul.addr %s263, 8
          %s265 = scalar_lea.hbm %s2, %s264
          %s266 = sshll.u32 %s265, 4
          %s267 = int_to_ptr.hbm [resolvable:$true] %s266
          %s268 = sshll.u32 %s259, 4
          %s269 = int_to_ptr.vmem [resolvable:$true] %s268
          %274 = dma.hbm_to_vmem [thread:$0]  %s267, 4096, %s269, %s256, 256, 128, 8
        $region36: #{tpu_custom_call.1} parent=23 // pred_fallthru
          _
      $region24: #{tpu_custom_call.1} parent=5 // pred_fallthru
        _
      %p275 = scmp.le.s32.totalorder 1, %s20
      %p276 = scmp.lt.s32.totalorder %s20, 5
      %p277 = pnand %p275, %p276
      %p278 = pneg %p277
      // Predicated region
      $region37: #{tpu_custom_call.1} parent=5 // pred_check
        _
      $region38: #{tpu_custom_call.1} parent=5 // pred_check_branch
        %280 = sbr.rel (%p277) target = $region40
      $region39: #{tpu_custom_call.1} parent=5 // pred_region
        %s281 = ssub.s32 %s20, 1
        %s282 = sand.u32 %s73, 1
        %s283 = scalar_lea.sflag [#allocation4], %s282
        %s284 = sand.u32 %s73, 1
        %s285 = smul.addr %s284, 128
        %s286 = scalar_lea.vmem [#allocation3], %s285
        // Predicated region
        $region41: #{tpu_custom_call.1} parent=39 // pred_check
          %p287 = pneg %p86
        $region42: #{tpu_custom_call.1} parent=39 // pred_check_branch
          %289 = sbr.rel (%p287) target = $region44
        $region43: #{tpu_custom_call.1} parent=39 // pred_region
          %291 = dma.done %s283, 2048
        $region44: #{tpu_custom_call.1} parent=39 // pred_fallthru
          _
        %s292 = sand.u32 %s25, 1
        %s293 = scalar_lea.sflag [#allocation7], %s292
        %s294 = sand.u32 %s101, 1
        %s295 = smul.addr %s294, 256
        %s296 = scalar_lea.vmem [#allocation6], %s295
        // Predicated region
        $region45: #{tpu_custom_call.1} parent=39 // pred_check
          %p297 = pneg %p114
        $region46: #{tpu_custom_call.1} parent=39 // pred_check_branch
          %299 = sbr.rel (%p297) target = $region48
        $region47: #{tpu_custom_call.1} parent=39 // pred_region
          %301 = dma.done %s293, 4096
        $region48: #{tpu_custom_call.1} parent=39 // pred_fallthru
          _
        // Predicated region
        $region49: #{tpu_custom_call.1} parent=39 // pred_check
          %p302 = pneg %p135
        $region50: #{tpu_custom_call.1} parent=39 // pred_check_branch
          %304 = sbr.rel (%p302) target = $region52
        $region51: #{tpu_custom_call.1} parent=39 // pred_region
          %306 = dma.done [#allocation7], 8192
        $region52: #{tpu_custom_call.1} parent=39 // pred_fallthru
          _
        %p307 = scmp.lt.s32.totalorder %s29, 1
        %s308 = scalar_select %p307, %s29, 1
        %s309 = smul.addr %s308, 8
        %s310 = smul.addr %s309, 4
        %s311 = scalar_lea.vmem %s0, %s310
        %p312 = pneg %p58
        %p313 = pneg %p55
        %s314 = sand.u32 %s73, 1
        %s315 = scalar_lea.sflag [#allocation4], %s314
        %s316 = sand.u32 %s73, 1
        %s317 = smul.addr %s316, 128
        %s318 = scalar_lea.vmem [#allocation3], %s317
        %p319 = pneg %p86
        %p320 = pneg %p83
        %s321 = sand.u32 %s25, 1
        %s322 = scalar_lea.sflag [#allocation7], %s321
        %s323 = sand.u32 %s101, 1
        %s324 = smul.addr %s323, 256
        %s325 = scalar_lea.vmem [#allocation6], %s324
        %p326 = pneg %p114
        %p327 = pneg %p111
        %p328 = pneg %p135
        %p329 = pneg %p132
        %p330 = pneg %p156
        %p331 = pneg %p153
        %p332 = pneg %p184
        %p333 = pneg %p181
        %s334 = sand.u32 %s171, 1
        %s335 = scalar_lea.sflag [#allocation5], %s334
        %s336 = sand.u32 %s171, 1
        %s337 = smul.addr %s336, 128
        %s338 = scalar_lea.vmem [#allocation9], %s337
        %p339 = scmp.lt.s32.totalorder %s29, 1
        %s340 = scalar_select %p339, %s29, 1
        %s341 = smul.addr %s340, 8
        %s342 = smul.addr %s341, 4
        %s343 = scalar_lea.vmem %s0, %s342
        %s344 = smul.u32 16, %s30
        %s345 = smul.u32 16, %s30
        %v347 = vld [vmem:[%s343] sm:$0xf]
        %v348 = vld [vmem:[%s343 + $0x4] sm:$0xf]
        %v349 = vld [vmem:[%s343 + $0x8] sm:$0xf]
        %v350 = vld [vmem:[%s343 + $0xc] sm:$0xf]
        %v351 = vld [vmem:[%s343 + $0x10] sm:$0xf]
        %v352 = vld [vmem:[%s343 + $0x14] sm:$0xf]
        %v353 = vld [vmem:[%s343 + $0x18] sm:$0xf]
        %v354 = vld [vmem:[%s343 + $0x1c] sm:$0xf]
        %v355 = vld [vmem:[%s286] sm:$0xff]
        %v356 = vld [vmem:[%s286 + $0x8] sm:$0xff]
        %v357 = vld [vmem:[%s286 + $0x10] sm:$0xff]
        %v358 = vld [vmem:[%s286 + $0x18] sm:$0xff]
        %v359 = vld [vmem:[%s286 + $0x20] sm:$0xff]
        %v360 = vld [vmem:[%s286 + $0x28] sm:$0xff]
        %v361 = vld [vmem:[%s286 + $0x30] sm:$0xff]
        %v362 = vld [vmem:[%s286 + $0x38] sm:$0xff]
        %v363 = vld [vmem:[%s286 + $0x40] sm:$0xff]
        %v364 = vld [vmem:[%s286 + $0x48] sm:$0xff]
        %v365 = vld [vmem:[%s286 + $0x50] sm:$0xff]
        %v366 = vld [vmem:[%s286 + $0x58] sm:$0xff]
        %v367 = vld [vmem:[%s286 + $0x60] sm:$0xff]
        %v368 = vld [vmem:[%s286 + $0x68] sm:$0xff]
        %v369 = vld [vmem:[%s286 + $0x70] sm:$0xff]
        %v370 = vld [vmem:[%s286 + $0x78] sm:$0xff]
        %v379 = vunpack.c.l.b16 %v347
        %v380 = vunpack.c.l.b16 %v348
        %v381 = vunpack.c.l.b16 %v349
        %v382 = vunpack.c.l.b16 %v350
        %v383 = vunpack.c.l.b16 %v351
        %v384 = vunpack.c.l.b16 %v352
        %v385 = vunpack.c.l.b16 %v353
        %v386 = vunpack.c.l.b16 %v354
        %v387 = vpack.c.b16 %v380, %v379
        %v388 = vpack.c.b16 %v382, %v381
        %v389 = vpack.c.b16 %v384, %v383
        %v390 = vpack.c.b16 %v386, %v385
        %v407 = vunpack.c.l.b16 %v355
        %v408 = vunpack.c.h.b16 %v355
        %v409 = vunpack.c.l.b16 %v356
        %v410 = vunpack.c.h.b16 %v356
        %v411 = vunpack.c.l.b16 %v357
        %v412 = vunpack.c.h.b16 %v357
        %v413 = vunpack.c.l.b16 %v358
        %v414 = vunpack.c.h.b16 %v358
        %v415 = vunpack.c.l.b16 %v359
        %v416 = vunpack.c.h.b16 %v359
        %v417 = vunpack.c.l.b16 %v360
        %v418 = vunpack.c.h.b16 %v360
        %v419 = vunpack.c.l.b16 %v361
        %v420 = vunpack.c.h.b16 %v361
        %v421 = vunpack.c.l.b16 %v362
        %v422 = vunpack.c.h.b16 %v362
        %v423 = vunpack.c.l.b16 %v363
        %v424 = vunpack.c.h.b16 %v363
        %v425 = vunpack.c.l.b16 %v364
        %v426 = vunpack.c.h.b16 %v364
        %v427 = vunpack.c.l.b16 %v365
        %v428 = vunpack.c.h.b16 %v365
        %v429 = vunpack.c.l.b16 %v366
        %v430 = vunpack.c.h.b16 %v366
        %v431 = vunpack.c.l.b16 %v367
        %v432 = vunpack.c.h.b16 %v367
        %v433 = vunpack.c.l.b16 %v368
        %v434 = vunpack.c.h.b16 %v368
        %v435 = vunpack.c.l.b16 %v369
        %v436 = vunpack.c.h.b16 %v369
        %v437 = vunpack.c.l.b16 %v370
        %v438 = vunpack.c.h.b16 %v370
        %v439 = vpack.c.b16 %v423, %v407
        %v440 = vpack.c.b16 %v424, %v408
        %v441 = vpack.c.b16 %v425, %v409
        %v442 = vpack.c.b16 %v426, %v410
        %v443 = vpack.c.b16 %v427, %v411
        %v444 = vpack.c.b16 %v428, %v412
        %v445 = vpack.c.b16 %v429, %v413
        %v446 = vpack.c.b16 %v430, %v414
        %v447 = vpack.c.b16 %v431, %v415
        %v448 = vpack.c.b16 %v432, %v416
        %v449 = vpack.c.b16 %v433, %v417
        %v450 = vpack.c.b16 %v434, %v418
        %v451 = vpack.c.b16 %v435, %v419
        %v452 = vpack.c.b16 %v436, %v420
        %v453 = vpack.c.b16 %v437, %v421
        %v454 = vpack.c.b16 %v438, %v422
        %vm471 = vcmask 130048
        %v473 = vsel %vm471, %v387, 0
        %v476 = vsel %vm471, %v388, 0
        %v479 = vsel %vm471, %v389, 0
        %v482 = vsel %vm471, %v390, 0
        %484 = vmatpush.bf16.msra.mxu0 0
        %485 = vmatpush.bf16.msra.mxu0 0
        %486 = vmatpush.bf16.msra.mxu0 0
        %487 = vmatpush.bf16.msra.mxu0 0
        %488 = vmatpush.bf16.msra.mxu0 0
        %489 = vmatpush.bf16.msra.mxu0 0
        %490 = vmatpush.bf16.msra.mxu0 0
        %491 = vmatpush.bf16.msra.mxu0 %v439
        %492 = vmatmul.bf16.gmra.mxu0 %v473
        %v493 = vpop.f32.mrf.mxu0
        %v494 = vadd.f32 0.0, %v493
        %v495 = vpop.f32.mrf.mxu0
        %v496 = vadd.f32 0.0, %v495
        %497 = vmatmul.bf16.gmra.mxu0 %v476
        %v498 = vpop.f32.mrf.mxu0
        %v499 = vadd.f32 0.0, %v498
        %v500 = vpop.f32.mrf.mxu0
        %v501 = vadd.f32 0.0, %v500
        %502 = vmatmul.bf16.gmra.mxu0 %v479
        %v503 = vpop.f32.mrf.mxu0
        %v504 = vadd.f32 0.0, %v503
        %v505 = vpop.f32.mrf.mxu0
        %v506 = vadd.f32 0.0, %v505
        %507 = vmatmul.bf16.gmra.mxu0 %v482
        %v508 = vpop.f32.mrf.mxu0
        %v509 = vadd.f32 0.0, %v508
        %v510 = vpop.f32.mrf.mxu0
        %v511 = vadd.f32 0.0, %v510
        %512 = vdwg.mxu0
        %513 = vmatpush.bf16.msra.mxu0 0
        %514 = vmatpush.bf16.msra.mxu0 0
        %515 = vmatpush.bf16.msra.mxu0 0
        %516 = vmatpush.bf16.msra.mxu0 0
        %517 = vmatpush.bf16.msra.mxu0 0
        %518 = vmatpush.bf16.msra.mxu0 0
        %519 = vmatpush.bf16.msra.mxu0 0
        %520 = vmatpush.bf16.msra.mxu0 %v440
        %521 = vmatmul.bf16.gmra.mxu0 %v473
        %v522 = vpop.f32.mrf.mxu0
        %v523 = vadd.f32 0.0, %v522
        %v524 = vpop.f32.mrf.mxu0
        %v525 = vadd.f32 0.0, %v524
        %526 = vmatmul.bf16.gmra.mxu0 %v476
        %v527 = vpop.f32.mrf.mxu0
        %v528 = vadd.f32 0.0, %v527
        %v529 = vpop.f32.mrf.mxu0
        %v530 = vadd.f32 0.0, %v529
        %531 = vmatmul.bf16.gmra.mxu0 %v479
        %v532 = vpop.f32.mrf.mxu0
        %v533 = vadd.f32 0.0, %v532
        %v534 = vpop.f32.mrf.mxu0
        %v535 = vadd.f32 0.0, %v534
        %536 = vmatmul.bf16.gmra.mxu0 %v482
        %v537 = vpop.f32.mrf.mxu0
        %v538 = vadd.f32 0.0, %v537
        %v539 = vpop.f32.mrf.mxu0
        %v540 = vadd.f32 0.0, %v539
        %541 = vdwg.mxu0
        %542 = vmatpush.bf16.msra.mxu0 0
        %543 = vmatpush.bf16.msra.mxu0 0
        %544 = vmatpush.bf16.msra.mxu0 0
        %545 = vmatpush.bf16.msra.mxu0 0
        %546 = vmatpush.bf16.msra.mxu0 0
        %547 = vmatpush.bf16.msra.mxu0 0
        %548 = vmatpush.bf16.msra.mxu0 0
        %549 = vmatpush.bf16.msra.mxu0 %v441
        %550 = vmatmul.bf16.gmra.mxu0 %v473
        %v551 = vpop.f32.mrf.mxu0
        %v552 = vadd.f32 0.0, %v551
        %v553 = vpop.f32.mrf.mxu0
        %v554 = vadd.f32 0.0, %v553
        %555 = vmatmul.bf16.gmra.mxu0 %v476
        %v556 = vpop.f32.mrf.mxu0
        %v557 = vadd.f32 0.0, %v556
        %v558 = vpop.f32.mrf.mxu0
        %v559 = vadd.f32 0.0, %v558
        %560 = vmatmul.bf16.gmra.mxu0 %v479
        %v561 = vpop.f32.mrf.mxu0
        %v562 = vadd.f32 0.0, %v561
        %v563 = vpop.f32.mrf.mxu0
        %v564 = vadd.f32 0.0, %v563
        %565 = vmatmul.bf16.gmra.mxu0 %v482
        %v566 = vpop.f32.mrf.mxu0
        %v567 = vadd.f32 0.0, %v566
        %v568 = vpop.f32.mrf.mxu0
        %v569 = vadd.f32 0.0, %v568
        %570 = vdwg.mxu0
        %571 = vmatpush.bf16.msra.mxu0 0
        %572 = vmatpush.bf16.msra.mxu0 0
        %573 = vmatpush.bf16.msra.mxu0 0
        %574 = vmatpush.bf16.msra.mxu0 0
        %575 = vmatpush.bf16.msra.mxu0 0
        %576 = vmatpush.bf16.msra.mxu0 0
        %577 = vmatpush.bf16.msra.mxu0 0
        %578 = vmatpush.bf16.msra.mxu0 %v442
        %579 = vmatmul.bf16.gmra.mxu0 %v473
        %v580 = vpop.f32.mrf.mxu0
        %v581 = vadd.f32 0.0, %v580
        %v582 = vpop.f32.mrf.mxu0
        %v583 = vadd.f32 0.0, %v582
        %584 = vmatmul.bf16.gmra.mxu0 %v476
        %v585 = vpop.f32.mrf.mxu0
        %v586 = vadd.f32 0.0, %v585
        %v587 = vpop.f32.mrf.mxu0
        %v588 = vadd.f32 0.0, %v587
        %589 = vmatmul.bf16.gmra.mxu0 %v479
        %v590 = vpop.f32.mrf.mxu0
        %v591 = vadd.f32 0.0, %v590
        %v592 = vpop.f32.mrf.mxu0
        %v593 = vadd.f32 0.0, %v592
        %594 = vmatmul.bf16.gmra.mxu0 %v482
        %v595 = vpop.f32.mrf.mxu0
        %v596 = vadd.f32 0.0, %v595
        %v597 = vpop.f32.mrf.mxu0
        %v598 = vadd.f32 0.0, %v597
        %599 = vdwg.mxu0
        %600 = vmatpush.bf16.msra.mxu0 0
        %601 = vmatpush.bf16.msra.mxu0 0
        %602 = vmatpush.bf16.msra.mxu0 0
        %603 = vmatpush.bf16.msra.mxu0 0
        %604 = vmatpush.bf16.msra.mxu0 0
        %605 = vmatpush.bf16.msra.mxu0 0
        %606 = vmatpush.bf16.msra.mxu0 0
        %607 = vmatpush.bf16.msra.mxu0 %v443
        %608 = vmatmul.bf16.gmra.mxu0 %v473
        %v609 = vpop.f32.mrf.mxu0
        %v610 = vadd.f32 0.0, %v609
        %v611 = vpop.f32.mrf.mxu0
        %v612 = vadd.f32 0.0, %v611
        %613 = vmatmul.bf16.gmra.mxu0 %v476
        %v614 = vpop.f32.mrf.mxu0
        %v615 = vadd.f32 0.0, %v614
        %v616 = vpop.f32.mrf.mxu0
        %v617 = vadd.f32 0.0, %v616
        %618 = vmatmul.bf16.gmra.mxu0 %v479
        %v619 = vpop.f32.mrf.mxu0
        %v620 = vadd.f32 0.0, %v619
        %v621 = vpop.f32.mrf.mxu0
        %v622 = vadd.f32 0.0, %v621
        %623 = vmatmul.bf16.gmra.mxu0 %v482
        %v624 = vpop.f32.mrf.mxu0
        %v625 = vadd.f32 0.0, %v624
        %v626 = vpop.f32.mrf.mxu0
        %v627 = vadd.f32 0.0, %v626
        %628 = vdwg.mxu0
        %629 = vmatpush.bf16.msra.mxu0 0
        %630 = vmatpush.bf16.msra.mxu0 0
        %631 = vmatpush.bf16.msra.mxu0 0
        %632 = vmatpush.bf16.msra.mxu0 0
        %633 = vmatpush.bf16.msra.mxu0 0
        %634 = vmatpush.bf16.msra.mxu0 0
        %635 = vmatpush.bf16.msra.mxu0 0
        %636 = vmatpush.bf16.msra.mxu0 %v444
        %637 = vmatmul.bf16.gmra.mxu0 %v473
        %v638 = vpop.f32.mrf.mxu0
        %v639 = vadd.f32 0.0, %v638
        %v640 = vpop.f32.mrf.mxu0
        %v641 = vadd.f32 0.0, %v640
        %642 = vmatmul.bf16.gmra.mxu0 %v476
        %v643 = vpop.f32.mrf.mxu0
        %v644 = vadd.f32 0.0, %v643
        %v645 = vpop.f32.mrf.mxu0
        %v646 = vadd.f32 0.0, %v645
        %647 = vmatmul.bf16.gmra.mxu0 %v479
        %v648 = vpop.f32.mrf.mxu0
        %v649 = vadd.f32 0.0, %v648
        %v650 = vpop.f32.mrf.mxu0
        %v651 = vadd.f32 0.0, %v650
        %652 = vmatmul.bf16.gmra.mxu0 %v482
        %v653 = vpop.f32.mrf.mxu0
        %v654 = vadd.f32 0.0, %v653
        %v655 = vpop.f32.mrf.mxu0
        %v656 = vadd.f32 0.0, %v655
        %657 = vdwg.mxu0
        %658 = vmatpush.bf16.msra.mxu0 0
        %659 = vmatpush.bf16.msra.mxu0 0
        %660 = vmatpush.bf16.msra.mxu0 0
        %661 = vmatpush.bf16.msra.mxu0 0
        %662 = vmatpush.bf16.msra.mxu0 0
        %663 = vmatpush.bf16.msra.mxu0 0
        %664 = vmatpush.bf16.msra.mxu0 0
        %665 = vmatpush.bf16.msra.mxu0 %v445
        %666 = vmatmul.bf16.gmra.mxu0 %v473
        %v667 = vpop.f32.mrf.mxu0
        %v668 = vadd.f32 0.0, %v667
        %v669 = vpop.f32.mrf.mxu0
        %v670 = vadd.f32 0.0, %v669
        %671 = vmatmul.bf16.gmra.mxu0 %v476
        %v672 = vpop.f32.mrf.mxu0
        %v673 = vadd.f32 0.0, %v672
        %v674 = vpop.f32.mrf.mxu0
        %v675 = vadd.f32 0.0, %v674
        %676 = vmatmul.bf16.gmra.mxu0 %v479
        %v677 = vpop.f32.mrf.mxu0
        %v678 = vadd.f32 0.0, %v677
        %v679 = vpop.f32.mrf.mxu0
        %v680 = vadd.f32 0.0, %v679
        %681 = vmatmul.bf16.gmra.mxu0 %v482
        %v682 = vpop.f32.mrf.mxu0
        %v683 = vadd.f32 0.0, %v682
        %v684 = vpop.f32.mrf.mxu0
        %v685 = vadd.f32 0.0, %v684
        %686 = vdwg.mxu0
        %687 = vmatpush.bf16.msra.mxu0 0
        %688 = vmatpush.bf16.msra.mxu0 0
        %689 = vmatpush.bf16.msra.mxu0 0
        %690 = vmatpush.bf16.msra.mxu0 0
        %691 = vmatpush.bf16.msra.mxu0 0
        %692 = vmatpush.bf16.msra.mxu0 0
        %693 = vmatpush.bf16.msra.mxu0 0
        %694 = vmatpush.bf16.msra.mxu0 %v446
        %695 = vmatmul.bf16.gmra.mxu0 %v473
        %v696 = vpop.f32.mrf.mxu0
        %v697 = vadd.f32 0.0, %v696
        %v698 = vpop.f32.mrf.mxu0
        %v699 = vadd.f32 0.0, %v698
        %700 = vmatmul.bf16.gmra.mxu0 %v476
        %v701 = vpop.f32.mrf.mxu0
        %v702 = vadd.f32 0.0, %v701
        %v703 = vpop.f32.mrf.mxu0
        %v704 = vadd.f32 0.0, %v703
        %705 = vmatmul.bf16.gmra.mxu0 %v479
        %v706 = vpop.f32.mrf.mxu0
        %v707 = vadd.f32 0.0, %v706
        %v708 = vpop.f32.mrf.mxu0
        %v709 = vadd.f32 0.0, %v708
        %710 = vmatmul.bf16.gmra.mxu0 %v482
        %v711 = vpop.f32.mrf.mxu0
        %v712 = vadd.f32 0.0, %v711
        %v713 = vpop.f32.mrf.mxu0
        %v714 = vadd.f32 0.0, %v713
        %715 = vdwg.mxu0
        %716 = vmatpush.bf16.msra.mxu0 0
        %717 = vmatpush.bf16.msra.mxu0 0
        %718 = vmatpush.bf16.msra.mxu0 0
        %719 = vmatpush.bf16.msra.mxu0 0
        %720 = vmatpush.bf16.msra.mxu0 0
        %721 = vmatpush.bf16.msra.mxu0 0
        %722 = vmatpush.bf16.msra.mxu0 0
        %723 = vmatpush.bf16.msra.mxu0 %v447
        %724 = vmatmul.bf16.gmra.mxu0 %v473
        %v725 = vpop.f32.mrf.mxu0
        %v726 = vadd.f32 0.0, %v725
        %v727 = vpop.f32.mrf.mxu0
        %v728 = vadd.f32 0.0, %v727
        %729 = vmatmul.bf16.gmra.mxu0 %v476
        %v730 = vpop.f32.mrf.mxu0
        %v731 = vadd.f32 0.0, %v730
        %v732 = vpop.f32.mrf.mxu0
        %v733 = vadd.f32 0.0, %v732
        %734 = vmatmul.bf16.gmra.mxu0 %v479
        %v735 = vpop.f32.mrf.mxu0
        %v736 = vadd.f32 0.0, %v735
        %v737 = vpop.f32.mrf.mxu0
        %v738 = vadd.f32 0.0, %v737
        %739 = vmatmul.bf16.gmra.mxu0 %v482
        %v740 = vpop.f32.mrf.mxu0
        %v741 = vadd.f32 0.0, %v740
        %v742 = vpop.f32.mrf.mxu0
        %v743 = vadd.f32 0.0, %v742
        %744 = vdwg.mxu0
        %745 = vmatpush.bf16.msra.mxu0 0
        %746 = vmatpush.bf16.msra.mxu0 0
        %747 = vmatpush.bf16.msra.mxu0 0
        %748 = vmatpush.bf16.msra.mxu0 0
        %749 = vmatpush.bf16.msra.mxu0 0
        %750 = vmatpush.bf16.msra.mxu0 0
        %751 = vmatpush.bf16.msra.mxu0 0
        %752 = vmatpush.bf16.msra.mxu0 %v448
        %753 = vmatmul.bf16.gmra.mxu0 %v473
        %v754 = vpop.f32.mrf.mxu0
        %v755 = vadd.f32 0.0, %v754
        %v756 = vpop.f32.mrf.mxu0
        %v757 = vadd.f32 0.0, %v756
        %758 = vmatmul.bf16.gmra.mxu0 %v476
        %v759 = vpop.f32.mrf.mxu0
        %v760 = vadd.f32 0.0, %v759
        %v761 = vpop.f32.mrf.mxu0
        %v762 = vadd.f32 0.0, %v761
        %763 = vmatmul.bf16.gmra.mxu0 %v479
        %v764 = vpop.f32.mrf.mxu0
        %v765 = vadd.f32 0.0, %v764
        %v766 = vpop.f32.mrf.mxu0
        %v767 = vadd.f32 0.0, %v766
        %768 = vmatmul.bf16.gmra.mxu0 %v482
        %v769 = vpop.f32.mrf.mxu0
        %v770 = vadd.f32 0.0, %v769
        %v771 = vpop.f32.mrf.mxu0
        %v772 = vadd.f32 0.0, %v771
        %773 = vdwg.mxu0
        %774 = vmatpush.bf16.msra.mxu0 0
        %775 = vmatpush.bf16.msra.mxu0 0
        %776 = vmatpush.bf16.msra.mxu0 0
        %777 = vmatpush.bf16.msra.mxu0 0
        %778 = vmatpush.bf16.msra.mxu0 0
        %779 = vmatpush.bf16.msra.mxu0 0
        %780 = vmatpush.bf16.msra.mxu0 0
        %781 = vmatpush.bf16.msra.mxu0 %v449
        %782 = vmatmul.bf16.gmra.mxu0 %v473
        %v783 = vpop.f32.mrf.mxu0
        %v784 = vadd.f32 0.0, %v783
        %v785 = vpop.f32.mrf.mxu0
        %v786 = vadd.f32 0.0, %v785
        %787 = vmatmul.bf16.gmra.mxu0 %v476
        %v788 = vpop.f32.mrf.mxu0
        %v789 = vadd.f32 0.0, %v788
        %v790 = vpop.f32.mrf.mxu0
        %v791 = vadd.f32 0.0, %v790
        %792 = vmatmul.bf16.gmra.mxu0 %v479
        %v793 = vpop.f32.mrf.mxu0
        %v794 = vadd.f32 0.0, %v793
        %v795 = vpop.f32.mrf.mxu0
        %v796 = vadd.f32 0.0, %v795
        %797 = vmatmul.bf16.gmra.mxu0 %v482
        %v798 = vpop.f32.mrf.mxu0
        %v799 = vadd.f32 0.0, %v798
        %v800 = vpop.f32.mrf.mxu0
        %v801 = vadd.f32 0.0, %v800
        %802 = vdwg.mxu0
        %803 = vmatpush.bf16.msra.mxu0 0
        %804 = vmatpush.bf16.msra.mxu0 0
        %805 = vmatpush.bf16.msra.mxu0 0
        %806 = vmatpush.bf16.msra.mxu0 0
        %807 = vmatpush.bf16.msra.mxu0 0
        %808 = vmatpush.bf16.msra.mxu0 0
        %809 = vmatpush.bf16.msra.mxu0 0
        %810 = vmatpush.bf16.msra.mxu0 %v450
        %811 = vmatmul.bf16.gmra.mxu0 %v473
        %v812 = vpop.f32.mrf.mxu0
        %v813 = vadd.f32 0.0, %v812
        %v814 = vpop.f32.mrf.mxu0
        %v815 = vadd.f32 0.0, %v814
        %816 = vmatmul.bf16.gmra.mxu0 %v476
        %v817 = vpop.f32.mrf.mxu0
        %v818 = vadd.f32 0.0, %v817
        %v819 = vpop.f32.mrf.mxu0
        %v820 = vadd.f32 0.0, %v819
        %821 = vmatmul.bf16.gmra.mxu0 %v479
        %v822 = vpop.f32.mrf.mxu0
        %v823 = vadd.f32 0.0, %v822
        %v824 = vpop.f32.mrf.mxu0
        %v825 = vadd.f32 0.0, %v824
        %826 = vmatmul.bf16.gmra.mxu0 %v482
        %v827 = vpop.f32.mrf.mxu0
        %v828 = vadd.f32 0.0, %v827
        %v829 = vpop.f32.mrf.mxu0
        %v830 = vadd.f32 0.0, %v829
        %831 = vdwg.mxu0
        %832 = vmatpush.bf16.msra.mxu0 0
        %833 = vmatpush.bf16.msra.mxu0 0
        %834 = vmatpush.bf16.msra.mxu0 0
        %835 = vmatpush.bf16.msra.mxu0 0
        %836 = vmatpush.bf16.msra.mxu0 0
        %837 = vmatpush.bf16.msra.mxu0 0
        %838 = vmatpush.bf16.msra.mxu0 0
        %839 = vmatpush.bf16.msra.mxu0 %v451
        %840 = vmatmul.bf16.gmra.mxu0 %v473
        %v841 = vpop.f32.mrf.mxu0
        %v842 = vadd.f32 0.0, %v841
        %v843 = vpop.f32.mrf.mxu0
        %v844 = vadd.f32 0.0, %v843
        %845 = vmatmul.bf16.gmra.mxu0 %v476
        %v846 = vpop.f32.mrf.mxu0
        %v847 = vadd.f32 0.0, %v846
        %v848 = vpop.f32.mrf.mxu0
        %v849 = vadd.f32 0.0, %v848
        %850 = vmatmul.bf16.gmra.mxu0 %v479
        %v851 = vpop.f32.mrf.mxu0
        %v852 = vadd.f32 0.0, %v851
        %v853 = vpop.f32.mrf.mxu0
        %v854 = vadd.f32 0.0, %v853
        %855 = vmatmul.bf16.gmra.mxu0 %v482
        %v856 = vpop.f32.mrf.mxu0
        %v857 = vadd.f32 0.0, %v856
        %v858 = vpop.f32.mrf.mxu0
        %v859 = vadd.f32 0.0, %v858
        %860 = vdwg.mxu0
        %861 = vmatpush.bf16.msra.mxu0 0
        %862 = vmatpush.bf16.msra.mxu0 0
        %863 = vmatpush.bf16.msra.mxu0 0
        %864 = vmatpush.bf16.msra.mxu0 0
        %865 = vmatpush.bf16.msra.mxu0 0
        %866 = vmatpush.bf16.msra.mxu0 0
        %867 = vmatpush.bf16.msra.mxu0 0
        %868 = vmatpush.bf16.msra.mxu0 %v452
        %869 = vmatmul.bf16.gmra.mxu0 %v473
        %v870 = vpop.f32.mrf.mxu0
        %v871 = vadd.f32 0.0, %v870
        %v872 = vpop.f32.mrf.mxu0
        %v873 = vadd.f32 0.0, %v872
        %874 = vmatmul.bf16.gmra.mxu0 %v476
        %v875 = vpop.f32.mrf.mxu0
        %v876 = vadd.f32 0.0, %v875
        %v877 = vpop.f32.mrf.mxu0
        %v878 = vadd.f32 0.0, %v877
        %879 = vmatmul.bf16.gmra.mxu0 %v479
        %v880 = vpop.f32.mrf.mxu0
        %v881 = vadd.f32 0.0, %v880
        %v882 = vpop.f32.mrf.mxu0
        %v883 = vadd.f32 0.0, %v882
        %884 = vmatmul.bf16.gmra.mxu0 %v482
        %v885 = vpop.f32.mrf.mxu0
        %v886 = vadd.f32 0.0, %v885
        %v887 = vpop.f32.mrf.mxu0
        %v888 = vadd.f32 0.0, %v887
        %889 = vdwg.mxu0
        %890 = vmatpush.bf16.msra.mxu0 0
        %891 = vmatpush.bf16.msra.mxu0 0
        %892 = vmatpush.bf16.msra.mxu0 0
        %893 = vmatpush.bf16.msra.mxu0 0
        %894 = vmatpush.bf16.msra.mxu0 0
        %895 = vmatpush.bf16.msra.mxu0 0
        %896 = vmatpush.bf16.msra.mxu0 0
        %897 = vmatpush.bf16.msra.mxu0 %v453
        %898 = vmatmul.bf16.gmra.mxu0 %v473
        %v899 = vpop.f32.mrf.mxu0
        %v900 = vadd.f32 0.0, %v899
        %v901 = vpop.f32.mrf.mxu0
        %v902 = vadd.f32 0.0, %v901
        %903 = vmatmul.bf16.gmra.mxu0 %v476
        %v904 = vpop.f32.mrf.mxu0
        %v905 = vadd.f32 0.0, %v904
        %v906 = vpop.f32.mrf.mxu0
        %v907 = vadd.f32 0.0, %v906
        %908 = vmatmul.bf16.gmra.mxu0 %v479
        %v909 = vpop.f32.mrf.mxu0
        %v910 = vadd.f32 0.0, %v909
        %v911 = vpop.f32.mrf.mxu0
        %v912 = vadd.f32 0.0, %v911
        %913 = vmatmul.bf16.gmra.mxu0 %v482
        %v914 = vpop.f32.mrf.mxu0
        %v915 = vadd.f32 0.0, %v914
        %v916 = vpop.f32.mrf.mxu0
        %v917 = vadd.f32 0.0, %v916
        %918 = vdwg.mxu0
        %919 = vmatpush.bf16.msra.mxu0 0
        %920 = vmatpush.bf16.msra.mxu0 0
        %921 = vmatpush.bf16.msra.mxu0 0
        %922 = vmatpush.bf16.msra.mxu0 0
        %923 = vmatpush.bf16.msra.mxu0 0
        %924 = vmatpush.bf16.msra.mxu0 0
        %925 = vmatpush.bf16.msra.mxu0 0
        %926 = vmatpush.bf16.msra.mxu0 %v454
        %927 = vmatmul.bf16.gmra.mxu0 %v473
        %v928 = vpop.f32.mrf.mxu0
        %v929 = vadd.f32 0.0, %v928
        %v930 = vpop.f32.mrf.mxu0
        %v931 = vadd.f32 0.0, %v930
        %932 = vmatmul.bf16.gmra.mxu0 %v476
        %v933 = vpop.f32.mrf.mxu0
        %v934 = vadd.f32 0.0, %v933
        %v935 = vpop.f32.mrf.mxu0
        %v936 = vadd.f32 0.0, %v935
        %937 = vmatmul.bf16.gmra.mxu0 %v479
        %v938 = vpop.f32.mrf.mxu0
        %v939 = vadd.f32 0.0, %v938
        %v940 = vpop.f32.mrf.mxu0
        %v941 = vadd.f32 0.0, %v940
        %942 = vmatmul.bf16.gmra.mxu0 %v482
        %v943 = vpop.f32.mrf.mxu0
        %v944 = vadd.f32 0.0, %v943
        %v945 = vpop.f32.mrf.mxu0
        %v946 = vadd.f32 0.0, %v945
        %947 = vdwg.mxu0
        %v948 = vld [vmem:[%s296] sm:$0xff]
        %v949 = vld [vmem:[%s296 + $0x8] sm:$0xff]
        %v950 = vmul.f32 %v494, %v948
        %v951 = vmul.f32 %v496, %v949
        %v952 = vmul.f32 %v499, %v948
        %v953 = vmul.f32 %v501, %v949
        %v954 = vmul.f32 %v504, %v948
        %v955 = vmul.f32 %v506, %v949
        %v956 = vmul.f32 %v509, %v948
        %v957 = vmul.f32 %v511, %v949
        %v958 = vpack.c.bf16 %v950, %v950
        %v959 = vpack.c.bf16 %v951, %v951
        %v960 = vpack.c.bf16 %v952, %v952
        %v961 = vpack.c.bf16 %v953, %v953
        %v962 = vpack.c.bf16 %v954, %v954
        %v963 = vpack.c.bf16 %v955, %v955
        %v964 = vpack.c.bf16 %v956, %v956
        %v965 = vpack.c.bf16 %v957, %v957
        %966 = vst [vmem:[#allocation2] sm:$0xf] %v958
        %967 = vst [vmem:[#allocation2 + $0x4] sm:$0xf] %v959
        %968 = vst [vmem:[#allocation2 + $0x8] sm:$0xf] %v960
        %969 = vst [vmem:[#allocation2 + $0xc] sm:$0xf] %v961
        %970 = vst [vmem:[#allocation2 + $0x10] sm:$0xf] %v962
        %971 = vst [vmem:[#allocation2 + $0x14] sm:$0xf] %v963
        %972 = vst [vmem:[#allocation2 + $0x18] sm:$0xf] %v964
        %973 = vst [vmem:[#allocation2 + $0x1c] sm:$0xf] %v965
        %s974 = scalar_lea.vmem %s296, 16 [#allocation6]
        %v975 = vld [vmem:[%s974] sm:$0xff]
        %v976 = vld [vmem:[%s974 + $0x8] sm:$0xff]
        %v977 = vmul.f32 %v523, %v975
        %v978 = vmul.f32 %v525, %v976
        %v979 = vmul.f32 %v528, %v975
        %v980 = vmul.f32 %v530, %v976
        %v981 = vmul.f32 %v533, %v975
        %v982 = vmul.f32 %v535, %v976
        %v983 = vmul.f32 %v538, %v975
        %v984 = vmul.f32 %v540, %v976
        %v985 = vpack.c.bf16 %v977, %v977
        %v986 = vpack.c.bf16 %v978, %v978
        %v987 = vpack.c.bf16 %v979, %v979
        %v988 = vpack.c.bf16 %v980, %v980
        %v989 = vpack.c.bf16 %v981, %v981
        %v990 = vpack.c.bf16 %v982, %v982
        %v991 = vpack.c.bf16 %v983, %v983
        %v992 = vpack.c.bf16 %v984, %v984
        %993 = vst [vmem:[#allocation2 + $0x20] sm:$0xf] %v985
        %994 = vst [vmem:[#allocation2 + $0x24] sm:$0xf] %v986
        %995 = vst [vmem:[#allocation2 + $0x28] sm:$0xf] %v987
        %996 = vst [vmem:[#allocation2 + $0x2c] sm:$0xf] %v988
        %997 = vst [vmem:[#allocation2 + $0x30] sm:$0xf] %v989
        %998 = vst [vmem:[#allocation2 + $0x34] sm:$0xf] %v990
        %999 = vst [vmem:[#allocation2 + $0x38] sm:$0xf] %v991
        %1000 = vst [vmem:[#allocation2 + $0x3c] sm:$0xf] %v992
        %s1001 = scalar_lea.vmem %s296, 32 [#allocation6]
        %v1002 = vld [vmem:[%s1001] sm:$0xff]
        %v1003 = vld [vmem:[%s1001 + $0x8] sm:$0xff]
        %v1004 = vmul.f32 %v552, %v1002
        %v1005 = vmul.f32 %v554, %v1003
        %v1006 = vmul.f32 %v557, %v1002
        %v1007 = vmul.f32 %v559, %v1003
        %v1008 = vmul.f32 %v562, %v1002
        %v1009 = vmul.f32 %v564, %v1003
        %v1010 = vmul.f32 %v567, %v1002
        %v1011 = vmul.f32 %v569, %v1003
        %v1012 = vpack.c.bf16 %v1004, %v1004
        %v1013 = vpack.c.bf16 %v1005, %v1005
        %v1014 = vpack.c.bf16 %v1006, %v1006
        %v1015 = vpack.c.bf16 %v1007, %v1007
        %v1016 = vpack.c.bf16 %v1008, %v1008
        %v1017 = vpack.c.bf16 %v1009, %v1009
        %v1018 = vpack.c.bf16 %v1010, %v1010
        %v1019 = vpack.c.bf16 %v1011, %v1011
        %1020 = vst [vmem:[#allocation2 + $0x40] sm:$0xf] %v1012
        %1021 = vst [vmem:[#allocation2 + $0x44] sm:$0xf] %v1013
        %1022 = vst [vmem:[#allocation2 + $0x48] sm:$0xf] %v1014
        %1023 = vst [vmem:[#allocation2 + $0x4c] sm:$0xf] %v1015
        %1024 = vst [vmem:[#allocation2 + $0x50] sm:$0xf] %v1016
        %1025 = vst [vmem:[#allocation2 + $0x54] sm:$0xf] %v1017
        %1026 = vst [vmem:[#allocation2 + $0x58] sm:$0xf] %v1018
        %1027 = vst [vmem:[#allocation2 + $0x5c] sm:$0xf] %v1019
        %s1028 = scalar_lea.vmem %s296, 48 [#allocation6]
        %v1029 = vld [vmem:[%s1028] sm:$0xff]
        %v1030 = vld [vmem:[%s1028 + $0x8] sm:$0xff]
        %v1031 = vmul.f32 %v581, %v1029
        %v1032 = vmul.f32 %v583, %v1030
        %v1033 = vmul.f32 %v586, %v1029
        %v1034 = vmul.f32 %v588, %v1030
        %v1035 = vmul.f32 %v591, %v1029
        %v1036 = vmul.f32 %v593, %v1030
        %v1037 = vmul.f32 %v596, %v1029
        %v1038 = vmul.f32 %v598, %v1030
        %v1039 = vpack.c.bf16 %v1031, %v1031
        %v1040 = vpack.c.bf16 %v1032, %v1032
        %v1041 = vpack.c.bf16 %v1033, %v1033
        %v1042 = vpack.c.bf16 %v1034, %v1034
        %v1043 = vpack.c.bf16 %v1035, %v1035
        %v1044 = vpack.c.bf16 %v1036, %v1036
        %v1045 = vpack.c.bf16 %v1037, %v1037
        %v1046 = vpack.c.bf16 %v1038, %v1038
        %1047 = vst [vmem:[#allocation2 + $0x60] sm:$0xf] %v1039
        %1048 = vst [vmem:[#allocation2 + $0x64] sm:$0xf] %v1040
        %1049 = vst [vmem:[#allocation2 + $0x68] sm:$0xf] %v1041
        %1050 = vst [vmem:[#allocation2 + $0x6c] sm:$0xf] %v1042
        %1051 = vst [vmem:[#allocation2 + $0x70] sm:$0xf] %v1043
        %1052 = vst [vmem:[#allocation2 + $0x74] sm:$0xf] %v1044
        %1053 = vst [vmem:[#allocation2 + $0x78] sm:$0xf] %v1045
        %1054 = vst [vmem:[#allocation2 + $0x7c] sm:$0xf] %v1046
        %s1055 = scalar_lea.vmem %s296, 64 [#allocation6]
        %v1056 = vld [vmem:[%s1055] sm:$0xff]
        %v1057 = vld [vmem:[%s1055 + $0x8] sm:$0xff]
        %v1058 = vmul.f32 %v610, %v1056
        %v1059 = vmul.f32 %v612, %v1057
        %v1060 = vmul.f32 %v615, %v1056
        %v1061 = vmul.f32 %v617, %v1057
        %v1062 = vmul.f32 %v620, %v1056
        %v1063 = vmul.f32 %v622, %v1057
        %v1064 = vmul.f32 %v625, %v1056
        %v1065 = vmul.f32 %v627, %v1057
        %v1066 = vpack.c.bf16 %v1058, %v1058
        %v1067 = vpack.c.bf16 %v1059, %v1059
        %v1068 = vpack.c.bf16 %v1060, %v1060
        %v1069 = vpack.c.bf16 %v1061, %v1061
        %v1070 = vpack.c.bf16 %v1062, %v1062
        %v1071 = vpack.c.bf16 %v1063, %v1063
        %v1072 = vpack.c.bf16 %v1064, %v1064
        %v1073 = vpack.c.bf16 %v1065, %v1065
        %1074 = vst [vmem:[#allocation2 + $0x80] sm:$0xf] %v1066
        %1075 = vst [vmem:[#allocation2 + $0x84] sm:$0xf] %v1067
        %1076 = vst [vmem:[#allocation2 + $0x88] sm:$0xf] %v1068
        %1077 = vst [vmem:[#allocation2 + $0x8c] sm:$0xf] %v1069
        %1078 = vst [vmem:[#allocation2 + $0x90] sm:$0xf] %v1070
        %1079 = vst [vmem:[#allocation2 + $0x94] sm:$0xf] %v1071
        %1080 = vst [vmem:[#allocation2 + $0x98] sm:$0xf] %v1072
        %1081 = vst [vmem:[#allocation2 + $0x9c] sm:$0xf] %v1073
        %s1082 = scalar_lea.vmem %s296, 80 [#allocation6]
        %v1083 = vld [vmem:[%s1082] sm:$0xff]
        %v1084 = vld [vmem:[%s1082 + $0x8] sm:$0xff]
        %v1085 = vmul.f32 %v639, %v1083
        %v1086 = vmul.f32 %v641, %v1084
        %v1087 = vmul.f32 %v644, %v1083
        %v1088 = vmul.f32 %v646, %v1084
        %v1089 = vmul.f32 %v649, %v1083
        %v1090 = vmul.f32 %v651, %v1084
        %v1091 = vmul.f32 %v654, %v1083
        %v1092 = vmul.f32 %v656, %v1084
        %v1093 = vpack.c.bf16 %v1085, %v1085
        %v1094 = vpack.c.bf16 %v1086, %v1086
        %v1095 = vpack.c.bf16 %v1087, %v1087
        %v1096 = vpack.c.bf16 %v1088, %v1088
        %v1097 = vpack.c.bf16 %v1089, %v1089
        %v1098 = vpack.c.bf16 %v1090, %v1090
        %v1099 = vpack.c.bf16 %v1091, %v1091
        %v1100 = vpack.c.bf16 %v1092, %v1092
        %1101 = vst [vmem:[#allocation2 + $0xa0] sm:$0xf] %v1093
        %1102 = vst [vmem:[#allocation2 + $0xa4] sm:$0xf] %v1094
        %1103 = vst [vmem:[#allocation2 + $0xa8] sm:$0xf] %v1095
        %1104 = vst [vmem:[#allocation2 + $0xac] sm:$0xf] %v1096
        %1105 = vst [vmem:[#allocation2 + $0xb0] sm:$0xf] %v1097
        %1106 = vst [vmem:[#allocation2 + $0xb4] sm:$0xf] %v1098
        %1107 = vst [vmem:[#allocation2 + $0xb8] sm:$0xf] %v1099
        %1108 = vst [vmem:[#allocation2 + $0xbc] sm:$0xf] %v1100
        %s1109 = scalar_lea.vmem %s296, 96 [#allocation6]
        %v1110 = vld [vmem:[%s1109] sm:$0xff]
        %v1111 = vld [vmem:[%s1109 + $0x8] sm:$0xff]
        %v1112 = vmul.f32 %v668, %v1110
        %v1113 = vmul.f32 %v670, %v1111
        %v1114 = vmul.f32 %v673, %v1110
        %v1115 = vmul.f32 %v675, %v1111
        %v1116 = vmul.f32 %v678, %v1110
        %v1117 = vmul.f32 %v680, %v1111
        %v1118 = vmul.f32 %v683, %v1110
        %v1119 = vmul.f32 %v685, %v1111
        %v1120 = vpack.c.bf16 %v1112, %v1112
        %v1121 = vpack.c.bf16 %v1113, %v1113
        %v1122 = vpack.c.bf16 %v1114, %v1114
        %v1123 = vpack.c.bf16 %v1115, %v1115
        %v1124 = vpack.c.bf16 %v1116, %v1116
        %v1125 = vpack.c.bf16 %v1117, %v1117
        %v1126 = vpack.c.bf16 %v1118, %v1118
        %v1127 = vpack.c.bf16 %v1119, %v1119
        %1128 = vst [vmem:[#allocation2 + $0xc0] sm:$0xf] %v1120
        %1129 = vst [vmem:[#allocation2 + $0xc4] sm:$0xf] %v1121
        %1130 = vst [vmem:[#allocation2 + $0xc8] sm:$0xf] %v1122
        %1131 = vst [vmem:[#allocation2 + $0xcc] sm:$0xf] %v1123
        %1132 = vst [vmem:[#allocation2 + $0xd0] sm:$0xf] %v1124
        %1133 = vst [vmem:[#allocation2 + $0xd4] sm:$0xf] %v1125
        %1134 = vst [vmem:[#allocation2 + $0xd8] sm:$0xf] %v1126
        %1135 = vst [vmem:[#allocation2 + $0xdc] sm:$0xf] %v1127
        %s1136 = scalar_lea.vmem %s296, 112 [#allocation6]
        %v1137 = vld [vmem:[%s1136] sm:$0xff]
        %v1138 = vld [vmem:[%s1136 + $0x8] sm:$0xff]
        %v1139 = vmul.f32 %v697, %v1137
        %v1140 = vmul.f32 %v699, %v1138
        %v1141 = vmul.f32 %v702, %v1137
        %v1142 = vmul.f32 %v704, %v1138
        %v1143 = vmul.f32 %v707, %v1137
        %v1144 = vmul.f32 %v709, %v1138
        %v1145 = vmul.f32 %v712, %v1137
        %v1146 = vmul.f32 %v714, %v1138
        %v1147 = vpack.c.bf16 %v1139, %v1139
        %v1148 = vpack.c.bf16 %v1140, %v1140
        %v1149 = vpack.c.bf16 %v1141, %v1141
        %v1150 = vpack.c.bf16 %v1142, %v1142
        %v1151 = vpack.c.bf16 %v1143, %v1143
        %v1152 = vpack.c.bf16 %v1144, %v1144
        %v1153 = vpack.c.bf16 %v1145, %v1145
        %v1154 = vpack.c.bf16 %v1146, %v1146
        %1155 = vst [vmem:[#allocation2 + $0xe0] sm:$0xf] %v1147
        %1156 = vst [vmem:[#allocation2 + $0xe4] sm:$0xf] %v1148
        %1157 = vst [vmem:[#allocation2 + $0xe8] sm:$0xf] %v1149
        %1158 = vst [vmem:[#allocation2 + $0xec] sm:$0xf] %v1150
        %1159 = vst [vmem:[#allocation2 + $0xf0] sm:$0xf] %v1151
        %1160 = vst [vmem:[#allocation2 + $0xf4] sm:$0xf] %v1152
        %1161 = vst [vmem:[#allocation2 + $0xf8] sm:$0xf] %v1153
        %1162 = vst [vmem:[#allocation2 + $0xfc] sm:$0xf] %v1154
        %s1163 = scalar_lea.vmem %s296, 128 [#allocation6]
        %v1164 = vld [vmem:[%s1163] sm:$0xff]
        %v1165 = vld [vmem:[%s1163 + $0x8] sm:$0xff]
        %v1166 = vmul.f32 %v726, %v1164
        %v1167 = vmul.f32 %v728, %v1165
        %v1168 = vmul.f32 %v731, %v1164
        %v1169 = vmul.f32 %v733, %v1165
        %v1170 = vmul.f32 %v736, %v1164
        %v1171 = vmul.f32 %v738, %v1165
        %v1172 = vmul.f32 %v741, %v1164
        %v1173 = vmul.f32 %v743, %v1165
        %v1174 = vpack.c.bf16 %v1166, %v1166
        %v1175 = vpack.c.bf16 %v1167, %v1167
        %v1176 = vpack.c.bf16 %v1168, %v1168
        %v1177 = vpack.c.bf16 %v1169, %v1169
        %v1178 = vpack.c.bf16 %v1170, %v1170
        %v1179 = vpack.c.bf16 %v1171, %v1171
        %v1180 = vpack.c.bf16 %v1172, %v1172
        %v1181 = vpack.c.bf16 %v1173, %v1173
        %1182 = vst [vmem:[#allocation2 + $0x100] sm:$0xf] %v1174
        %1183 = vst [vmem:[#allocation2 + $0x104] sm:$0xf] %v1175
        %1184 = vst [vmem:[#allocation2 + $0x108] sm:$0xf] %v1176
        %1185 = vst [vmem:[#allocation2 + $0x10c] sm:$0xf] %v1177
        %1186 = vst [vmem:[#allocation2 + $0x110] sm:$0xf] %v1178
        %1187 = vst [vmem:[#allocation2 + $0x114] sm:$0xf] %v1179
        %1188 = vst [vmem:[#allocation2 + $0x118] sm:$0xf] %v1180
        %1189 = vst [vmem:[#allocation2 + $0x11c] sm:$0xf] %v1181
        %s1190 = scalar_lea.vmem %s296, 144 [#allocation6]
        %v1191 = vld [vmem:[%s1190] sm:$0xff]
        %v1192 = vld [vmem:[%s1190 + $0x8] sm:$0xff]
        %v1193 = vmul.f32 %v755, %v1191
        %v1194 = vmul.f32 %v757, %v1192
        %v1195 = vmul.f32 %v760, %v1191
        %v1196 = vmul.f32 %v762, %v1192
        %v1197 = vmul.f32 %v765, %v1191
        %v1198 = vmul.f32 %v767, %v1192
        %v1199 = vmul.f32 %v770, %v1191
        %v1200 = vmul.f32 %v772, %v1192
        %v1201 = vpack.c.bf16 %v1193, %v1193
        %v1202 = vpack.c.bf16 %v1194, %v1194
        %v1203 = vpack.c.bf16 %v1195, %v1195
        %v1204 = vpack.c.bf16 %v1196, %v1196
        %v1205 = vpack.c.bf16 %v1197, %v1197
        %v1206 = vpack.c.bf16 %v1198, %v1198
        %v1207 = vpack.c.bf16 %v1199, %v1199
        %v1208 = vpack.c.bf16 %v1200, %v1200
        %1209 = vst [vmem:[#allocation2 + $0x120] sm:$0xf] %v1201
        %1210 = vst [vmem:[#allocation2 + $0x124] sm:$0xf] %v1202
        %1211 = vst [vmem:[#allocation2 + $0x128] sm:$0xf] %v1203
        %1212 = vst [vmem:[#allocation2 + $0x12c] sm:$0xf] %v1204
        %1213 = vst [vmem:[#allocation2 + $0x130] sm:$0xf] %v1205
        %1214 = vst [vmem:[#allocation2 + $0x134] sm:$0xf] %v1206
        %1215 = vst [vmem:[#allocation2 + $0x138] sm:$0xf] %v1207
        %1216 = vst [vmem:[#allocation2 + $0x13c] sm:$0xf] %v1208
        %s1217 = scalar_lea.vmem %s296, 160 [#allocation6]
        %v1218 = vld [vmem:[%s1217] sm:$0xff]
        %v1219 = vld [vmem:[%s1217 + $0x8] sm:$0xff]
        %v1220 = vmul.f32 %v784, %v1218
        %v1221 = vmul.f32 %v786, %v1219
        %v1222 = vmul.f32 %v789, %v1218
        %v1223 = vmul.f32 %v791, %v1219
        %v1224 = vmul.f32 %v794, %v1218
        %v1225 = vmul.f32 %v796, %v1219
        %v1226 = vmul.f32 %v799, %v1218
        %v1227 = vmul.f32 %v801, %v1219
        %v1228 = vpack.c.bf16 %v1220, %v1220
        %v1229 = vpack.c.bf16 %v1221, %v1221
        %v1230 = vpack.c.bf16 %v1222, %v1222
        %v1231 = vpack.c.bf16 %v1223, %v1223
        %v1232 = vpack.c.bf16 %v1224, %v1224
        %v1233 = vpack.c.bf16 %v1225, %v1225
        %v1234 = vpack.c.bf16 %v1226, %v1226
        %v1235 = vpack.c.bf16 %v1227, %v1227
        %1236 = vst [vmem:[#allocation2 + $0x140] sm:$0xf] %v1228
        %1237 = vst [vmem:[#allocation2 + $0x144] sm:$0xf] %v1229
        %1238 = vst [vmem:[#allocation2 + $0x148] sm:$0xf] %v1230
        %1239 = vst [vmem:[#allocation2 + $0x14c] sm:$0xf] %v1231
        %1240 = vst [vmem:[#allocation2 + $0x150] sm:$0xf] %v1232
        %1241 = vst [vmem:[#allocation2 + $0x154] sm:$0xf] %v1233
        %1242 = vst [vmem:[#allocation2 + $0x158] sm:$0xf] %v1234
        %1243 = vst [vmem:[#allocation2 + $0x15c] sm:$0xf] %v1235
        %s1244 = scalar_lea.vmem %s296, 176 [#allocation6]
        %v1245 = vld [vmem:[%s1244] sm:$0xff]
        %v1246 = vld [vmem:[%s1244 + $0x8] sm:$0xff]
        %v1247 = vmul.f32 %v813, %v1245
        %v1248 = vmul.f32 %v815, %v1246
        %v1249 = vmul.f32 %v818, %v1245
        %v1250 = vmul.f32 %v820, %v1246
        %v1251 = vmul.f32 %v823, %v1245
        %v1252 = vmul.f32 %v825, %v1246
        %v1253 = vmul.f32 %v828, %v1245
        %v1254 = vmul.f32 %v830, %v1246
        %v1255 = vpack.c.bf16 %v1247, %v1247
        %v1256 = vpack.c.bf16 %v1248, %v1248
        %v1257 = vpack.c.bf16 %v1249, %v1249
        %v1258 = vpack.c.bf16 %v1250, %v1250
        %v1259 = vpack.c.bf16 %v1251, %v1251
        %v1260 = vpack.c.bf16 %v1252, %v1252
        %v1261 = vpack.c.bf16 %v1253, %v1253
        %v1262 = vpack.c.bf16 %v1254, %v1254
        %1263 = vst [vmem:[#allocation2 + $0x160] sm:$0xf] %v1255
        %1264 = vst [vmem:[#allocation2 + $0x164] sm:$0xf] %v1256
        %1265 = vst [vmem:[#allocation2 + $0x168] sm:$0xf] %v1257
        %1266 = vst [vmem:[#allocation2 + $0x16c] sm:$0xf] %v1258
        %1267 = vst [vmem:[#allocation2 + $0x170] sm:$0xf] %v1259
        %1268 = vst [vmem:[#allocation2 + $0x174] sm:$0xf] %v1260
        %1269 = vst [vmem:[#allocation2 + $0x178] sm:$0xf] %v1261
        %1270 = vst [vmem:[#allocation2 + $0x17c] sm:$0xf] %v1262
        %s1271 = scalar_lea.vmem %s296, 192 [#allocation6]
        %v1272 = vld [vmem:[%s1271] sm:$0xff]
        %v1273 = vld [vmem:[%s1271 + $0x8] sm:$0xff]
        %v1274 = vmul.f32 %v842, %v1272
        %v1275 = vmul.f32 %v844, %v1273
        %v1276 = vmul.f32 %v847, %v1272
        %v1277 = vmul.f32 %v849, %v1273
        %v1278 = vmul.f32 %v852, %v1272
        %v1279 = vmul.f32 %v854, %v1273
        %v1280 = vmul.f32 %v857, %v1272
        %v1281 = vmul.f32 %v859, %v1273
        %v1282 = vpack.c.bf16 %v1274, %v1274
        %v1283 = vpack.c.bf16 %v1275, %v1275
        %v1284 = vpack.c.bf16 %v1276, %v1276
        %v1285 = vpack.c.bf16 %v1277, %v1277
        %v1286 = vpack.c.bf16 %v1278, %v1278
        %v1287 = vpack.c.bf16 %v1279, %v1279
        %v1288 = vpack.c.bf16 %v1280, %v1280
        %v1289 = vpack.c.bf16 %v1281, %v1281
        %1290 = vst [vmem:[#allocation2 + $0x180] sm:$0xf] %v1282
        %1291 = vst [vmem:[#allocation2 + $0x184] sm:$0xf] %v1283
        %1292 = vst [vmem:[#allocation2 + $0x188] sm:$0xf] %v1284
        %1293 = vst [vmem:[#allocation2 + $0x18c] sm:$0xf] %v1285
        %1294 = vst [vmem:[#allocation2 + $0x190] sm:$0xf] %v1286
        %1295 = vst [vmem:[#allocation2 + $0x194] sm:$0xf] %v1287
        %1296 = vst [vmem:[#allocation2 + $0x198] sm:$0xf] %v1288
        %1297 = vst [vmem:[#allocation2 + $0x19c] sm:$0xf] %v1289
        %s1298 = scalar_lea.vmem %s296, 208 [#allocation6]
        %v1299 = vld [vmem:[%s1298] sm:$0xff]
        %v1300 = vld [vmem:[%s1298 + $0x8] sm:$0xff]
        %v1301 = vmul.f32 %v871, %v1299
        %v1302 = vmul.f32 %v873, %v1300
        %v1303 = vmul.f32 %v876, %v1299
        %v1304 = vmul.f32 %v878, %v1300
        %v1305 = vmul.f32 %v881, %v1299
        %v1306 = vmul.f32 %v883, %v1300
        %v1307 = vmul.f32 %v886, %v1299
        %v1308 = vmul.f32 %v888, %v1300
        %v1309 = vpack.c.bf16 %v1301, %v1301
        %v1310 = vpack.c.bf16 %v1302, %v1302
        %v1311 = vpack.c.bf16 %v1303, %v1303
        %v1312 = vpack.c.bf16 %v1304, %v1304
        %v1313 = vpack.c.bf16 %v1305, %v1305
        %v1314 = vpack.c.bf16 %v1306, %v1306
        %v1315 = vpack.c.bf16 %v1307, %v1307
        %v1316 = vpack.c.bf16 %v1308, %v1308
        %1317 = vst [vmem:[#allocation2 + $0x1a0] sm:$0xf] %v1309
        %1318 = vst [vmem:[#allocation2 + $0x1a4] sm:$0xf] %v1310
        %1319 = vst [vmem:[#allocation2 + $0x1a8] sm:$0xf] %v1311
        %1320 = vst [vmem:[#allocation2 + $0x1ac] sm:$0xf] %v1312
        %1321 = vst [vmem:[#allocation2 + $0x1b0] sm:$0xf] %v1313
        %1322 = vst [vmem:[#allocation2 + $0x1b4] sm:$0xf] %v1314
        %1323 = vst [vmem:[#allocation2 + $0x1b8] sm:$0xf] %v1315
        %1324 = vst [vmem:[#allocation2 + $0x1bc] sm:$0xf] %v1316
        %s1325 = scalar_lea.vmem %s296, 224 [#allocation6]
        %v1326 = vld [vmem:[%s1325] sm:$0xff]
        %v1327 = vld [vmem:[%s1325 + $0x8] sm:$0xff]
        %v1328 = vmul.f32 %v900, %v1326
        %v1329 = vmul.f32 %v902, %v1327
        %v1330 = vmul.f32 %v905, %v1326
        %v1331 = vmul.f32 %v907, %v1327
        %v1332 = vmul.f32 %v910, %v1326
        %v1333 = vmul.f32 %v912, %v1327
        %v1334 = vmul.f32 %v915, %v1326
        %v1335 = vmul.f32 %v917, %v1327
        %v1336 = vpack.c.bf16 %v1328, %v1328
        %v1337 = vpack.c.bf16 %v1329, %v1329
        %v1338 = vpack.c.bf16 %v1330, %v1330
        %v1339 = vpack.c.bf16 %v1331, %v1331
        %v1340 = vpack.c.bf16 %v1332, %v1332
        %v1341 = vpack.c.bf16 %v1333, %v1333
        %v1342 = vpack.c.bf16 %v1334, %v1334
        %v1343 = vpack.c.bf16 %v1335, %v1335
        %1344 = vst [vmem:[#allocation2 + $0x1c0] sm:$0xf] %v1336
        %1345 = vst [vmem:[#allocation2 + $0x1c4] sm:$0xf] %v1337
        %1346 = vst [vmem:[#allocation2 + $0x1c8] sm:$0xf] %v1338
        %1347 = vst [vmem:[#allocation2 + $0x1cc] sm:$0xf] %v1339
        %1348 = vst [vmem:[#allocation2 + $0x1d0] sm:$0xf] %v1340
        %1349 = vst [vmem:[#allocation2 + $0x1d4] sm:$0xf] %v1341
        %1350 = vst [vmem:[#allocation2 + $0x1d8] sm:$0xf] %v1342
        %1351 = vst [vmem:[#allocation2 + $0x1dc] sm:$0xf] %v1343
        %s1352 = scalar_lea.vmem %s296, 240 [#allocation6]
        %v1353 = vld [vmem:[%s1352] sm:$0xff]
        %v1354 = vld [vmem:[%s1352 + $0x8] sm:$0xff]
        %v1355 = vmul.f32 %v929, %v1353
        %v1356 = vmul.f32 %v931, %v1354
        %v1357 = vmul.f32 %v934, %v1353
        %v1358 = vmul.f32 %v936, %v1354
        %v1359 = vmul.f32 %v939, %v1353
        %v1360 = vmul.f32 %v941, %v1354
        %v1361 = vmul.f32 %v944, %v1353
        %v1362 = vmul.f32 %v946, %v1354
        %v1363 = vpack.c.bf16 %v1355, %v1355
        %v1364 = vpack.c.bf16 %v1356, %v1356
        %v1365 = vpack.c.bf16 %v1357, %v1357
        %v1366 = vpack.c.bf16 %v1358, %v1358
        %v1367 = vpack.c.bf16 %v1359, %v1359
        %v1368 = vpack.c.bf16 %v1360, %v1360
        %v1369 = vpack.c.bf16 %v1361, %v1361
        %v1370 = vpack.c.bf16 %v1362, %v1362
        %1371 = vst [vmem:[#allocation2 + $0x1e0] sm:$0xf] %v1363
        %1372 = vst [vmem:[#allocation2 + $0x1e4] sm:$0xf] %v1364
        %1373 = vst [vmem:[#allocation2 + $0x1e8] sm:$0xf] %v1365
        %1374 = vst [vmem:[#allocation2 + $0x1ec] sm:$0xf] %v1366
        %1375 = vst [vmem:[#allocation2 + $0x1f0] sm:$0xf] %v1367
        %1376 = vst [vmem:[#allocation2 + $0x1f4] sm:$0xf] %v1368
        %1377 = vst [vmem:[#allocation2 + $0x1f8] sm:$0xf] %v1369
        %1378 = vst [vmem:[#allocation2 + $0x1fc] sm:$0xf] %v1370
        %v1379 = vld [vmem:[#allocation2] sm:$0xf]
        %v1380 = vld [vmem:[#allocation2 + $0x4] sm:$0xf]
        %v1381 = vld [vmem:[#allocation2 + $0x8] sm:$0xf]
        %v1382 = vld [vmem:[#allocation2 + $0xc] sm:$0xf]
        %v1383 = vld [vmem:[#allocation2 + $0x10] sm:$0xf]
        %v1384 = vld [vmem:[#allocation2 + $0x14] sm:$0xf]
        %v1385 = vld [vmem:[#allocation2 + $0x18] sm:$0xf]
        %v1386 = vld [vmem:[#allocation2 + $0x1c] sm:$0xf]
        %v1387 = vld [vmem:[#allocation2 + $0x20] sm:$0xf]
        %v1388 = vld [vmem:[#allocation2 + $0x24] sm:$0xf]
        %v1389 = vld [vmem:[#allocation2 + $0x28] sm:$0xf]
        %v1390 = vld [vmem:[#allocation2 + $0x2c] sm:$0xf]
        %v1391 = vld [vmem:[#allocation2 + $0x30] sm:$0xf]
        %v1392 = vld [vmem:[#allocation2 + $0x34] sm:$0xf]
        %v1393 = vld [vmem:[#allocation2 + $0x38] sm:$0xf]
        %v1394 = vld [vmem:[#allocation2 + $0x3c] sm:$0xf]
        %v1395 = vld [vmem:[#allocation2 + $0x40] sm:$0xf]
        %v1396 = vld [vmem:[#allocation2 + $0x44] sm:$0xf]
        %v1397 = vld [vmem:[#allocation2 + $0x48] sm:$0xf]
        %v1398 = vld [vmem:[#allocation2 + $0x4c] sm:$0xf]
        %v1399 = vld [vmem:[#allocation2 + $0x50] sm:$0xf]
        %v1400 = vld [vmem:[#allocation2 + $0x54] sm:$0xf]
        %v1401 = vld [vmem:[#allocation2 + $0x58] sm:$0xf]
        %v1402 = vld [vmem:[#allocation2 + $0x5c] sm:$0xf]
        %v1403 = vld [vmem:[#allocation2 + $0x60] sm:$0xf]
        %v1404 = vld [vmem:[#allocation2 + $0x64] sm:$0xf]
        %v1405 = vld [vmem:[#allocation2 + $0x68] sm:$0xf]
        %v1406 = vld [vmem:[#allocation2 + $0x6c] sm:$0xf]
        %v1407 = vld [vmem:[#allocation2 + $0x70] sm:$0xf]
        %v1408 = vld [vmem:[#allocation2 + $0x74] sm:$0xf]
        %v1409 = vld [vmem:[#allocation2 + $0x78] sm:$0xf]
        %v1410 = vld [vmem:[#allocation2 + $0x7c] sm:$0xf]
        %v1411 = vld [vmem:[#allocation2 + $0x80] sm:$0xf]
        %v1412 = vld [vmem:[#allocation2 + $0x84] sm:$0xf]
        %v1413 = vld [vmem:[#allocation2 + $0x88] sm:$0xf]
        %v1414 = vld [vmem:[#allocation2 + $0x8c] sm:$0xf]
        %v1415 = vld [vmem:[#allocation2 + $0x90] sm:$0xf]
        %v1416 = vld [vmem:[#allocation2 + $0x94] sm:$0xf]
        %v1417 = vld [vmem:[#allocation2 + $0x98] sm:$0xf]
        %v1418 = vld [vmem:[#allocation2 + $0x9c] sm:$0xf]
        %v1419 = vld [vmem:[#allocation2 + $0xa0] sm:$0xf]
        %v1420 = vld [vmem:[#allocation2 + $0xa4] sm:$0xf]
        %v1421 = vld [vmem:[#allocation2 + $0xa8] sm:$0xf]
        %v1422 = vld [vmem:[#allocation2 + $0xac] sm:$0xf]
        %v1423 = vld [vmem:[#allocation2 + $0xb0] sm:$0xf]
        %v1424 = vld [vmem:[#allocation2 + $0xb4] sm:$0xf]
        %v1425 = vld [vmem:[#allocation2 + $0xb8] sm:$0xf]
        %v1426 = vld [vmem:[#allocation2 + $0xbc] sm:$0xf]
        %v1427 = vld [vmem:[#allocation2 + $0xc0] sm:$0xf]
        %v1428 = vld [vmem:[#allocation2 + $0xc4] sm:$0xf]
        %v1429 = vld [vmem:[#allocation2 + $0xc8] sm:$0xf]
        %v1430 = vld [vmem:[#allocation2 + $0xcc] sm:$0xf]
        %v1431 = vld [vmem:[#allocation2 + $0xd0] sm:$0xf]
        %v1432 = vld [vmem:[#allocation2 + $0xd4] sm:$0xf]
        %v1433 = vld [vmem:[#allocation2 + $0xd8] sm:$0xf]
        %v1434 = vld [vmem:[#allocation2 + $0xdc] sm:$0xf]
        %v1435 = vld [vmem:[#allocation2 + $0xe0] sm:$0xf]
        %v1436 = vld [vmem:[#allocation2 + $0xe4] sm:$0xf]
        %v1437 = vld [vmem:[#allocation2 + $0xe8] sm:$0xf]
        %v1438 = vld [vmem:[#allocation2 + $0xec] sm:$0xf]
        %v1439 = vld [vmem:[#allocation2 + $0xf0] sm:$0xf]
        %v1440 = vld [vmem:[#allocation2 + $0xf4] sm:$0xf]
        %v1441 = vld [vmem:[#allocation2 + $0xf8] sm:$0xf]
        %v1442 = vld [vmem:[#allocation2 + $0xfc] sm:$0xf]
        %v1443 = vld [vmem:[#allocation2 + $0x100] sm:$0xf]
        %v1444 = vld [vmem:[#allocation2 + $0x104] sm:$0xf]
        %v1445 = vld [vmem:[#allocation2 + $0x108] sm:$0xf]
        %v1446 = vld [vmem:[#allocation2 + $0x10c] sm:$0xf]
        %v1447 = vld [vmem:[#allocation2 + $0x110] sm:$0xf]
        %v1448 = vld [vmem:[#allocation2 + $0x114] sm:$0xf]
        %v1449 = vld [vmem:[#allocation2 + $0x118] sm:$0xf]
        %v1450 = vld [vmem:[#allocation2 + $0x11c] sm:$0xf]
        %v1451 = vld [vmem:[#allocation2 + $0x120] sm:$0xf]
        %v1452 = vld [vmem:[#allocation2 + $0x124] sm:$0xf]
        %v1453 = vld [vmem:[#allocation2 + $0x128] sm:$0xf]
        %v1454 = vld [vmem:[#allocation2 + $0x12c] sm:$0xf]
        %v1455 = vld [vmem:[#allocation2 + $0x130] sm:$0xf]
        %v1456 = vld [vmem:[#allocation2 + $0x134] sm:$0xf]
        %v1457 = vld [vmem:[#allocation2 + $0x138] sm:$0xf]
        %v1458 = vld [vmem:[#allocation2 + $0x13c] sm:$0xf]
        %v1459 = vld [vmem:[#allocation2 + $0x140] sm:$0xf]
        %v1460 = vld [vmem:[#allocation2 + $0x144] sm:$0xf]
        %v1461 = vld [vmem:[#allocation2 + $0x148] sm:$0xf]
        %v1462 = vld [vmem:[#allocation2 + $0x14c] sm:$0xf]
        %v1463 = vld [vmem:[#allocation2 + $0x150] sm:$0xf]
        %v1464 = vld [vmem:[#allocation2 + $0x154] sm:$0xf]
        %v1465 = vld [vmem:[#allocation2 + $0x158] sm:$0xf]
        %v1466 = vld [vmem:[#allocation2 + $0x15c] sm:$0xf]
        %v1467 = vld [vmem:[#allocation2 + $0x160] sm:$0xf]
        %v1468 = vld [vmem:[#allocation2 + $0x164] sm:$0xf]
        %v1469 = vld [vmem:[#allocation2 + $0x168] sm:$0xf]
        %v1470 = vld [vmem:[#allocation2 + $0x16c] sm:$0xf]
        %v1471 = vld [vmem:[#allocation2 + $0x170] sm:$0xf]
        %v1472 = vld [vmem:[#allocation2 + $0x174] sm:$0xf]
        %v1473 = vld [vmem:[#allocation2 + $0x178] sm:$0xf]
        %v1474 = vld [vmem:[#allocation2 + $0x17c] sm:$0xf]
        %v1475 = vld [vmem:[#allocation2 + $0x180] sm:$0xf]
        %v1476 = vld [vmem:[#allocation2 + $0x184] sm:$0xf]
        %v1477 = vld [vmem:[#allocation2 + $0x188] sm:$0xf]
        %v1478 = vld [vmem:[#allocation2 + $0x18c] sm:$0xf]
        %v1479 = vld [vmem:[#allocation2 + $0x190] sm:$0xf]
        %v1480 = vld [vmem:[#allocation2 + $0x194] sm:$0xf]
        %v1481 = vld [vmem:[#allocation2 + $0x198] sm:$0xf]
        %v1482 = vld [vmem:[#allocation2 + $0x19c] sm:$0xf]
        %v1483 = vld [vmem:[#allocation2 + $0x1a0] sm:$0xf]
        %v1484 = vld [vmem:[#allocation2 + $0x1a4] sm:$0xf]
        %v1485 = vld [vmem:[#allocation2 + $0x1a8] sm:$0xf]
        %v1486 = vld [vmem:[#allocation2 + $0x1ac] sm:$0xf]
        %v1487 = vld [vmem:[#allocation2 + $0x1b0] sm:$0xf]
        %v1488 = vld [vmem:[#allocation2 + $0x1b4] sm:$0xf]
        %v1489 = vld [vmem:[#allocation2 + $0x1b8] sm:$0xf]
        %v1490 = vld [vmem:[#allocation2 + $0x1bc] sm:$0xf]
        %v1491 = vld [vmem:[#allocation2 + $0x1c0] sm:$0xf]
        %v1492 = vld [vmem:[#allocation2 + $0x1c4] sm:$0xf]
        %v1493 = vld [vmem:[#allocation2 + $0x1c8] sm:$0xf]
        %v1494 = vld [vmem:[#allocation2 + $0x1cc] sm:$0xf]
        %v1495 = vld [vmem:[#allocation2 + $0x1d0] sm:$0xf]
        %v1496 = vld [vmem:[#allocation2 + $0x1d4] sm:$0xf]
        %v1497 = vld [vmem:[#allocation2 + $0x1d8] sm:$0xf]
        %v1498 = vld [vmem:[#allocation2 + $0x1dc] sm:$0xf]
        %v1499 = vld [vmem:[#allocation2 + $0x1e0] sm:$0xf]
        %v1500 = vld [vmem:[#allocation2 + $0x1e4] sm:$0xf]
        %v1501 = vld [vmem:[#allocation2 + $0x1e8] sm:$0xf]
        %v1502 = vld [vmem:[#allocation2 + $0x1ec] sm:$0xf]
        %v1503 = vld [vmem:[#allocation2 + $0x1f0] sm:$0xf]
        %v1504 = vld [vmem:[#allocation2 + $0x1f4] sm:$0xf]
        %v1505 = vld [vmem:[#allocation2 + $0x1f8] sm:$0xf]
        %v1506 = vld [vmem:[#allocation2 + $0x1fc] sm:$0xf]
        %v1507 = vld [vmem:[#allocation8] sm:$0xf]
        %v1508 = vld [vmem:[#allocation8 + $0x4] sm:$0xf]
        %v1509 = vld [vmem:[#allocation8 + $0x8] sm:$0xf]
        %v1510 = vld [vmem:[#allocation8 + $0xc] sm:$0xf]
        %v1511 = vld [vmem:[#allocation8 + $0x10] sm:$0xf]
        %v1512 = vld [vmem:[#allocation8 + $0x14] sm:$0xf]
        %v1513 = vld [vmem:[#allocation8 + $0x18] sm:$0xf]
        %v1514 = vld [vmem:[#allocation8 + $0x1c] sm:$0xf]
        %v1515 = vld [vmem:[#allocation8 + $0x20] sm:$0xf]
        %v1516 = vld [vmem:[#allocation8 + $0x24] sm:$0xf]
        %v1517 = vld [vmem:[#allocation8 + $0x28] sm:$0xf]
        %v1518 = vld [vmem:[#allocation8 + $0x2c] sm:$0xf]
        %v1519 = vld [vmem:[#allocation8 + $0x30] sm:$0xf]
        %v1520 = vld [vmem:[#allocation8 + $0x34] sm:$0xf]
        %v1521 = vld [vmem:[#allocation8 + $0x38] sm:$0xf]
        %v1522 = vld [vmem:[#allocation8 + $0x3c] sm:$0xf]
        %v1523 = vld [vmem:[#allocation8 + $0x40] sm:$0xf]
        %v1524 = vld [vmem:[#allocation8 + $0x44] sm:$0xf]
        %v1525 = vld [vmem:[#allocation8 + $0x48] sm:$0xf]
        %v1526 = vld [vmem:[#allocation8 + $0x4c] sm:$0xf]
        %v1527 = vld [vmem:[#allocation8 + $0x50] sm:$0xf]
        %v1528 = vld [vmem:[#allocation8 + $0x54] sm:$0xf]
        %v1529 = vld [vmem:[#allocation8 + $0x58] sm:$0xf]
        %v1530 = vld [vmem:[#allocation8 + $0x5c] sm:$0xf]
        %v1531 = vld [vmem:[#allocation8 + $0x60] sm:$0xf]
        %v1532 = vld [vmem:[#allocation8 + $0x64] sm:$0xf]
        %v1533 = vld [vmem:[#allocation8 + $0x68] sm:$0xf]
        %v1534 = vld [vmem:[#allocation8 + $0x6c] sm:$0xf]
        %v1535 = vld [vmem:[#allocation8 + $0x70] sm:$0xf]
        %v1536 = vld [vmem:[#allocation8 + $0x74] sm:$0xf]
        %v1537 = vld [vmem:[#allocation8 + $0x78] sm:$0xf]
        %v1538 = vld [vmem:[#allocation8 + $0x7c] sm:$0xf]
        %v1539 = vld [vmem:[#allocation8 + $0x80] sm:$0xf]
        %v1540 = vld [vmem:[#allocation8 + $0x84] sm:$0xf]
        %v1541 = vld [vmem:[#allocation8 + $0x88] sm:$0xf]
        %v1542 = vld [vmem:[#allocation8 + $0x8c] sm:$0xf]
        %v1543 = vld [vmem:[#allocation8 + $0x90] sm:$0xf]
        %v1544 = vld [vmem:[#allocation8 + $0x94] sm:$0xf]
        %v1545 = vld [vmem:[#allocation8 + $0x98] sm:$0xf]
        %v1546 = vld [vmem:[#allocation8 + $0x9c] sm:$0xf]
        %v1547 = vld [vmem:[#allocation8 + $0xa0] sm:$0xf]
        %v1548 = vld [vmem:[#allocation8 + $0xa4] sm:$0xf]
        %v1549 = vld [vmem:[#allocation8 + $0xa8] sm:$0xf]
        %v1550 = vld [vmem:[#allocation8 + $0xac] sm:$0xf]
        %v1551 = vld [vmem:[#allocation8 + $0xb0] sm:$0xf]
        %v1552 = vld [vmem:[#allocation8 + $0xb4] sm:$0xf]
        %v1553 = vld [vmem:[#allocation8 + $0xb8] sm:$0xf]
        %v1554 = vld [vmem:[#allocation8 + $0xbc] sm:$0xf]
        %v1555 = vld [vmem:[#allocation8 + $0xc0] sm:$0xf]
        %v1556 = vld [vmem:[#allocation8 + $0xc4] sm:$0xf]
        %v1557 = vld [vmem:[#allocation8 + $0xc8] sm:$0xf]
        %v1558 = vld [vmem:[#allocation8 + $0xcc] sm:$0xf]
        %v1559 = vld [vmem:[#allocation8 + $0xd0] sm:$0xf]
        %v1560 = vld [vmem:[#allocation8 + $0xd4] sm:$0xf]
        %v1561 = vld [vmem:[#allocation8 + $0xd8] sm:$0xf]
        %v1562 = vld [vmem:[#allocation8 + $0xdc] sm:$0xf]
        %v1563 = vld [vmem:[#allocation8 + $0xe0] sm:$0xf]
        %v1564 = vld [vmem:[#allocation8 + $0xe4] sm:$0xf]
        %v1565 = vld [vmem:[#allocation8 + $0xe8] sm:$0xf]
        %v1566 = vld [vmem:[#allocation8 + $0xec] sm:$0xf]
        %v1567 = vld [vmem:[#allocation8 + $0xf0] sm:$0xf]
        %v1568 = vld [vmem:[#allocation8 + $0xf4] sm:$0xf]
        %v1569 = vld [vmem:[#allocation8 + $0xf8] sm:$0xf]
        %v1570 = vld [vmem:[#allocation8 + $0xfc] sm:$0xf]
        %v1571 = vld [vmem:[#allocation8 + $0x100] sm:$0xf]
        %v1572 = vld [vmem:[#allocation8 + $0x104] sm:$0xf]
        %v1573 = vld [vmem:[#allocation8 + $0x108] sm:$0xf]
        %v1574 = vld [vmem:[#allocation8 + $0x10c] sm:$0xf]
        %v1575 = vld [vmem:[#allocation8 + $0x110] sm:$0xf]
        %v1576 = vld [vmem:[#allocation8 + $0x114] sm:$0xf]
        %v1577 = vld [vmem:[#allocation8 + $0x118] sm:$0xf]
        %v1578 = vld [vmem:[#allocation8 + $0x11c] sm:$0xf]
        %v1579 = vld [vmem:[#allocation8 + $0x120] sm:$0xf]
        %v1580 = vld [vmem:[#allocation8 + $0x124] sm:$0xf]
        %v1581 = vld [vmem:[#allocation8 + $0x128] sm:$0xf]
        %v1582 = vld [vmem:[#allocation8 + $0x12c] sm:$0xf]
        %v1583 = vld [vmem:[#allocation8 + $0x130] sm:$0xf]
        %v1584 = vld [vmem:[#allocation8 + $0x134] sm:$0xf]
        %v1585 = vld [vmem:[#allocation8 + $0x138] sm:$0xf]
        %v1586 = vld [vmem:[#allocation8 + $0x13c] sm:$0xf]
        %v1587 = vld [vmem:[#allocation8 + $0x140] sm:$0xf]
        %v1588 = vld [vmem:[#allocation8 + $0x144] sm:$0xf]
        %v1589 = vld [vmem:[#allocation8 + $0x148] sm:$0xf]
        %v1590 = vld [vmem:[#allocation8 + $0x14c] sm:$0xf]
        %v1591 = vld [vmem:[#allocation8 + $0x150] sm:$0xf]
        %v1592 = vld [vmem:[#allocation8 + $0x154] sm:$0xf]
        %v1593 = vld [vmem:[#allocation8 + $0x158] sm:$0xf]
        %v1594 = vld [vmem:[#allocation8 + $0x15c] sm:$0xf]
        %v1595 = vld [vmem:[#allocation8 + $0x160] sm:$0xf]
        %v1596 = vld [vmem:[#allocation8 + $0x164] sm:$0xf]
        %v1597 = vld [vmem:[#allocation8 + $0x168] sm:$0xf]
        %v1598 = vld [vmem:[#allocation8 + $0x16c] sm:$0xf]
        %v1599 = vld [vmem:[#allocation8 + $0x170] sm:$0xf]
        %v1600 = vld [vmem:[#allocation8 + $0x174] sm:$0xf]
        %v1601 = vld [vmem:[#allocation8 + $0x178] sm:$0xf]
        %v1602 = vld [vmem:[#allocation8 + $0x17c] sm:$0xf]
        %v1603 = vld [vmem:[#allocation8 + $0x180] sm:$0xf]
        %v1604 = vld [vmem:[#allocation8 + $0x184] sm:$0xf]
        %v1605 = vld [vmem:[#allocation8 + $0x188] sm:$0xf]
        %v1606 = vld [vmem:[#allocation8 + $0x18c] sm:$0xf]
        %v1607 = vld [vmem:[#allocation8 + $0x190] sm:$0xf]
        %v1608 = vld [vmem:[#allocation8 + $0x194] sm:$0xf]
        %v1609 = vld [vmem:[#allocation8 + $0x198] sm:$0xf]
        %v1610 = vld [vmem:[#allocation8 + $0x19c] sm:$0xf]
        %v1611 = vld [vmem:[#allocation8 + $0x1a0] sm:$0xf]
        %v1612 = vld [vmem:[#allocation8 + $0x1a4] sm:$0xf]
        %v1613 = vld [vmem:[#allocation8 + $0x1a8] sm:$0xf]
        %v1614 = vld [vmem:[#allocation8 + $0x1ac] sm:$0xf]
        %v1615 = vld [vmem:[#allocation8 + $0x1b0] sm:$0xf]
        %v1616 = vld [vmem:[#allocation8 + $0x1b4] sm:$0xf]
        %v1617 = vld [vmem:[#allocation8 + $0x1b8] sm:$0xf]
        %v1618 = vld [vmem:[#allocation8 + $0x1bc] sm:$0xf]
        %v1619 = vld [vmem:[#allocation8 + $0x1c0] sm:$0xf]
        %v1620 = vld [vmem:[#allocation8 + $0x1c4] sm:$0xf]
        %v1621 = vld [vmem:[#allocation8 + $0x1c8] sm:$0xf]
        %v1622 = vld [vmem:[#allocation8 + $0x1cc] sm:$0xf]
        %v1623 = vld [vmem:[#allocation8 + $0x1d0] sm:$0xf]
        %v1624 = vld [vmem:[#allocation8 + $0x1d4] sm:$0xf]
        %v1625 = vld [vmem:[#allocation8 + $0x1d8] sm:$0xf]
        %v1626 = vld [vmem:[#allocation8 + $0x1dc] sm:$0xf]
        %v1627 = vld [vmem:[#allocation8 + $0x1e0] sm:$0xf]
        %v1628 = vld [vmem:[#allocation8 + $0x1e4] sm:$0xf]
        %v1629 = vld [vmem:[#allocation8 + $0x1e8] sm:$0xf]
        %v1630 = vld [vmem:[#allocation8 + $0x1ec] sm:$0xf]
        %v1631 = vld [vmem:[#allocation8 + $0x1f0] sm:$0xf]
        %v1632 = vld [vmem:[#allocation8 + $0x1f4] sm:$0xf]
        %v1633 = vld [vmem:[#allocation8 + $0x1f8] sm:$0xf]
        %v1634 = vld [vmem:[#allocation8 + $0x1fc] sm:$0xf]
        %v1635 = vld [vmem:[%s4] sm:$0x7]
        %v1636 = vperm.slane %v1635, 0
        %v1765 = vunpack.c.l.b16 %v1379
        %v1766 = vunpack.c.l.b16 %v1380
        %v1767 = vunpack.c.l.b16 %v1381
        %v1768 = vunpack.c.l.b16 %v1382
        %v1769 = vunpack.c.l.b16 %v1383
        %v1770 = vunpack.c.l.b16 %v1384
        %v1771 = vunpack.c.l.b16 %v1385
        %v1772 = vunpack.c.l.b16 %v1386
        %v1773 = vunpack.c.l.b16 %v1387
        %v1774 = vunpack.c.l.b16 %v1388
        %v1775 = vunpack.c.l.b16 %v1389
        %v1776 = vunpack.c.l.b16 %v1390
        %v1777 = vunpack.c.l.b16 %v1391
        %v1778 = vunpack.c.l.b16 %v1392
        %v1779 = vunpack.c.l.b16 %v1393
        %v1780 = vunpack.c.l.b16 %v1394
        %v1781 = vunpack.c.l.b16 %v1395
        %v1782 = vunpack.c.l.b16 %v1396
        %v1783 = vunpack.c.l.b16 %v1397
        %v1784 = vunpack.c.l.b16 %v1398
        %v1785 = vunpack.c.l.b16 %v1399
        %v1786 = vunpack.c.l.b16 %v1400
        %v1787 = vunpack.c.l.b16 %v1401
        %v1788 = vunpack.c.l.b16 %v1402
        %v1789 = vunpack.c.l.b16 %v1403
        %v1790 = vunpack.c.l.b16 %v1404
        %v1791 = vunpack.c.l.b16 %v1405
        %v1792 = vunpack.c.l.b16 %v1406
        %v1793 = vunpack.c.l.b16 %v1407
        %v1794 = vunpack.c.l.b16 %v1408
        %v1795 = vunpack.c.l.b16 %v1409
        %v1796 = vunpack.c.l.b16 %v1410
        %v1797 = vunpack.c.l.b16 %v1411
        %v1798 = vunpack.c.l.b16 %v1412
        %v1799 = vunpack.c.l.b16 %v1413
        %v1800 = vunpack.c.l.b16 %v1414
        %v1801 = vunpack.c.l.b16 %v1415
        %v1802 = vunpack.c.l.b16 %v1416
        %v1803 = vunpack.c.l.b16 %v1417
        %v1804 = vunpack.c.l.b16 %v1418
        %v1805 = vunpack.c.l.b16 %v1419
        %v1806 = vunpack.c.l.b16 %v1420
        %v1807 = vunpack.c.l.b16 %v1421
        %v1808 = vunpack.c.l.b16 %v1422
        %v1809 = vunpack.c.l.b16 %v1423
        %v1810 = vunpack.c.l.b16 %v1424
        %v1811 = vunpack.c.l.b16 %v1425
        %v1812 = vunpack.c.l.b16 %v1426
        %v1813 = vunpack.c.l.b16 %v1427
        %v1814 = vunpack.c.l.b16 %v1428
        %v1815 = vunpack.c.l.b16 %v1429
        %v1816 = vunpack.c.l.b16 %v1430
        %v1817 = vunpack.c.l.b16 %v1431
        %v1818 = vunpack.c.l.b16 %v1432
        %v1819 = vunpack.c.l.b16 %v1433
        %v1820 = vunpack.c.l.b16 %v1434
        %v1821 = vunpack.c.l.b16 %v1435
        %v1822 = vunpack.c.l.b16 %v1436
        %v1823 = vunpack.c.l.b16 %v1437
        %v1824 = vunpack.c.l.b16 %v1438
        %v1825 = vunpack.c.l.b16 %v1439
        %v1826 = vunpack.c.l.b16 %v1440
        %v1827 = vunpack.c.l.b16 %v1441
        %v1828 = vunpack.c.l.b16 %v1442
        %v1829 = vunpack.c.l.b16 %v1443
        %v1830 = vunpack.c.l.b16 %v1444
        %v1831 = vunpack.c.l.b16 %v1445
        %v1832 = vunpack.c.l.b16 %v1446
        %v1833 = vunpack.c.l.b16 %v1447
        %v1834 = vunpack.c.l.b16 %v1448
        %v1835 = vunpack.c.l.b16 %v1449
        %v1836 = vunpack.c.l.b16 %v1450
        %v1837 = vunpack.c.l.b16 %v1451
        %v1838 = vunpack.c.l.b16 %v1452
        %v1839 = vunpack.c.l.b16 %v1453
        %v1840 = vunpack.c.l.b16 %v1454
        %v1841 = vunpack.c.l.b16 %v1455
        %v1842 = vunpack.c.l.b16 %v1456
        %v1843 = vunpack.c.l.b16 %v1457
        %v1844 = vunpack.c.l.b16 %v1458
        %v1845 = vunpack.c.l.b16 %v1459
        %v1846 = vunpack.c.l.b16 %v1460
        %v1847 = vunpack.c.l.b16 %v1461
        %v1848 = vunpack.c.l.b16 %v1462
        %v1849 = vunpack.c.l.b16 %v1463
        %v1850 = vunpack.c.l.b16 %v1464
        %v1851 = vunpack.c.l.b16 %v1465
        %v1852 = vunpack.c.l.b16 %v1466
        %v1853 = vunpack.c.l.b16 %v1467
        %v1854 = vunpack.c.l.b16 %v1468
        %v1855 = vunpack.c.l.b16 %v1469
        %v1856 = vunpack.c.l.b16 %v1470
        %v1857 = vunpack.c.l.b16 %v1471
        %v1858 = vunpack.c.l.b16 %v1472
        %v1859 = vunpack.c.l.b16 %v1473
        %v1860 = vunpack.c.l.b16 %v1474
        %v1861 = vunpack.c.l.b16 %v1475
        %v1862 = vunpack.c.l.b16 %v1476
        %v1863 = vunpack.c.l.b16 %v1477
        %v1864 = vunpack.c.l.b16 %v1478
        %v1865 = vunpack.c.l.b16 %v1479
        %v1866 = vunpack.c.l.b16 %v1480
        %v1867 = vunpack.c.l.b16 %v1481
        %v1868 = vunpack.c.l.b16 %v1482
        %v1869 = vunpack.c.l.b16 %v1483
        %v1870 = vunpack.c.l.b16 %v1484
        %v1871 = vunpack.c.l.b16 %v1485
        %v1872 = vunpack.c.l.b16 %v1486
        %v1873 = vunpack.c.l.b16 %v1487
        %v1874 = vunpack.c.l.b16 %v1488
        %v1875 = vunpack.c.l.b16 %v1489
        %v1876 = vunpack.c.l.b16 %v1490
        %v1877 = vunpack.c.l.b16 %v1491
        %v1878 = vunpack.c.l.b16 %v1492
        %v1879 = vunpack.c.l.b16 %v1493
        %v1880 = vunpack.c.l.b16 %v1494
        %v1881 = vunpack.c.l.b16 %v1495
        %v1882 = vunpack.c.l.b16 %v1496
        %v1883 = vunpack.c.l.b16 %v1497
        %v1884 = vunpack.c.l.b16 %v1498
        %v1885 = vunpack.c.l.b16 %v1499
        %v1886 = vunpack.c.l.b16 %v1500
        %v1887 = vunpack.c.l.b16 %v1501
        %v1888 = vunpack.c.l.b16 %v1502
        %v1889 = vunpack.c.l.b16 %v1503
        %v1890 = vunpack.c.l.b16 %v1504
        %v1891 = vunpack.c.l.b16 %v1505
        %v1892 = vunpack.c.l.b16 %v1506
        %v1893 = vpack.c.b16 %v1766, %v1765
        %v1894 = vpack.c.b16 %v1768, %v1767
        %v1895 = vpack.c.b16 %v1770, %v1769
        %v1896 = vpack.c.b16 %v1772, %v1771
        %v1897 = vpack.c.b16 %v1774, %v1773
        %v1898 = vpack.c.b16 %v1776, %v1775
        %v1899 = vpack.c.b16 %v1778, %v1777
        %v1900 = vpack.c.b16 %v1780, %v1779
        %v1901 = vpack.c.b16 %v1782, %v1781
        %v1902 = vpack.c.b16 %v1784, %v1783
        %v1903 = vpack.c.b16 %v1786, %v1785
        %v1904 = vpack.c.b16 %v1788, %v1787
        %v1905 = vpack.c.b16 %v1790, %v1789
        %v1906 = vpack.c.b16 %v1792, %v1791
        %v1907 = vpack.c.b16 %v1794, %v1793
        %v1908 = vpack.c.b16 %v1796, %v1795
        %v1909 = vpack.c.b16 %v1798, %v1797
        %v1910 = vpack.c.b16 %v1800, %v1799
        %v1911 = vpack.c.b16 %v1802, %v1801
        %v1912 = vpack.c.b16 %v1804, %v1803
        %v1913 = vpack.c.b16 %v1806, %v1805
        %v1914 = vpack.c.b16 %v1808, %v1807
        %v1915 = vpack.c.b16 %v1810, %v1809
        %v1916 = vpack.c.b16 %v1812, %v1811
        %v1917 = vpack.c.b16 %v1814, %v1813
        %v1918 = vpack.c.b16 %v1816, %v1815
        %v1919 = vpack.c.b16 %v1818, %v1817
        %v1920 = vpack.c.b16 %v1820, %v1819
        %v1921 = vpack.c.b16 %v1822, %v1821
        %v1922 = vpack.c.b16 %v1824, %v1823
        %v1923 = vpack.c.b16 %v1826, %v1825
        %v1924 = vpack.c.b16 %v1828, %v1827
        %v1925 = vpack.c.b16 %v1830, %v1829
        %v1926 = vpack.c.b16 %v1832, %v1831
        %v1927 = vpack.c.b16 %v1834, %v1833
        %v1928 = vpack.c.b16 %v1836, %v1835
        %v1929 = vpack.c.b16 %v1838, %v1837
        %v1930 = vpack.c.b16 %v1840, %v1839
        %v1931 = vpack.c.b16 %v1842, %v1841
        %v1932 = vpack.c.b16 %v1844, %v1843
        %v1933 = vpack.c.b16 %v1846, %v1845
        %v1934 = vpack.c.b16 %v1848, %v1847
        %v1935 = vpack.c.b16 %v1850, %v1849
        %v1936 = vpack.c.b16 %v1852, %v1851
        %v1937 = vpack.c.b16 %v1854, %v1853
        %v1938 = vpack.c.b16 %v1856, %v1855
        %v1939 = vpack.c.b16 %v1858, %v1857
        %v1940 = vpack.c.b16 %v1860, %v1859
        %v1941 = vpack.c.b16 %v1862, %v1861
        %v1942 = vpack.c.b16 %v1864, %v1863
        %v1943 = vpack.c.b16 %v1866, %v1865
        %v1944 = vpack.c.b16 %v1868, %v1867
        %v1945 = vpack.c.b16 %v1870, %v1869
        %v1946 = vpack.c.b16 %v1872, %v1871
        %v1947 = vpack.c.b16 %v1874, %v1873
        %v1948 = vpack.c.b16 %v1876, %v1875
        %v1949 = vpack.c.b16 %v1878, %v1877
        %v1950 = vpack.c.b16 %v1880, %v1879
        %v1951 = vpack.c.b16 %v1882, %v1881
        %v1952 = vpack.c.b16 %v1884, %v1883
        %v1953 = vpack.c.b16 %v1886, %v1885
        %v1954 = vpack.c.b16 %v1888, %v1887
        %v1955 = vpack.c.b16 %v1890, %v1889
        %v1956 = vpack.c.b16 %v1892, %v1891
        %2021 = vxpose.xlu0.c.b16.start [1/8] %v1893, 128
        %2022 = vxpose.xlu0.c.b16.cont [2/8] %v1894, 128
        %2023 = vxpose.xlu0.c.b16.cont [3/8] %v1895, 128
        %2024 = vxpose.xlu0.c.b16.cont [4/8] %v1896, 128
        %2025 = vxpose.xlu0.c.b16.cont [5/8] %v1897, 128
        %2026 = vxpose.xlu0.c.b16.cont [6/8] %v1898, 128
        %2027 = vxpose.xlu0.c.b16.cont [7/8] %v1899, 128
        %2028 = vxpose.xlu0.c.b16.end [8/8] %v1900, 128
        %v2029 = vpop.trf.xlu0
        %v2030 = vpop.trf.xlu0
        %v2031 = vpop.trf.xlu0
        %v2032 = vpop.trf.xlu0
        %v2033 = vpop.trf.xlu0
        %v2034 = vpop.trf.xlu0
        %v2035 = vpop.trf.xlu0
        %v2036 = vpop.trf.xlu0
        %2037 = vxpose.xlu0.c.b16.start [1/8] %v1901, 128
        %2038 = vxpose.xlu0.c.b16.cont [2/8] %v1902, 128
        %2039 = vxpose.xlu0.c.b16.cont [3/8] %v1903, 128
        %2040 = vxpose.xlu0.c.b16.cont [4/8] %v1904, 128
        %2041 = vxpose.xlu0.c.b16.cont [5/8] %v1905, 128
        %2042 = vxpose.xlu0.c.b16.cont [6/8] %v1906, 128
        %2043 = vxpose.xlu0.c.b16.cont [7/8] %v1907, 128
        %2044 = vxpose.xlu0.c.b16.end [8/8] %v1908, 128
        %v2045 = vpop.trf.xlu0
        %v2046 = vpop.trf.xlu0
        %v2047 = vpop.trf.xlu0
        %v2048 = vpop.trf.xlu0
        %v2049 = vpop.trf.xlu0
        %v2050 = vpop.trf.xlu0
        %v2051 = vpop.trf.xlu0
        %v2052 = vpop.trf.xlu0
        %2053 = vxpose.xlu0.c.b16.start [1/8] %v1909, 128
        %2054 = vxpose.xlu0.c.b16.cont [2/8] %v1910, 128
        %2055 = vxpose.xlu0.c.b16.cont [3/8] %v1911, 128
        %2056 = vxpose.xlu0.c.b16.cont [4/8] %v1912, 128
        %2057 = vxpose.xlu0.c.b16.cont [5/8] %v1913, 128
        %2058 = vxpose.xlu0.c.b16.cont [6/8] %v1914, 128
        %2059 = vxpose.xlu0.c.b16.cont [7/8] %v1915, 128
        %2060 = vxpose.xlu0.c.b16.end [8/8] %v1916, 128
        %v2061 = vpop.trf.xlu0
        %v2062 = vpop.trf.xlu0
        %v2063 = vpop.trf.xlu0
        %v2064 = vpop.trf.xlu0
        %v2065 = vpop.trf.xlu0
        %v2066 = vpop.trf.xlu0
        %v2067 = vpop.trf.xlu0
        %v2068 = vpop.trf.xlu0
        %2069 = vxpose.xlu0.c.b16.start [1/8] %v1917, 128
        %2070 = vxpose.xlu0.c.b16.cont [2/8] %v1918, 128
        %2071 = vxpose.xlu0.c.b16.cont [3/8] %v1919, 128
        %2072 = vxpose.xlu0.c.b16.cont [4/8] %v1920, 128
        %2073 = vxpose.xlu0.c.b16.cont [5/8] %v1921, 128
        %2074 = vxpose.xlu0.c.b16.cont [6/8] %v1922, 128
        %2075 = vxpose.xlu0.c.b16.cont [7/8] %v1923, 128
        %2076 = vxpose.xlu0.c.b16.end [8/8] %v1924, 128
        %v2077 = vpop.trf.xlu0
        %v2078 = vpop.trf.xlu0
        %v2079 = vpop.trf.xlu0
        %v2080 = vpop.trf.xlu0
        %v2081 = vpop.trf.xlu0
        %v2082 = vpop.trf.xlu0
        %v2083 = vpop.trf.xlu0
        %v2084 = vpop.trf.xlu0
        %2085 = vxpose.xlu0.c.b16.start [1/8] %v1925, 128
        %2086 = vxpose.xlu0.c.b16.cont [2/8] %v1926, 128
        %2087 = vxpose.xlu0.c.b16.cont [3/8] %v1927, 128
        %2088 = vxpose.xlu0.c.b16.cont [4/8] %v1928, 128
        %2089 = vxpose.xlu0.c.b16.cont [5/8] %v1929, 128
        %2090 = vxpose.xlu0.c.b16.cont [6/8] %v1930, 128
        %2091 = vxpose.xlu0.c.b16.cont [7/8] %v1931, 128
        %2092 = vxpose.xlu0.c.b16.end [8/8] %v1932, 128
        %v2093 = vpop.trf.xlu0
        %v2094 = vpop.trf.xlu0
        %v2095 = vpop.trf.xlu0
        %v2096 = vpop.trf.xlu0
        %v2097 = vpop.trf.xlu0
        %v2098 = vpop.trf.xlu0
        %v2099 = vpop.trf.xlu0
        %v2100 = vpop.trf.xlu0
        %2101 = vxpose.xlu0.c.b16.start [1/8] %v1933, 128
        %2102 = vxpose.xlu0.c.b16.cont [2/8] %v1934, 128
        %2103 = vxpose.xlu0.c.b16.cont [3/8] %v1935, 128
        %2104 = vxpose.xlu0.c.b16.cont [4/8] %v1936, 128
        %2105 = vxpose.xlu0.c.b16.cont [5/8] %v1937, 128
        %2106 = vxpose.xlu0.c.b16.cont [6/8] %v1938, 128
        %2107 = vxpose.xlu0.c.b16.cont [7/8] %v1939, 128
        %2108 = vxpose.xlu0.c.b16.end [8/8] %v1940, 128
        %v2109 = vpop.trf.xlu0
        %v2110 = vpop.trf.xlu0
        %v2111 = vpop.trf.xlu0
        %v2112 = vpop.trf.xlu0
        %v2113 = vpop.trf.xlu0
        %v2114 = vpop.trf.xlu0
        %v2115 = vpop.trf.xlu0
        %v2116 = vpop.trf.xlu0
        %2117 = vxpose.xlu0.c.b16.start [1/8] %v1941, 128
        %2118 = vxpose.xlu0.c.b16.cont [2/8] %v1942, 128
        %2119 = vxpose.xlu0.c.b16.cont [3/8] %v1943, 128
        %2120 = vxpose.xlu0.c.b16.cont [4/8] %v1944, 128
        %2121 = vxpose.xlu0.c.b16.cont [5/8] %v1945, 128
        %2122 = vxpose.xlu0.c.b16.cont [6/8] %v1946, 128
        %2123 = vxpose.xlu0.c.b16.cont [7/8] %v1947, 128
        %2124 = vxpose.xlu0.c.b16.end [8/8] %v1948, 128
        %v2125 = vpop.trf.xlu0
        %v2126 = vpop.trf.xlu0
        %v2127 = vpop.trf.xlu0
        %v2128 = vpop.trf.xlu0
        %v2129 = vpop.trf.xlu0
        %v2130 = vpop.trf.xlu0
        %v2131 = vpop.trf.xlu0
        %v2132 = vpop.trf.xlu0
        %2133 = vxpose.xlu0.c.b16.start [1/8] %v1949, 128
        %2134 = vxpose.xlu0.c.b16.cont [2/8] %v1950, 128
        %2135 = vxpose.xlu0.c.b16.cont [3/8] %v1951, 128
        %2136 = vxpose.xlu0.c.b16.cont [4/8] %v1952, 128
        %2137 = vxpose.xlu0.c.b16.cont [5/8] %v1953, 128
        %2138 = vxpose.xlu0.c.b16.cont [6/8] %v1954, 128
        %2139 = vxpose.xlu0.c.b16.cont [7/8] %v1955, 128
        %2140 = vxpose.xlu0.c.b16.end [8/8] %v1956, 128
        %v2141 = vpop.trf.xlu0
        %v2142 = vpop.trf.xlu0
        %v2143 = vpop.trf.xlu0
        %v2144 = vpop.trf.xlu0
        %v2145 = vpop.trf.xlu0
        %v2146 = vpop.trf.xlu0
        %v2147 = vpop.trf.xlu0
        %v2148 = vpop.trf.xlu0
        %v2277 = vunpack.c.l.b16 %v1507
        %v2278 = vunpack.c.l.b16 %v1508
        %v2279 = vunpack.c.l.b16 %v1509
        %v2280 = vunpack.c.l.b16 %v1510
        %v2281 = vunpack.c.l.b16 %v1511
        %v2282 = vunpack.c.l.b16 %v1512
        %v2283 = vunpack.c.l.b16 %v1513
        %v2284 = vunpack.c.l.b16 %v1514
        %v2285 = vunpack.c.l.b16 %v1515
        %v2286 = vunpack.c.l.b16 %v1516
        %v2287 = vunpack.c.l.b16 %v1517
        %v2288 = vunpack.c.l.b16 %v1518
        %v2289 = vunpack.c.l.b16 %v1519
        %v2290 = vunpack.c.l.b16 %v1520
        %v2291 = vunpack.c.l.b16 %v1521
        %v2292 = vunpack.c.l.b16 %v1522
        %v2293 = vunpack.c.l.b16 %v1523
        %v2294 = vunpack.c.l.b16 %v1524
        %v2295 = vunpack.c.l.b16 %v1525
        %v2296 = vunpack.c.l.b16 %v1526
        %v2297 = vunpack.c.l.b16 %v1527
        %v2298 = vunpack.c.l.b16 %v1528
        %v2299 = vunpack.c.l.b16 %v1529
        %v2300 = vunpack.c.l.b16 %v1530
        %v2301 = vunpack.c.l.b16 %v1531
        %v2302 = vunpack.c.l.b16 %v1532
        %v2303 = vunpack.c.l.b16 %v1533
        %v2304 = vunpack.c.l.b16 %v1534
        %v2305 = vunpack.c.l.b16 %v1535
        %v2306 = vunpack.c.l.b16 %v1536
        %v2307 = vunpack.c.l.b16 %v1537
        %v2308 = vunpack.c.l.b16 %v1538
        %v2309 = vunpack.c.l.b16 %v1539
        %v2310 = vunpack.c.l.b16 %v1540
        %v2311 = vunpack.c.l.b16 %v1541
        %v2312 = vunpack.c.l.b16 %v1542
        %v2313 = vunpack.c.l.b16 %v1543
        %v2314 = vunpack.c.l.b16 %v1544
        %v2315 = vunpack.c.l.b16 %v1545
        %v2316 = vunpack.c.l.b16 %v1546
        %v2317 = vunpack.c.l.b16 %v1547
        %v2318 = vunpack.c.l.b16 %v1548
        %v2319 = vunpack.c.l.b16 %v1549
        %v2320 = vunpack.c.l.b16 %v1550
        %v2321 = vunpack.c.l.b16 %v1551
        %v2322 = vunpack.c.l.b16 %v1552
        %v2323 = vunpack.c.l.b16 %v1553
        %v2324 = vunpack.c.l.b16 %v1554
        %v2325 = vunpack.c.l.b16 %v1555
        %v2326 = vunpack.c.l.b16 %v1556
        %v2327 = vunpack.c.l.b16 %v1557
        %v2328 = vunpack.c.l.b16 %v1558
        %v2329 = vunpack.c.l.b16 %v1559
        %v2330 = vunpack.c.l.b16 %v1560
        %v2331 = vunpack.c.l.b16 %v1561
        %v2332 = vunpack.c.l.b16 %v1562
        %v2333 = vunpack.c.l.b16 %v1563
        %v2334 = vunpack.c.l.b16 %v1564
        %v2335 = vunpack.c.l.b16 %v1565
        %v2336 = vunpack.c.l.b16 %v1566
        %v2337 = vunpack.c.l.b16 %v1567
        %v2338 = vunpack.c.l.b16 %v1568
        %v2339 = vunpack.c.l.b16 %v1569
        %v2340 = vunpack.c.l.b16 %v1570
        %v2341 = vunpack.c.l.b16 %v1571
        %v2342 = vunpack.c.l.b16 %v1572
        %v2343 = vunpack.c.l.b16 %v1573
        %v2344 = vunpack.c.l.b16 %v1574
        %v2345 = vunpack.c.l.b16 %v1575
        %v2346 = vunpack.c.l.b16 %v1576
        %v2347 = vunpack.c.l.b16 %v1577
        %v2348 = vunpack.c.l.b16 %v1578
        %v2349 = vunpack.c.l.b16 %v1579
        %v2350 = vunpack.c.l.b16 %v1580
        %v2351 = vunpack.c.l.b16 %v1581
        %v2352 = vunpack.c.l.b16 %v1582
        %v2353 = vunpack.c.l.b16 %v1583
        %v2354 = vunpack.c.l.b16 %v1584
        %v2355 = vunpack.c.l.b16 %v1585
        %v2356 = vunpack.c.l.b16 %v1586
        %v2357 = vunpack.c.l.b16 %v1587
        %v2358 = vunpack.c.l.b16 %v1588
        %v2359 = vunpack.c.l.b16 %v1589
        %v2360 = vunpack.c.l.b16 %v1590
        %v2361 = vunpack.c.l.b16 %v1591
        %v2362 = vunpack.c.l.b16 %v1592
        %v2363 = vunpack.c.l.b16 %v1593
        %v2364 = vunpack.c.l.b16 %v1594
        %v2365 = vunpack.c.l.b16 %v1595
        %v2366 = vunpack.c.l.b16 %v1596
        %v2367 = vunpack.c.l.b16 %v1597
        %v2368 = vunpack.c.l.b16 %v1598
        %v2369 = vunpack.c.l.b16 %v1599
        %v2370 = vunpack.c.l.b16 %v1600
        %v2371 = vunpack.c.l.b16 %v1601
        %v2372 = vunpack.c.l.b16 %v1602
        %v2373 = vunpack.c.l.b16 %v1603
        %v2374 = vunpack.c.l.b16 %v1604
        %v2375 = vunpack.c.l.b16 %v1605
        %v2376 = vunpack.c.l.b16 %v1606
        %v2377 = vunpack.c.l.b16 %v1607
        %v2378 = vunpack.c.l.b16 %v1608
        %v2379 = vunpack.c.l.b16 %v1609
        %v2380 = vunpack.c.l.b16 %v1610
        %v2381 = vunpack.c.l.b16 %v1611
        %v2382 = vunpack.c.l.b16 %v1612
        %v2383 = vunpack.c.l.b16 %v1613
        %v2384 = vunpack.c.l.b16 %v1614
        %v2385 = vunpack.c.l.b16 %v1615
        %v2386 = vunpack.c.l.b16 %v1616
        %v2387 = vunpack.c.l.b16 %v1617
        %v2388 = vunpack.c.l.b16 %v1618
        %v2389 = vunpack.c.l.b16 %v1619
        %v2390 = vunpack.c.l.b16 %v1620
        %v2391 = vunpack.c.l.b16 %v1621
        %v2392 = vunpack.c.l.b16 %v1622
        %v2393 = vunpack.c.l.b16 %v1623
        %v2394 = vunpack.c.l.b16 %v1624
        %v2395 = vunpack.c.l.b16 %v1625
        %v2396 = vunpack.c.l.b16 %v1626
        %v2397 = vunpack.c.l.b16 %v1627
        %v2398 = vunpack.c.l.b16 %v1628
        %v2399 = vunpack.c.l.b16 %v1629
        %v2400 = vunpack.c.l.b16 %v1630
        %v2401 = vunpack.c.l.b16 %v1631
        %v2402 = vunpack.c.l.b16 %v1632
        %v2403 = vunpack.c.l.b16 %v1633
        %v2404 = vunpack.c.l.b16 %v1634
        %v2405 = vpack.c.b16 %v2278, %v2277
        %v2406 = vpack.c.b16 %v2280, %v2279
        %v2407 = vpack.c.b16 %v2282, %v2281
        %v2408 = vpack.c.b16 %v2284, %v2283
        %v2409 = vpack.c.b16 %v2286, %v2285
        %v2410 = vpack.c.b16 %v2288, %v2287
        %v2411 = vpack.c.b16 %v2290, %v2289
        %v2412 = vpack.c.b16 %v2292, %v2291
        %v2413 = vpack.c.b16 %v2294, %v2293
        %v2414 = vpack.c.b16 %v2296, %v2295
        %v2415 = vpack.c.b16 %v2298, %v2297
        %v2416 = vpack.c.b16 %v2300, %v2299
        %v2417 = vpack.c.b16 %v2302, %v2301
        %v2418 = vpack.c.b16 %v2304, %v2303
        %v2419 = vpack.c.b16 %v2306, %v2305
        %v2420 = vpack.c.b16 %v2308, %v2307
        %v2421 = vpack.c.b16 %v2310, %v2309
        %v2422 = vpack.c.b16 %v2312, %v2311
        %v2423 = vpack.c.b16 %v2314, %v2313
        %v2424 = vpack.c.b16 %v2316, %v2315
        %v2425 = vpack.c.b16 %v2318, %v2317
        %v2426 = vpack.c.b16 %v2320, %v2319
        %v2427 = vpack.c.b16 %v2322, %v2321
        %v2428 = vpack.c.b16 %v2324, %v2323
        %v2429 = vpack.c.b16 %v2326, %v2325
        %v2430 = vpack.c.b16 %v2328, %v2327
        %v2431 = vpack.c.b16 %v2330, %v2329
        %v2432 = vpack.c.b16 %v2332, %v2331
        %v2433 = vpack.c.b16 %v2334, %v2333
        %v2434 = vpack.c.b16 %v2336, %v2335
        %v2435 = vpack.c.b16 %v2338, %v2337
        %v2436 = vpack.c.b16 %v2340, %v2339
        %v2437 = vpack.c.b16 %v2342, %v2341
        %v2438 = vpack.c.b16 %v2344, %v2343
        %v2439 = vpack.c.b16 %v2346, %v2345
        %v2440 = vpack.c.b16 %v2348, %v2347
        %v2441 = vpack.c.b16 %v2350, %v2349
        %v2442 = vpack.c.b16 %v2352, %v2351
        %v2443 = vpack.c.b16 %v2354, %v2353
        %v2444 = vpack.c.b16 %v2356, %v2355
        %v2445 = vpack.c.b16 %v2358, %v2357
        %v2446 = vpack.c.b16 %v2360, %v2359
        %v2447 = vpack.c.b16 %v2362, %v2361
        %v2448 = vpack.c.b16 %v2364, %v2363
        %v2449 = vpack.c.b16 %v2366, %v2365
        %v2450 = vpack.c.b16 %v2368, %v2367
        %v2451 = vpack.c.b16 %v2370, %v2369
        %v2452 = vpack.c.b16 %v2372, %v2371
        %v2453 = vpack.c.b16 %v2374, %v2373
        %v2454 = vpack.c.b16 %v2376, %v2375
        %v2455 = vpack.c.b16 %v2378, %v2377
        %v2456 = vpack.c.b16 %v2380, %v2379
        %v2457 = vpack.c.b16 %v2382, %v2381
        %v2458 = vpack.c.b16 %v2384, %v2383
        %v2459 = vpack.c.b16 %v2386, %v2385
        %v2460 = vpack.c.b16 %v2388, %v2387
        %v2461 = vpack.c.b16 %v2390, %v2389
        %v2462 = vpack.c.b16 %v2392, %v2391
        %v2463 = vpack.c.b16 %v2394, %v2393
        %v2464 = vpack.c.b16 %v2396, %v2395
        %v2465 = vpack.c.b16 %v2398, %v2397
        %v2466 = vpack.c.b16 %v2400, %v2399
        %v2467 = vpack.c.b16 %v2402, %v2401
        %v2468 = vpack.c.b16 %v2404, %v2403
        %2533 = vmatpush.bf16.msra.mxu0 %v2412
        %2534 = vmatpush.bf16.msra.mxu0 %v2411
        %2535 = vmatpush.bf16.msra.mxu0 %v2410
        %2536 = vmatpush.bf16.msra.mxu0 %v2409
        %2537 = vmatpush.bf16.msra.mxu0 %v2408
        %2538 = vmatpush.bf16.msra.mxu0 %v2407
        %2539 = vmatpush.bf16.msra.mxu0 %v2406
        %2540 = vmatpush.bf16.msra.mxu0 %v2405
        %2541 = vmatmul.bf16.gmra.mxu0 %v2029
        %v2542 = vpop.f32.mrf.mxu0
        %v2543 = vadd.f32 %v1636, %v2542
        %v2544 = vpop.f32.mrf.mxu0
        %v2545 = vadd.f32 %v1636, %v2544
        %2546 = vmatmul.bf16.gmra.mxu0 %v2030
        %v2547 = vpop.f32.mrf.mxu0
        %v2548 = vadd.f32 %v1636, %v2547
        %v2549 = vpop.f32.mrf.mxu0
        %v2550 = vadd.f32 %v1636, %v2549
        %2551 = vmatmul.bf16.gmra.mxu0 %v2031
        %v2552 = vpop.f32.mrf.mxu0
        %v2553 = vadd.f32 %v1636, %v2552
        %v2554 = vpop.f32.mrf.mxu0
        %v2555 = vadd.f32 %v1636, %v2554
        %2556 = vmatmul.bf16.gmra.mxu0 %v2032
        %v2557 = vpop.f32.mrf.mxu0
        %v2558 = vadd.f32 %v1636, %v2557
        %v2559 = vpop.f32.mrf.mxu0
        %v2560 = vadd.f32 %v1636, %v2559
        %2561 = vmatmul.bf16.gmra.mxu0 %v2033
        %v2562 = vpop.f32.mrf.mxu0
        %v2563 = vadd.f32 %v1636, %v2562
        %v2564 = vpop.f32.mrf.mxu0
        %v2565 = vadd.f32 %v1636, %v2564
        %2566 = vmatmul.bf16.gmra.mxu0 %v2034
        %v2567 = vpop.f32.mrf.mxu0
        %v2568 = vadd.f32 %v1636, %v2567
        %v2569 = vpop.f32.mrf.mxu0
        %v2570 = vadd.f32 %v1636, %v2569
        %2571 = vmatmul.bf16.gmra.mxu0 %v2035
        %v2572 = vpop.f32.mrf.mxu0
        %v2573 = vadd.f32 %v1636, %v2572
        %v2574 = vpop.f32.mrf.mxu0
        %v2575 = vadd.f32 %v1636, %v2574
        %2576 = vmatmul.bf16.gmra.mxu0 %v2036
        %v2577 = vpop.f32.mrf.mxu0
        %v2578 = vadd.f32 %v1636, %v2577
        %v2579 = vpop.f32.mrf.mxu0
        %v2580 = vadd.f32 %v1636, %v2579
        %2581 = vdwg.mxu0
        %2582 = vmatpush.bf16.msra.mxu0 %v2420
        %2583 = vmatpush.bf16.msra.mxu0 %v2419
        %2584 = vmatpush.bf16.msra.mxu0 %v2418
        %2585 = vmatpush.bf16.msra.mxu0 %v2417
        %2586 = vmatpush.bf16.msra.mxu0 %v2416
        %2587 = vmatpush.bf16.msra.mxu0 %v2415
        %2588 = vmatpush.bf16.msra.mxu0 %v2414
        %2589 = vmatpush.bf16.msra.mxu0 %v2413
        %2590 = vmatmul.bf16.gmra.mxu0 %v2045
        %v2591 = vpop.f32.mrf.mxu0
        %v2592 = vadd.f32 %v2543, %v2591
        %v2593 = vpop.f32.mrf.mxu0
        %v2594 = vadd.f32 %v2545, %v2593
        %2595 = vmatmul.bf16.gmra.mxu0 %v2046
        %v2596 = vpop.f32.mrf.mxu0
        %v2597 = vadd.f32 %v2548, %v2596
        %v2598 = vpop.f32.mrf.mxu0
        %v2599 = vadd.f32 %v2550, %v2598
        %2600 = vmatmul.bf16.gmra.mxu0 %v2047
        %v2601 = vpop.f32.mrf.mxu0
        %v2602 = vadd.f32 %v2553, %v2601
        %v2603 = vpop.f32.mrf.mxu0
        %v2604 = vadd.f32 %v2555, %v2603
        %2605 = vmatmul.bf16.gmra.mxu0 %v2048
        %v2606 = vpop.f32.mrf.mxu0
        %v2607 = vadd.f32 %v2558, %v2606
        %v2608 = vpop.f32.mrf.mxu0
        %v2609 = vadd.f32 %v2560, %v2608
        %2610 = vmatmul.bf16.gmra.mxu0 %v2049
        %v2611 = vpop.f32.mrf.mxu0
        %v2612 = vadd.f32 %v2563, %v2611
        %v2613 = vpop.f32.mrf.mxu0
        %v2614 = vadd.f32 %v2565, %v2613
        %2615 = vmatmul.bf16.gmra.mxu0 %v2050
        %v2616 = vpop.f32.mrf.mxu0
        %v2617 = vadd.f32 %v2568, %v2616
        %v2618 = vpop.f32.mrf.mxu0
        %v2619 = vadd.f32 %v2570, %v2618
        %2620 = vmatmul.bf16.gmra.mxu0 %v2051
        %v2621 = vpop.f32.mrf.mxu0
        %v2622 = vadd.f32 %v2573, %v2621
        %v2623 = vpop.f32.mrf.mxu0
        %v2624 = vadd.f32 %v2575, %v2623
        %2625 = vmatmul.bf16.gmra.mxu0 %v2052
        %v2626 = vpop.f32.mrf.mxu0
        %v2627 = vadd.f32 %v2578, %v2626
        %v2628 = vpop.f32.mrf.mxu0
        %v2629 = vadd.f32 %v2580, %v2628
        %2630 = vdwg.mxu0
        %2631 = vmatpush.bf16.msra.mxu0 %v2428
        %2632 = vmatpush.bf16.msra.mxu0 %v2427
        %2633 = vmatpush.bf16.msra.mxu0 %v2426
        %2634 = vmatpush.bf16.msra.mxu0 %v2425
        %2635 = vmatpush.bf16.msra.mxu0 %v2424
        %2636 = vmatpush.bf16.msra.mxu0 %v2423
        %2637 = vmatpush.bf16.msra.mxu0 %v2422
        %2638 = vmatpush.bf16.msra.mxu0 %v2421
        %2639 = vmatmul.bf16.gmra.mxu0 %v2061
        %v2640 = vpop.f32.mrf.mxu0
        %v2641 = vadd.f32 %v2592, %v2640
        %v2642 = vpop.f32.mrf.mxu0
        %v2643 = vadd.f32 %v2594, %v2642
        %2644 = vmatmul.bf16.gmra.mxu0 %v2062
        %v2645 = vpop.f32.mrf.mxu0
        %v2646 = vadd.f32 %v2597, %v2645
        %v2647 = vpop.f32.mrf.mxu0
        %v2648 = vadd.f32 %v2599, %v2647
        %2649 = vmatmul.bf16.gmra.mxu0 %v2063
        %v2650 = vpop.f32.mrf.mxu0
        %v2651 = vadd.f32 %v2602, %v2650
        %v2652 = vpop.f32.mrf.mxu0
        %v2653 = vadd.f32 %v2604, %v2652
        %2654 = vmatmul.bf16.gmra.mxu0 %v2064
        %v2655 = vpop.f32.mrf.mxu0
        %v2656 = vadd.f32 %v2607, %v2655
        %v2657 = vpop.f32.mrf.mxu0
        %v2658 = vadd.f32 %v2609, %v2657
        %2659 = vmatmul.bf16.gmra.mxu0 %v2065
        %v2660 = vpop.f32.mrf.mxu0
        %v2661 = vadd.f32 %v2612, %v2660
        %v2662 = vpop.f32.mrf.mxu0
        %v2663 = vadd.f32 %v2614, %v2662
        %2664 = vmatmul.bf16.gmra.mxu0 %v2066
        %v2665 = vpop.f32.mrf.mxu0
        %v2666 = vadd.f32 %v2617, %v2665
        %v2667 = vpop.f32.mrf.mxu0
        %v2668 = vadd.f32 %v2619, %v2667
        %2669 = vmatmul.bf16.gmra.mxu0 %v2067
        %v2670 = vpop.f32.mrf.mxu0
        %v2671 = vadd.f32 %v2622, %v2670
        %v2672 = vpop.f32.mrf.mxu0
        %v2673 = vadd.f32 %v2624, %v2672
        %2674 = vmatmul.bf16.gmra.mxu0 %v2068
        %v2675 = vpop.f32.mrf.mxu0
        %v2676 = vadd.f32 %v2627, %v2675
        %v2677 = vpop.f32.mrf.mxu0
        %v2678 = vadd.f32 %v2629, %v2677
        %2679 = vdwg.mxu0
        %2680 = vmatpush.bf16.msra.mxu0 %v2436
        %2681 = vmatpush.bf16.msra.mxu0 %v2435
        %2682 = vmatpush.bf16.msra.mxu0 %v2434
        %2683 = vmatpush.bf16.msra.mxu0 %v2433
        %2684 = vmatpush.bf16.msra.mxu0 %v2432
        %2685 = vmatpush.bf16.msra.mxu0 %v2431
        %2686 = vmatpush.bf16.msra.mxu0 %v2430
        %2687 = vmatpush.bf16.msra.mxu0 %v2429
        %2688 = vmatmul.bf16.gmra.mxu0 %v2077
        %v2689 = vpop.f32.mrf.mxu0
        %v2690 = vadd.f32 %v2641, %v2689
        %v2691 = vpop.f32.mrf.mxu0
        %v2692 = vadd.f32 %v2643, %v2691
        %2693 = vmatmul.bf16.gmra.mxu0 %v2078
        %v2694 = vpop.f32.mrf.mxu0
        %v2695 = vadd.f32 %v2646, %v2694
        %v2696 = vpop.f32.mrf.mxu0
        %v2697 = vadd.f32 %v2648, %v2696
        %2698 = vmatmul.bf16.gmra.mxu0 %v2079
        %v2699 = vpop.f32.mrf.mxu0
        %v2700 = vadd.f32 %v2651, %v2699
        %v2701 = vpop.f32.mrf.mxu0
        %v2702 = vadd.f32 %v2653, %v2701
        %2703 = vmatmul.bf16.gmra.mxu0 %v2080
        %v2704 = vpop.f32.mrf.mxu0
        %v2705 = vadd.f32 %v2656, %v2704
        %v2706 = vpop.f32.mrf.mxu0
        %v2707 = vadd.f32 %v2658, %v2706
        %2708 = vmatmul.bf16.gmra.mxu0 %v2081
        %v2709 = vpop.f32.mrf.mxu0
        %v2710 = vadd.f32 %v2661, %v2709
        %v2711 = vpop.f32.mrf.mxu0
        %v2712 = vadd.f32 %v2663, %v2711
        %2713 = vmatmul.bf16.gmra.mxu0 %v2082
        %v2714 = vpop.f32.mrf.mxu0
        %v2715 = vadd.f32 %v2666, %v2714
        %v2716 = vpop.f32.mrf.mxu0
        %v2717 = vadd.f32 %v2668, %v2716
        %2718 = vmatmul.bf16.gmra.mxu0 %v2083
        %v2719 = vpop.f32.mrf.mxu0
        %v2720 = vadd.f32 %v2671, %v2719
        %v2721 = vpop.f32.mrf.mxu0
        %v2722 = vadd.f32 %v2673, %v2721
        %2723 = vmatmul.bf16.gmra.mxu0 %v2084
        %v2724 = vpop.f32.mrf.mxu0
        %v2725 = vadd.f32 %v2676, %v2724
        %v2726 = vpop.f32.mrf.mxu0
        %v2727 = vadd.f32 %v2678, %v2726
        %2728 = vdwg.mxu0
        %2729 = vmatpush.bf16.msra.mxu0 %v2444
        %2730 = vmatpush.bf16.msra.mxu0 %v2443
        %2731 = vmatpush.bf16.msra.mxu0 %v2442
        %2732 = vmatpush.bf16.msra.mxu0 %v2441
        %2733 = vmatpush.bf16.msra.mxu0 %v2440
        %2734 = vmatpush.bf16.msra.mxu0 %v2439
        %2735 = vmatpush.bf16.msra.mxu0 %v2438
        %2736 = vmatpush.bf16.msra.mxu0 %v2437
        %2737 = vmatmul.bf16.gmra.mxu0 %v2093
        %v2738 = vpop.f32.mrf.mxu0
        %v2739 = vadd.f32 %v2690, %v2738
        %v2740 = vpop.f32.mrf.mxu0
        %v2741 = vadd.f32 %v2692, %v2740
        %2742 = vmatmul.bf16.gmra.mxu0 %v2094
        %v2743 = vpop.f32.mrf.mxu0
        %v2744 = vadd.f32 %v2695, %v2743
        %v2745 = vpop.f32.mrf.mxu0
        %v2746 = vadd.f32 %v2697, %v2745
        %2747 = vmatmul.bf16.gmra.mxu0 %v2095
        %v2748 = vpop.f32.mrf.mxu0
        %v2749 = vadd.f32 %v2700, %v2748
        %v2750 = vpop.f32.mrf.mxu0
        %v2751 = vadd.f32 %v2702, %v2750
        %2752 = vmatmul.bf16.gmra.mxu0 %v2096
        %v2753 = vpop.f32.mrf.mxu0
        %v2754 = vadd.f32 %v2705, %v2753
        %v2755 = vpop.f32.mrf.mxu0
        %v2756 = vadd.f32 %v2707, %v2755
        %2757 = vmatmul.bf16.gmra.mxu0 %v2097
        %v2758 = vpop.f32.mrf.mxu0
        %v2759 = vadd.f32 %v2710, %v2758
        %v2760 = vpop.f32.mrf.mxu0
        %v2761 = vadd.f32 %v2712, %v2760
        %2762 = vmatmul.bf16.gmra.mxu0 %v2098
        %v2763 = vpop.f32.mrf.mxu0
        %v2764 = vadd.f32 %v2715, %v2763
        %v2765 = vpop.f32.mrf.mxu0
        %v2766 = vadd.f32 %v2717, %v2765
        %2767 = vmatmul.bf16.gmra.mxu0 %v2099
        %v2768 = vpop.f32.mrf.mxu0
        %v2769 = vadd.f32 %v2720, %v2768
        %v2770 = vpop.f32.mrf.mxu0
        %v2771 = vadd.f32 %v2722, %v2770
        %2772 = vmatmul.bf16.gmra.mxu0 %v2100
        %v2773 = vpop.f32.mrf.mxu0
        %v2774 = vadd.f32 %v2725, %v2773
        %v2775 = vpop.f32.mrf.mxu0
        %v2776 = vadd.f32 %v2727, %v2775
        %2777 = vdwg.mxu0
        %2778 = vmatpush.bf16.msra.mxu0 %v2452
        %2779 = vmatpush.bf16.msra.mxu0 %v2451
        %2780 = vmatpush.bf16.msra.mxu0 %v2450
        %2781 = vmatpush.bf16.msra.mxu0 %v2449
        %2782 = vmatpush.bf16.msra.mxu0 %v2448
        %2783 = vmatpush.bf16.msra.mxu0 %v2447
        %2784 = vmatpush.bf16.msra.mxu0 %v2446
        %2785 = vmatpush.bf16.msra.mxu0 %v2445
        %2786 = vmatmul.bf16.gmra.mxu0 %v2109
        %v2787 = vpop.f32.mrf.mxu0
        %v2788 = vadd.f32 %v2739, %v2787
        %v2789 = vpop.f32.mrf.mxu0
        %v2790 = vadd.f32 %v2741, %v2789
        %2791 = vmatmul.bf16.gmra.mxu0 %v2110
        %v2792 = vpop.f32.mrf.mxu0
        %v2793 = vadd.f32 %v2744, %v2792
        %v2794 = vpop.f32.mrf.mxu0
        %v2795 = vadd.f32 %v2746, %v2794
        %2796 = vmatmul.bf16.gmra.mxu0 %v2111
        %v2797 = vpop.f32.mrf.mxu0
        %v2798 = vadd.f32 %v2749, %v2797
        %v2799 = vpop.f32.mrf.mxu0
        %v2800 = vadd.f32 %v2751, %v2799
        %2801 = vmatmul.bf16.gmra.mxu0 %v2112
        %v2802 = vpop.f32.mrf.mxu0
        %v2803 = vadd.f32 %v2754, %v2802
        %v2804 = vpop.f32.mrf.mxu0
        %v2805 = vadd.f32 %v2756, %v2804
        %2806 = vmatmul.bf16.gmra.mxu0 %v2113
        %v2807 = vpop.f32.mrf.mxu0
        %v2808 = vadd.f32 %v2759, %v2807
        %v2809 = vpop.f32.mrf.mxu0
        %v2810 = vadd.f32 %v2761, %v2809
        %2811 = vmatmul.bf16.gmra.mxu0 %v2114
        %v2812 = vpop.f32.mrf.mxu0
        %v2813 = vadd.f32 %v2764, %v2812
        %v2814 = vpop.f32.mrf.mxu0
        %v2815 = vadd.f32 %v2766, %v2814
        %2816 = vmatmul.bf16.gmra.mxu0 %v2115
        %v2817 = vpop.f32.mrf.mxu0
        %v2818 = vadd.f32 %v2769, %v2817
        %v2819 = vpop.f32.mrf.mxu0
        %v2820 = vadd.f32 %v2771, %v2819
        %2821 = vmatmul.bf16.gmra.mxu0 %v2116
        %v2822 = vpop.f32.mrf.mxu0
        %v2823 = vadd.f32 %v2774, %v2822
        %v2824 = vpop.f32.mrf.mxu0
        %v2825 = vadd.f32 %v2776, %v2824
        %2826 = vdwg.mxu0
        %2827 = vmatpush.bf16.msra.mxu0 %v2460
        %2828 = vmatpush.bf16.msra.mxu0 %v2459
        %2829 = vmatpush.bf16.msra.mxu0 %v2458
        %2830 = vmatpush.bf16.msra.mxu0 %v2457
        %2831 = vmatpush.bf16.msra.mxu0 %v2456
        %2832 = vmatpush.bf16.msra.mxu0 %v2455
        %2833 = vmatpush.bf16.msra.mxu0 %v2454
        %2834 = vmatpush.bf16.msra.mxu0 %v2453
        %2835 = vmatmul.bf16.gmra.mxu0 %v2125
        %v2836 = vpop.f32.mrf.mxu0
        %v2837 = vadd.f32 %v2788, %v2836
        %v2838 = vpop.f32.mrf.mxu0
        %v2839 = vadd.f32 %v2790, %v2838
        %2840 = vmatmul.bf16.gmra.mxu0 %v2126
        %v2841 = vpop.f32.mrf.mxu0
        %v2842 = vadd.f32 %v2793, %v2841
        %v2843 = vpop.f32.mrf.mxu0
        %v2844 = vadd.f32 %v2795, %v2843
        %2845 = vmatmul.bf16.gmra.mxu0 %v2127
        %v2846 = vpop.f32.mrf.mxu0
        %v2847 = vadd.f32 %v2798, %v2846
        %v2848 = vpop.f32.mrf.mxu0
        %v2849 = vadd.f32 %v2800, %v2848
        %2850 = vmatmul.bf16.gmra.mxu0 %v2128
        %v2851 = vpop.f32.mrf.mxu0
        %v2852 = vadd.f32 %v2803, %v2851
        %v2853 = vpop.f32.mrf.mxu0
        %v2854 = vadd.f32 %v2805, %v2853
        %2855 = vmatmul.bf16.gmra.mxu0 %v2129
        %v2856 = vpop.f32.mrf.mxu0
        %v2857 = vadd.f32 %v2808, %v2856
        %v2858 = vpop.f32.mrf.mxu0
        %v2859 = vadd.f32 %v2810, %v2858
        %2860 = vmatmul.bf16.gmra.mxu0 %v2130
        %v2861 = vpop.f32.mrf.mxu0
        %v2862 = vadd.f32 %v2813, %v2861
        %v2863 = vpop.f32.mrf.mxu0
        %v2864 = vadd.f32 %v2815, %v2863
        %2865 = vmatmul.bf16.gmra.mxu0 %v2131
        %v2866 = vpop.f32.mrf.mxu0
        %v2867 = vadd.f32 %v2818, %v2866
        %v2868 = vpop.f32.mrf.mxu0
        %v2869 = vadd.f32 %v2820, %v2868
        %2870 = vmatmul.bf16.gmra.mxu0 %v2132
        %v2871 = vpop.f32.mrf.mxu0
        %v2872 = vadd.f32 %v2823, %v2871
        %v2873 = vpop.f32.mrf.mxu0
        %v2874 = vadd.f32 %v2825, %v2873
        %2875 = vdwg.mxu0
        %2876 = vmatpush.bf16.msra.mxu0 %v2468
        %2877 = vmatpush.bf16.msra.mxu0 %v2467
        %2878 = vmatpush.bf16.msra.mxu0 %v2466
        %2879 = vmatpush.bf16.msra.mxu0 %v2465
        %2880 = vmatpush.bf16.msra.mxu0 %v2464
        %2881 = vmatpush.bf16.msra.mxu0 %v2463
        %2882 = vmatpush.bf16.msra.mxu0 %v2462
        %2883 = vmatpush.bf16.msra.mxu0 %v2461
        %2884 = vmatmul.bf16.gmra.mxu0 %v2141
        %v2885 = vpop.f32.mrf.mxu0
        %v2886 = vadd.f32 %v2837, %v2885
        %v2887 = vpop.f32.mrf.mxu0
        %v2888 = vadd.f32 %v2839, %v2887
        %2889 = vmatmul.bf16.gmra.mxu0 %v2142
        %v2890 = vpop.f32.mrf.mxu0
        %v2891 = vadd.f32 %v2842, %v2890
        %v2892 = vpop.f32.mrf.mxu0
        %v2893 = vadd.f32 %v2844, %v2892
        %2894 = vmatmul.bf16.gmra.mxu0 %v2143
        %v2895 = vpop.f32.mrf.mxu0
        %v2896 = vadd.f32 %v2847, %v2895
        %v2897 = vpop.f32.mrf.mxu0
        %v2898 = vadd.f32 %v2849, %v2897
        %2899 = vmatmul.bf16.gmra.mxu0 %v2144
        %v2900 = vpop.f32.mrf.mxu0
        %v2901 = vadd.f32 %v2852, %v2900
        %v2902 = vpop.f32.mrf.mxu0
        %v2903 = vadd.f32 %v2854, %v2902
        %2904 = vmatmul.bf16.gmra.mxu0 %v2145
        %v2905 = vpop.f32.mrf.mxu0
        %v2906 = vadd.f32 %v2857, %v2905
        %v2907 = vpop.f32.mrf.mxu0
        %v2908 = vadd.f32 %v2859, %v2907
        %2909 = vmatmul.bf16.gmra.mxu0 %v2146
        %v2910 = vpop.f32.mrf.mxu0
        %v2911 = vadd.f32 %v2862, %v2910
        %v2912 = vpop.f32.mrf.mxu0
        %v2913 = vadd.f32 %v2864, %v2912
        %2914 = vmatmul.bf16.gmra.mxu0 %v2147
        %v2915 = vpop.f32.mrf.mxu0
        %v2916 = vadd.f32 %v2867, %v2915
        %v2917 = vpop.f32.mrf.mxu0
        %v2918 = vadd.f32 %v2869, %v2917
        %2919 = vmatmul.bf16.gmra.mxu0 %v2148
        %v2920 = vpop.f32.mrf.mxu0
        %v2921 = vadd.f32 %v2872, %v2920
        %v2922 = vpop.f32.mrf.mxu0
        %v2923 = vadd.f32 %v2874, %v2922
        %2924 = vdwg.mxu0
        %2925 = vadd.xlane.f32.xlu0 %v2886
        %v2926 = vpop.xlane.xlu0 %2925
        %2927 = vadd.xlane.f32.xlu0 %v2888
        %v2928 = vpop.xlane.xlu0 %2927
        %2929 = vadd.xlane.f32.xlu0 %v2891
        %v2930 = vpop.xlane.xlu0 %2929
        %2931 = vadd.xlane.f32.xlu0 %v2893
        %v2932 = vpop.xlane.xlu0 %2931
        %2933 = vadd.xlane.f32.xlu0 %v2896
        %v2934 = vpop.xlane.xlu0 %2933
        %2935 = vadd.xlane.f32.xlu0 %v2898
        %v2936 = vpop.xlane.xlu0 %2935
        %2937 = vadd.xlane.f32.xlu0 %v2901
        %v2938 = vpop.xlane.xlu0 %2937
        %2939 = vadd.xlane.f32.xlu0 %v2903
        %v2940 = vpop.xlane.xlu0 %2939
        %2941 = vadd.xlane.f32.xlu0 %v2906
        %v2942 = vpop.xlane.xlu0 %2941
        %2943 = vadd.xlane.f32.xlu0 %v2908
        %v2944 = vpop.xlane.xlu0 %2943
        %2945 = vadd.xlane.f32.xlu0 %v2911
        %v2946 = vpop.xlane.xlu0 %2945
        %2947 = vadd.xlane.f32.xlu0 %v2913
        %v2948 = vpop.xlane.xlu0 %2947
        %2949 = vadd.xlane.f32.xlu0 %v2916
        %v2950 = vpop.xlane.xlu0 %2949
        %2951 = vadd.xlane.f32.xlu0 %v2918
        %v2952 = vpop.xlane.xlu0 %2951
        %2953 = vadd.xlane.f32.xlu0 %v2921
        %v2954 = vpop.xlane.xlu0 %2953
        %2955 = vadd.xlane.f32.xlu0 %v2923
        %v2956 = vpop.xlane.xlu0 %2955
        %v2957 = vrcp.pop 128.0
        %v2958 = vmul.f32 128.0, %v2957
        %v2959 = vsub.f32 1.0, %v2958
        %v2960 = vmul.f32 %v2957, %v2959
        %v2961 = vadd.f32 %v2957, %v2960
        %vm2962 = vweird.f32 %v2957
        %v2963 = vsel %vm2962, %v2957, %v2961
        %v2964 = vmul.f32 %v2926, %v2963
        %v2965 = vmul.f32 %v2928, %v2963
        %v2966 = vmul.f32 %v2930, %v2963
        %v2967 = vmul.f32 %v2932, %v2963
        %v2968 = vmul.f32 %v2934, %v2963
        %v2969 = vmul.f32 %v2936, %v2963
        %v2970 = vmul.f32 %v2938, %v2963
        %v2971 = vmul.f32 %v2940, %v2963
        %v2972 = vmul.f32 %v2942, %v2963
        %v2973 = vmul.f32 %v2944, %v2963
        %v2974 = vmul.f32 %v2946, %v2963
        %v2975 = vmul.f32 %v2948, %v2963
        %v2976 = vmul.f32 %v2950, %v2963
        %v2977 = vmul.f32 %v2952, %v2963
        %v2978 = vmul.f32 %v2954, %v2963
        %v2979 = vmul.f32 %v2956, %v2963
        %v2980 = vsub.f32 %v2886, %v2964
        %v2981 = vsub.f32 %v2888, %v2965
        %v2982 = vsub.f32 %v2891, %v2966
        %v2983 = vsub.f32 %v2893, %v2967
        %v2984 = vsub.f32 %v2896, %v2968
        %v2985 = vsub.f32 %v2898, %v2969
        %v2986 = vsub.f32 %v2901, %v2970
        %v2987 = vsub.f32 %v2903, %v2971
        %v2988 = vsub.f32 %v2906, %v2972
        %v2989 = vsub.f32 %v2908, %v2973
        %v2990 = vsub.f32 %v2911, %v2974
        %v2991 = vsub.f32 %v2913, %v2975
        %v2992 = vsub.f32 %v2916, %v2976
        %v2993 = vsub.f32 %v2918, %v2977
        %v2994 = vsub.f32 %v2921, %v2978
        %v2995 = vsub.f32 %v2923, %v2979
        %v2996 = vmul.f32 %v2980, %v2980
        %v2997 = vmul.f32 %v2981, %v2981
        %v2998 = vmul.f32 %v2982, %v2982
        %v2999 = vmul.f32 %v2983, %v2983
        %v3000 = vmul.f32 %v2984, %v2984
        %v3001 = vmul.f32 %v2985, %v2985
        %v3002 = vmul.f32 %v2986, %v2986
        %v3003 = vmul.f32 %v2987, %v2987
        %v3004 = vmul.f32 %v2988, %v2988
        %v3005 = vmul.f32 %v2989, %v2989
        %v3006 = vmul.f32 %v2990, %v2990
        %v3007 = vmul.f32 %v2991, %v2991
        %v3008 = vmul.f32 %v2992, %v2992
        %v3009 = vmul.f32 %v2993, %v2993
        %v3010 = vmul.f32 %v2994, %v2994
        %v3011 = vmul.f32 %v2995, %v2995
        %3012 = vadd.xlane.f32.xlu0 %v2996
        %v3013 = vpop.xlane.xlu0 %3012
        %3014 = vadd.xlane.f32.xlu0 %v2997
        %v3015 = vpop.xlane.xlu0 %3014
        %3016 = vadd.xlane.f32.xlu0 %v2998
        %v3017 = vpop.xlane.xlu0 %3016
        %3018 = vadd.xlane.f32.xlu0 %v2999
        %v3019 = vpop.xlane.xlu0 %3018
        %3020 = vadd.xlane.f32.xlu0 %v3000
        %v3021 = vpop.xlane.xlu0 %3020
        %3022 = vadd.xlane.f32.xlu0 %v3001
        %v3023 = vpop.xlane.xlu0 %3022
        %3024 = vadd.xlane.f32.xlu0 %v3002
        %v3025 = vpop.xlane.xlu0 %3024
        %3026 = vadd.xlane.f32.xlu0 %v3003
        %v3027 = vpop.xlane.xlu0 %3026
        %3028 = vadd.xlane.f32.xlu0 %v3004
        %v3029 = vpop.xlane.xlu0 %3028
        %3030 = vadd.xlane.f32.xlu0 %v3005
        %v3031 = vpop.xlane.xlu0 %3030
        %3032 = vadd.xlane.f32.xlu0 %v3006
        %v3033 = vpop.xlane.xlu0 %3032
        %3034 = vadd.xlane.f32.xlu0 %v3007
        %v3035 = vpop.xlane.xlu0 %3034
        %3036 = vadd.xlane.f32.xlu0 %v3008
        %v3037 = vpop.xlane.xlu0 %3036
        %3038 = vadd.xlane.f32.xlu0 %v3009
        %v3039 = vpop.xlane.xlu0 %3038
        %3040 = vadd.xlane.f32.xlu0 %v3010
        %v3041 = vpop.xlane.xlu0 %3040
        %3042 = vadd.xlane.f32.xlu0 %v3011
        %v3043 = vpop.xlane.xlu0 %3042
        %v3044 = vmul.f32 %v3013, %v2963
        %v3045 = vmul.f32 %v3015, %v2963
        %v3046 = vmul.f32 %v3017, %v2963
        %v3047 = vmul.f32 %v3019, %v2963
        %v3048 = vmul.f32 %v3021, %v2963
        %v3049 = vmul.f32 %v3023, %v2963
        %v3050 = vmul.f32 %v3025, %v2963
        %v3051 = vmul.f32 %v3027, %v2963
        %v3052 = vmul.f32 %v3029, %v2963
        %v3053 = vmul.f32 %v3031, %v2963
        %v3054 = vmul.f32 %v3033, %v2963
        %v3055 = vmul.f32 %v3035, %v2963
        %v3056 = vmul.f32 %v3037, %v2963
        %v3057 = vmul.f32 %v3039, %v2963
        %v3058 = vmul.f32 %v3041, %v2963
        %v3059 = vmul.f32 %v3043, %v2963
        %v3060 = vadd.f32 %v3044, 1e-05
        %v3061 = vadd.f32 %v3045, 1e-05
        %v3062 = vadd.f32 %v3046, 1e-05
        %v3063 = vadd.f32 %v3047, 1e-05
        %v3064 = vadd.f32 %v3048, 1e-05
        %v3065 = vadd.f32 %v3049, 1e-05
        %v3066 = vadd.f32 %v3050, 1e-05
        %v3067 = vadd.f32 %v3051, 1e-05
        %v3068 = vadd.f32 %v3052, 1e-05
        %v3069 = vadd.f32 %v3053, 1e-05
        %v3070 = vadd.f32 %v3054, 1e-05
        %v3071 = vadd.f32 %v3055, 1e-05
        %v3072 = vadd.f32 %v3056, 1e-05
        %v3073 = vadd.f32 %v3057, 1e-05
        %v3074 = vadd.f32 %v3058, 1e-05
        %v3075 = vadd.f32 %v3059, 1e-05
        %v3076 = vrsqrt.pop %v3060
        %v3077 = vmul.f32 %v3076, %v3060
        %v3078 = vmul.f32 %v3077, %v3076
        %v3079 = vmul.f32 0.5, %v3078
        %v3080 = vsub.f32 1.5, %v3079
        %v3081 = vmul.f32 %v3076, %v3080
        %vm3082 = vweird.f32 %v3060
        %vm3083 = vweird.f32 %v3076
        %vm3084 = vmor %vm3082, %vm3083
        %v3085 = vsel %vm3084, %v3076, %v3081
        %v3086 = vrsqrt.pop %v3061
        %v3087 = vmul.f32 %v3086, %v3061
        %v3088 = vmul.f32 %v3087, %v3086
        %v3089 = vmul.f32 0.5, %v3088
        %v3090 = vsub.f32 1.5, %v3089
        %v3091 = vmul.f32 %v3086, %v3090
        %vm3092 = vweird.f32 %v3061
        %vm3093 = vweird.f32 %v3086
        %vm3094 = vmor %vm3092, %vm3093
        %v3095 = vsel %vm3094, %v3086, %v3091
        %v3096 = vrsqrt.pop %v3062
        %v3097 = vmul.f32 %v3096, %v3062
        %v3098 = vmul.f32 %v3097, %v3096
        %v3099 = vmul.f32 0.5, %v3098
        %v3100 = vsub.f32 1.5, %v3099
        %v3101 = vmul.f32 %v3096, %v3100
        %vm3102 = vweird.f32 %v3062
        %vm3103 = vweird.f32 %v3096
        %vm3104 = vmor %vm3102, %vm3103
        %v3105 = vsel %vm3104, %v3096, %v3101
        %v3106 = vrsqrt.pop %v3063
        %v3107 = vmul.f32 %v3106, %v3063
        %v3108 = vmul.f32 %v3107, %v3106
        %v3109 = vmul.f32 0.5, %v3108
        %v3110 = vsub.f32 1.5, %v3109
        %v3111 = vmul.f32 %v3106, %v3110
        %vm3112 = vweird.f32 %v3063
        %vm3113 = vweird.f32 %v3106
        %vm3114 = vmor %vm3112, %vm3113
        %v3115 = vsel %vm3114, %v3106, %v3111
        %v3116 = vrsqrt.pop %v3064
        %v3117 = vmul.f32 %v3116, %v3064
        %v3118 = vmul.f32 %v3117, %v3116
        %v3119 = vmul.f32 0.5, %v3118
        %v3120 = vsub.f32 1.5, %v3119
        %v3121 = vmul.f32 %v3116, %v3120
        %vm3122 = vweird.f32 %v3064
        %vm3123 = vweird.f32 %v3116
        %vm3124 = vmor %vm3122, %vm3123
        %v3125 = vsel %vm3124, %v3116, %v3121
        %v3126 = vrsqrt.pop %v3065
        %v3127 = vmul.f32 %v3126, %v3065
        %v3128 = vmul.f32 %v3127, %v3126
        %v3129 = vmul.f32 0.5, %v3128
        %v3130 = vsub.f32 1.5, %v3129
        %v3131 = vmul.f32 %v3126, %v3130
        %vm3132 = vweird.f32 %v3065
        %vm3133 = vweird.f32 %v3126
        %vm3134 = vmor %vm3132, %vm3133
        %v3135 = vsel %vm3134, %v3126, %v3131
        %v3136 = vrsqrt.pop %v3066
        %v3137 = vmul.f32 %v3136, %v3066
        %v3138 = vmul.f32 %v3137, %v3136
        %v3139 = vmul.f32 0.5, %v3138
        %v3140 = vsub.f32 1.5, %v3139
        %v3141 = vmul.f32 %v3136, %v3140
        %vm3142 = vweird.f32 %v3066
        %vm3143 = vweird.f32 %v3136
        %vm3144 = vmor %vm3142, %vm3143
        %v3145 = vsel %vm3144, %v3136, %v3141
        %v3146 = vrsqrt.pop %v3067
        %v3147 = vmul.f32 %v3146, %v3067
        %v3148 = vmul.f32 %v3147, %v3146
        %v3149 = vmul.f32 0.5, %v3148
        %v3150 = vsub.f32 1.5, %v3149
        %v3151 = vmul.f32 %v3146, %v3150
        %vm3152 = vweird.f32 %v3067
        %vm3153 = vweird.f32 %v3146
        %vm3154 = vmor %vm3152, %vm3153
        %v3155 = vsel %vm3154, %v3146, %v3151
        %v3156 = vrsqrt.pop %v3068
        %v3157 = vmul.f32 %v3156, %v3068
        %v3158 = vmul.f32 %v3157, %v3156
        %v3159 = vmul.f32 0.5, %v3158
        %v3160 = vsub.f32 1.5, %v3159
        %v3161 = vmul.f32 %v3156, %v3160
        %vm3162 = vweird.f32 %v3068
        %vm3163 = vweird.f32 %v3156
        %vm3164 = vmor %vm3162, %vm3163
        %v3165 = vsel %vm3164, %v3156, %v3161
        %v3166 = vrsqrt.pop %v3069
        %v3167 = vmul.f32 %v3166, %v3069
        %v3168 = vmul.f32 %v3167, %v3166
        %v3169 = vmul.f32 0.5, %v3168
        %v3170 = vsub.f32 1.5, %v3169
        %v3171 = vmul.f32 %v3166, %v3170
        %vm3172 = vweird.f32 %v3069
        %vm3173 = vweird.f32 %v3166
        %vm3174 = vmor %vm3172, %vm3173
        %v3175 = vsel %vm3174, %v3166, %v3171
        %v3176 = vrsqrt.pop %v3070
        %v3177 = vmul.f32 %v3176, %v3070
        %v3178 = vmul.f32 %v3177, %v3176
        %v3179 = vmul.f32 0.5, %v3178
        %v3180 = vsub.f32 1.5, %v3179
        %v3181 = vmul.f32 %v3176, %v3180
        %vm3182 = vweird.f32 %v3070
        %vm3183 = vweird.f32 %v3176
        %vm3184 = vmor %vm3182, %vm3183
        %v3185 = vsel %vm3184, %v3176, %v3181
        %v3186 = vrsqrt.pop %v3071
        %v3187 = vmul.f32 %v3186, %v3071
        %v3188 = vmul.f32 %v3187, %v3186
        %v3189 = vmul.f32 0.5, %v3188
        %v3190 = vsub.f32 1.5, %v3189
        %v3191 = vmul.f32 %v3186, %v3190
        %vm3192 = vweird.f32 %v3071
        %vm3193 = vweird.f32 %v3186
        %vm3194 = vmor %vm3192, %vm3193
        %v3195 = vsel %vm3194, %v3186, %v3191
        %v3196 = vrsqrt.pop %v3072
        %v3197 = vmul.f32 %v3196, %v3072
        %v3198 = vmul.f32 %v3197, %v3196
        %v3199 = vmul.f32 0.5, %v3198
        %v3200 = vsub.f32 1.5, %v3199
        %v3201 = vmul.f32 %v3196, %v3200
        %vm3202 = vweird.f32 %v3072
        %vm3203 = vweird.f32 %v3196
        %vm3204 = vmor %vm3202, %vm3203
        %v3205 = vsel %vm3204, %v3196, %v3201
        %v3206 = vrsqrt.pop %v3073
        %v3207 = vmul.f32 %v3206, %v3073
        %v3208 = vmul.f32 %v3207, %v3206
        %v3209 = vmul.f32 0.5, %v3208
        %v3210 = vsub.f32 1.5, %v3209
        %v3211 = vmul.f32 %v3206, %v3210
        %vm3212 = vweird.f32 %v3073
        %vm3213 = vweird.f32 %v3206
        %vm3214 = vmor %vm3212, %vm3213
        %v3215 = vsel %vm3214, %v3206, %v3211
        %v3216 = vrsqrt.pop %v3074
        %v3217 = vmul.f32 %v3216, %v3074
        %v3218 = vmul.f32 %v3217, %v3216
        %v3219 = vmul.f32 0.5, %v3218
        %v3220 = vsub.f32 1.5, %v3219
        %v3221 = vmul.f32 %v3216, %v3220
        %vm3222 = vweird.f32 %v3074
        %vm3223 = vweird.f32 %v3216
        %vm3224 = vmor %vm3222, %vm3223
        %v3225 = vsel %vm3224, %v3216, %v3221
        %v3226 = vrsqrt.pop %v3075
        %v3227 = vmul.f32 %v3226, %v3075
        %v3228 = vmul.f32 %v3227, %v3226
        %v3229 = vmul.f32 0.5, %v3228
        %v3230 = vsub.f32 1.5, %v3229
        %v3231 = vmul.f32 %v3226, %v3230
        %vm3232 = vweird.f32 %v3075
        %vm3233 = vweird.f32 %v3226
        %vm3234 = vmor %vm3232, %vm3233
        %v3235 = vsel %vm3234, %v3226, %v3231
        %v3236 = vmul.f32 %v2980, %v3085
        %v3237 = vmul.f32 %v2981, %v3095
        %v3238 = vmul.f32 %v2982, %v3105
        %v3239 = vmul.f32 %v2983, %v3115
        %v3240 = vmul.f32 %v2984, %v3125
        %v3241 = vmul.f32 %v2985, %v3135
        %v3242 = vmul.f32 %v2986, %v3145
        %v3243 = vmul.f32 %v2987, %v3155
        %v3244 = vmul.f32 %v2988, %v3165
        %v3245 = vmul.f32 %v2989, %v3175
        %v3246 = vmul.f32 %v2990, %v3185
        %v3247 = vmul.f32 %v2991, %v3195
        %v3248 = vmul.f32 %v2992, %v3205
        %v3249 = vmul.f32 %v2993, %v3215
        %v3250 = vmul.f32 %v2994, %v3225
        %v3251 = vmul.f32 %v2995, %v3235
        %v3252 = vperm.slane %v1635, 1
        %v3253 = vmul.f32 %v3236, %v3252
        %v3254 = vmul.f32 %v3237, %v3252
        %v3255 = vmul.f32 %v3238, %v3252
        %v3256 = vmul.f32 %v3239, %v3252
        %v3257 = vmul.f32 %v3240, %v3252
        %v3258 = vmul.f32 %v3241, %v3252
        %v3259 = vmul.f32 %v3242, %v3252
        %v3260 = vmul.f32 %v3243, %v3252
        %v3261 = vmul.f32 %v3244, %v3252
        %v3262 = vmul.f32 %v3245, %v3252
        %v3263 = vmul.f32 %v3246, %v3252
        %v3264 = vmul.f32 %v3247, %v3252
        %v3265 = vmul.f32 %v3248, %v3252
        %v3266 = vmul.f32 %v3249, %v3252
        %v3267 = vmul.f32 %v3250, %v3252
        %v3268 = vmul.f32 %v3251, %v3252
        %v3269 = vperm.slane %v1635, 2
        %v3270 = vadd.f32 %v3253, %v3269
        %v3271 = vadd.f32 %v3254, %v3269
        %v3272 = vadd.f32 %v3255, %v3269
        %v3273 = vadd.f32 %v3256, %v3269
        %v3274 = vadd.f32 %v3257, %v3269
        %v3275 = vadd.f32 %v3258, %v3269
        %v3276 = vadd.f32 %v3259, %v3269
        %v3277 = vadd.f32 %v3260, %v3269
        %v3278 = vadd.f32 %v3261, %v3269
        %v3279 = vadd.f32 %v3262, %v3269
        %v3280 = vadd.f32 %v3263, %v3269
        %v3281 = vadd.f32 %v3264, %v3269
        %v3282 = vadd.f32 %v3265, %v3269
        %v3283 = vadd.f32 %v3266, %v3269
        %v3284 = vadd.f32 %v3267, %v3269
        %v3285 = vadd.f32 %v3268, %v3269
        %3286 = vst [vmem:[%s338] sm:$0xff] %v3270
        %3287 = vst [vmem:[%s338 + $0x8] sm:$0xff] %v3271
        %3288 = vst [vmem:[%s338 + $0x10] sm:$0xff] %v3272
        %3289 = vst [vmem:[%s338 + $0x18] sm:$0xff] %v3273
        %3290 = vst [vmem:[%s338 + $0x20] sm:$0xff] %v3274
        %3291 = vst [vmem:[%s338 + $0x28] sm:$0xff] %v3275
        %3292 = vst [vmem:[%s338 + $0x30] sm:$0xff] %v3276
        %3293 = vst [vmem:[%s338 + $0x38] sm:$0xff] %v3277
        %3294 = vst [vmem:[%s338 + $0x40] sm:$0xff] %v3278
        %3295 = vst [vmem:[%s338 + $0x48] sm:$0xff] %v3279
        %3296 = vst [vmem:[%s338 + $0x50] sm:$0xff] %v3280
        %3297 = vst [vmem:[%s338 + $0x58] sm:$0xff] %v3281
        %3298 = vst [vmem:[%s338 + $0x60] sm:$0xff] %v3282
        %3299 = vst [vmem:[%s338 + $0x68] sm:$0xff] %v3283
        %3300 = vst [vmem:[%s338 + $0x70] sm:$0xff] %v3284
        %3301 = vst [vmem:[%s338 + $0x78] sm:$0xff] %v3285
        %s3302 = sand.u32 %s171, 1
        %s3303 = scalar_lea.sflag [#allocation5], %s3302
        %s3304 = sand.u32 %s171, 1
        %s3305 = smul.addr %s3304, 128
        %s3306 = scalar_lea.vmem [#allocation9], %s3305
        // Predicated region
        $region53: #{tpu_custom_call.1} parent=39 // pred_check
          %p3307 = pneg %p181
        $region54: #{tpu_custom_call.1} parent=39 // pred_check_branch
          %3309 = sbr.rel (%p3307) target = $region56
        $region55: #{tpu_custom_call.1} parent=39 // pred_region
          %s3310 = smul.u32 16, %s30
          %3312 = vsyncadd %s3303, 0
          %s3313 = smul.addr %s29, 32
          %s3314 = sadd.s32 %s3310, %s3313
          %s3315 = smul.addr %s3314, 8
          %s3316 = scalar_lea.hbm %s5, %s3315
          %s3317 = sshll.u32 %s3306, 4
          %s3318 = int_to_ptr.vmem [resolvable:$true] %s3317
          %s3319 = sshll.u32 %s3316, 4
          %s3320 = int_to_ptr.hbm [resolvable:$true] %s3319
          %3325 = dma.vmem_to_hbm [thread:$0]  %s3318, 2048, %s3320, %s3303, 128, 128, 8
        $region56: #{tpu_custom_call.1} parent=39 // pred_fallthru
          _
      $region40: #{tpu_custom_call.1} parent=5 // pred_fallthru
        _
      %p3326 = scmp.le.s32.totalorder 2, %s20
      // Predicated region
      $region57: #{tpu_custom_call.1} parent=5 // pred_check
        %p3327 = pneg %p3326
      $region58: #{tpu_custom_call.1} parent=5 // pred_check_branch
        %3329 = sbr.rel (%p3327) target = $region60
      $region59: #{tpu_custom_call.1} parent=5 // pred_region
        %s3330 = ssub.s32 %s20, 2
        // Predicated region
        $region61: #{tpu_custom_call.1} parent=59 // pred_check
          %p3331 = pneg %p187
        $region62: #{tpu_custom_call.1} parent=59 // pred_check_branch
          %3333 = sbr.rel (%p3331) target = $region64
        $region63: #{tpu_custom_call.1} parent=59 // pred_region
          %s3334 = sand.u32 %s172, 1
          %s3335 = scalar_lea.sflag [#allocation5], %s3334
          %s3336 = sand.u32 %s172, 1
          %s3337 = smul.addr %s3336, 128
          %s3338 = scalar_lea.vmem [#allocation9], %s3337
          %3340 = dma.done %s3335, 2048
        $region64: #{tpu_custom_call.1} parent=59 // pred_fallthru
          _
      $region60: #{tpu_custom_call.1} parent=5 // pred_fallthru
        _
    $region6: #{tpu_custom_call.1} parent=1 // loop_footer
      %s24 = sadd.s32 1, %s20
    $region7: #{tpu_custom_call.1} parent=1 // loop_footer_branch
      %19 = sbr.rel target = $region3
    $region8: #{tpu_custom_call.1} parent=1 // loop_exit
      _
    %3341 = vsyncpa [#allocation4], 1
    %s3342 = scalar_lea.sflag [#allocation4], 1
    %3343 = vsyncpa %s3342, 1
    %3344 = vsyncpa [#allocation7], 1
    %s3345 = scalar_lea.sflag [#allocation7], 1
    %3346 = vsyncpa %s3345, 1
    %3347 = vsyncpa [#allocation5], 1
    %s3348 = scalar_lea.sflag [#allocation5], 1
    %3349 = vsyncpa %s3348, 1

</llo_original>
